<compile_context>
chip_gen: v6e
topology: v6e:2x2x1
jax: 0.10.0
libtpu: 0.0.40
codegen_flags: <defaults>
</compile_context>

<pallas_src>
import math
import jax
import jax.numpy as jnp
from jax.experimental import pallas as pl
from jax.experimental.pallas import tpu as pltpu

D_MODEL = 32
N_HEAD = 4
D_FF = 64
N_LAYERS = 2
EPS = 1e-5


def _layer_norm(x, gamma, beta):
    mu = jnp.mean(x, axis=-1, keepdims=True)
    var = jnp.mean((x - mu) ** 2, axis=-1, keepdims=True)
    return (x - mu) * jax.lax.rsqrt(var + EPS) * gamma + beta


def transformer_encoder(src_sbd, layer_params_list):
    """Stack of encoder layers. src_sbd: (S, B, D) like PyTorch.
    Returns (output (S, B, D), attn_output (B, S, S))."""
    S, B, D = src_sbd.shape
    H = N_HEAD
    Dh = D // H
    BS = B * S

    # host-side layout prep: fold batch into a (B*S, D) activation slab
    x_flat = jnp.transpose(src_sbd, (1, 0, 2)).reshape(BS, D)

    # pre-transpose weight matrices, stack per layer, fold 1/sqrt(Dh) into Q
    def stack(idx, transpose=False):
        arrs = [p[idx].T if transpose else p[idx] for p in layer_params_list]
        return jnp.stack(arrs, axis=0)

    scale = 1.0 / math.sqrt(Dh)
    wqkv = stack(0, True)                      # (L, D, 3D)
    bqkv = stack(1)                            # (L, 1, 3D)
    wqkv = wqkv.at[:, :, :D].multiply(scale)   # fold Q scale into weights
    bqkv = bqkv.at[:, :, :D].multiply(scale)

    params = (
        wqkv, bqkv,
        stack(2, True),   # wo   -> (L, D, D)
        stack(3),         # bo   -> (L, 1, D)
        stack(4, True),   # w1   -> (L, D, F)
        stack(5),         # b1   -> (L, 1, F)
        stack(6, True),   # w2   -> (L, F, D)
        stack(7),         # b2   -> (L, 1, D)
        stack(8), stack(9), stack(10), stack(11),   # LN gammas/betas (L, 1, D)
    )

    def fused_encoder_kernel(x_ref,
                             wqkv_ref, bqkv_ref, wo_ref, bo_ref,
                             w1_ref, b1_ref, w2_ref, b2_ref,
                             g1_ref, be1_ref, g2_ref, be2_ref,
                             out_ref, attn_ref):
        x = x_ref[...]                              # (B*S, D), whole batch folded
        L = wqkv_ref.shape[0]

        attn_total = jnp.zeros((B, S, S), jnp.float32)

        def to_heads(t):  # (B*S, D) -> (H*B, S, Dh), heads+batch as one batch axis
            return jnp.concatenate(
                [t[:, h * Dh:(h + 1) * Dh].reshape(B, S, Dh) for h in range(H)],
                axis=0)

        # static layer loop (L=2).  TODO(synk): switch to lax.fori_loop with
        # dynamic wqkv_ref[l] indexing if N_LAYERS grows (vreg pressure).
        for l in range(L):
            # --- multi-head self attention (weights pre-transposed & pre-scaled)
            qkv = jnp.dot(x, wqkv_ref[l, :, :],
                          preferred_element_type=jnp.float32) + bqkv_ref[l, :, :]
            q = qkv[:, :D]                          # already scaled by 1/sqrt(Dh)
            k = qkv[:, D:2 * D]
            v = qkv[:, 2 * D:]

            qh, kh, vh = to_heads(q), to_heads(k), to_heads(v)   # (H*B, S, Dh)

            s = jnp.einsum('nqd,nkd->nqk', qh, kh,
                           preferred_element_type=jnp.float32)   # (H*B, S, S)
            s = s - jnp.max(s, axis=-1, keepdims=True)
            p = jnp.exp(s)
            p = p * pl.reciprocal(jnp.sum(p, axis=-1, keepdims=True), approx=True)

            # head-averaged attention map, accumulated across layers
            layer_attn = p[0:B]
            for h in range(1, H):
                layer_attn = layer_attn + p[h * B:(h + 1) * B]
            attn_total = attn_total + layer_attn * (1.0 / H)

            ctx_h = jnp.einsum('nqk,nkd->nqd', p, vh,
                               preferred_element_type=jnp.float32)  # (H*B, S, Dh)
            ctx = jnp.concatenate(
                [ctx_h[h * B:(h + 1) * B] for h in range(H)], axis=-1)  # (B, S, D)
            ctx = ctx.reshape(BS, D)

            attn_out = jnp.dot(ctx, wo_ref[l, :, :],
                               preferred_element_type=jnp.float32) + bo_ref[l, :, :]

            # --- add & norm 1 -------------------------------------------------
            x1 = _layer_norm(x + attn_out, g1_ref[l, :, :], be1_ref[l, :, :])

            # --- feed-forward (relu) -------------------------------------------
            hid = jnp.dot(x1, w1_ref[l, :, :],
                          preferred_element_type=jnp.float32) + b1_ref[l, :, :]
            hid = jnp.maximum(hid, 0.0)
            ffn = jnp.dot(hid, w2_ref[l, :, :],
                          preferred_element_type=jnp.float32) + b2_ref[l, :, :]

            # --- add & norm 2 -------------------------------------------------
            x = _layer_norm(x1 + ffn, g2_ref[l, :, :], be2_ref[l, :, :])

        # single, lane-dense writeback: (B*S, D) slab + flattened (B, S*S) attn
        out_ref[...] = x
        attn_flat = jnp.concatenate([attn_total[:, i, :] for i in range(S)],
                                    axis=-1)                        # (B, S*S)
        attn_ref[...] = attn_flat

    in_specs = [pl.BlockSpec((BS, D), lambda i: (0, 0))]
    in_specs += [pl.BlockSpec(p.shape, lambda i, _n=p.ndim: (0,) * _n)
                 for p in params]
    out_specs = (pl.BlockSpec((BS, D), lambda i: (0, 0)),
                 pl.BlockSpec((B, S * S), lambda i: (0, 0)))

    out_flat, attn_flat = pl.pallas_call(
        fused_encoder_kernel,
        grid=(1,),
        in_specs=in_specs,
        out_specs=out_specs,
        out_shape=(jax.ShapeDtypeStruct((BS, D), jnp.float32),
                   jax.ShapeDtypeStruct((B, S * S), jnp.float32)),
        compiler_params=pltpu.CompilerParams(
            dimension_semantics=("arbitrary",)),
    )(x_flat, *params)

    out_sbd = jnp.transpose(out_flat.reshape(B, S, D), (1, 0, 2))
    # TODO(synk): optional final `norm` is None here (matches norm=None default).
    return out_sbd, attn_flat.reshape(B, S, S)


# ------------------------- parameter construction ---------------------------
def make_layer_params(key, d_model, n_head, d_ff):
    ks = jax.random.split(key, 6)
    scale = 0.1
    wqkv = scale * jax.random.normal(ks[0], (3 * d_model, d_model), jnp.float32)
    bqkv = scale * jax.random.normal(ks[1], (1, 3 * d_model), jnp.float32)
    wo = scale * jax.random.normal(ks[2], (d_model, d_model), jnp.float32)
    bo = jnp.zeros((1, d_model), jnp.float32)
    w1 = scale * jax.random.normal(ks[3], (d_ff, d_model), jnp.float32)
    b1 = scale * jax.random.normal(ks[4], (1, d_ff), jnp.float32)
    w2 = scale * jax.random.normal(ks[5], (d_model, d_ff), jnp.float32)
    b2 = jnp.zeros((1, d_model), jnp.float32)
    g1 = jnp.ones((1, d_model), jnp.float32)
    be1 = jnp.zeros((1, d_model), jnp.float32)
    g2 = jnp.ones((1, d_model), jnp.float32)
    be2 = jnp.zeros((1, d_model), jnp.float32)
    return (wqkv, bqkv, wo, bo, w1, b1, w2, b2, g1, be1, g2, be2)


# -------------------------- pure-JAX reference ------------------------------
def ref_layer(x_bsd, params):
    (wqkv, bqkv, wo, bo, w1, b1, w2, b2, g1, be1, g2, be2) = params
    B, S, D = x_bsd.shape
    H, Dh = N_HEAD, D // N_HEAD
    qkv = x_bsd @ wqkv.T + bqkv[0]
    q, k, v = qkv[..., :D] / math.sqrt(Dh), qkv[..., D:2 * D], qkv[..., 2 * D:]
    q = q.reshape(B, S, H, Dh).transpose(0, 2, 1, 3)
    k = k.reshape(B, S, H, Dh).transpose(0, 2, 1, 3)
    v = v.reshape(B, S, H, Dh).transpose(0, 2, 1, 3)
    s = jnp.einsum('bhqd,bhkd->bhqk', q, k)
    p = jax.nn.softmax(s, axis=-1)
    ctx = jnp.einsum('bhqk,bhkd->bhqd', p, v).transpose(0, 2, 1, 3).reshape(B, S, D)
    attn_avg = jnp.mean(p, axis=1)
    ao = ctx @ wo.T + bo[0]
    x1 = _layer_norm(x_bsd + ao, g1[0], be1[0])
    ffn = jnp.maximum(x1 @ w1.T + b1[0], 0.0) @ w2.T + b2[0]
    x2 = _layer_norm(x1 + ffn, g2[0], be2[0])
    return x2, attn_avg


if __name__ == "__main__":
    S, B, D = 8, 2, D_MODEL
    key = jax.random.PRNGKey(0)
    k_src, *k_layers = jax.random.split(key, 1 + N_LAYERS)

    src = jax.random.normal(k_src, (S, B, D), jnp.float32)   # PyTorch (S, B, D)
    layer_params = [make_layer_params(k, D, N_HEAD, D_FF) for k in k_layers]

    fwd = jax.jit(transformer_encoder)
    out, attn_total = fwd(src, layer_params)
    out = jax.block_until_ready(out)
    attn_total = jax.block_until_ready(attn_total)

    # sanity check against a pure-JAX reference of the same math
    x_ref = jnp.transpose(src, (1, 0, 2))
    attn_ref = jnp.zeros((B, S, S), jnp.float32)
    for p in layer_params:
        x_ref, a = ref_layer(x_ref, p)
        attn_ref = attn_ref + a
    out_ref = jnp.transpose(x_ref, (1, 0, 2))

    assert out.shape == (S, B, D) and attn_total.shape == (B, S, S)
    assert jnp.allclose(out, out_ref, atol=1e-3, rtol=1e-3)
    assert jnp.allclose(attn_total, attn_ref, atol=1e-3, rtol=1e-3)

    print("KERNEL_OK")
</pallas_src>

<mosaic_0001>
module attributes {stable_mosaic.version = 11 : i64} {
  func.func @fused_encoder_kernel(%arg0: i32, %arg1: memref<16x32xf32, #tpu.memory_space<vmem>>, %arg2: memref<2x32x96xf32, #tpu.memory_space<vmem>>, %arg3: memref<2x1x96xf32, #tpu.memory_space<vmem>>, %arg4: memref<2x32x32xf32, #tpu.memory_space<vmem>>, %arg5: memref<2x1x32xf32, #tpu.memory_space<vmem>>, %arg6: memref<2x32x64xf32, #tpu.memory_space<vmem>>, %arg7: memref<2x1x64xf32, #tpu.memory_space<vmem>>, %arg8: memref<2x64x32xf32, #tpu.memory_space<vmem>>, %arg9: memref<2x1x32xf32, #tpu.memory_space<vmem>>, %arg10: memref<2x1x32xf32, #tpu.memory_space<vmem>>, %arg11: memref<2x1x32xf32, #tpu.memory_space<vmem>>, %arg12: memref<2x1x32xf32, #tpu.memory_space<vmem>>, %arg13: memref<2x1x32xf32, #tpu.memory_space<vmem>>, %arg14: memref<16x32xf32, #tpu.memory_space<vmem>>, %arg15: memref<2x64xf32, #tpu.memory_space<vmem>>) attributes {dimension_semantics = [#tpu.dimension_semantics<arbitrary>], iteration_bounds = array<i64: 1>, scalar_prefetch = 0 : i64, scratch_operands = 0 : i64, tpu.core_type = #tpu.core_type<tc>, window_params = [{pipeline_mode = #tpu.pipeline_mode<synchronous>, transform_indices = @transform_0, window_bounds = array<i64: 16, 32>}, {pipeline_mode = #tpu.pipeline_mode<synchronous>, transform_indices = @transform_1, window_bounds = array<i64: 2, 32, 96>}, {pipeline_mode = #tpu.pipeline_mode<synchronous>, transform_indices = @transform_2, window_bounds = array<i64: 2, 1, 96>}, {pipeline_mode = #tpu.pipeline_mode<synchronous>, transform_indices = @transform_3, window_bounds = array<i64: 2, 32, 32>}, {pipeline_mode = #tpu.pipeline_mode<synchronous>, transform_indices = @transform_4, window_bounds = array<i64: 2, 1, 32>}, {pipeline_mode = #tpu.pipeline_mode<synchronous>, transform_indices = @transform_5, window_bounds = array<i64: 2, 32, 64>}, {pipeline_mode = #tpu.pipeline_mode<synchronous>, transform_indices = @transform_6, window_bounds = array<i64: 2, 1, 64>}, {pipeline_mode = #tpu.pipeline_mode<synchronous>, transform_indices = @transform_7, window_bounds = array<i64: 2, 64, 32>}, {pipeline_mode = #tpu.pipeline_mode<synchronous>, transform_indices = @transform_8, window_bounds = array<i64: 2, 1, 32>}, {pipeline_mode = #tpu.pipeline_mode<synchronous>, transform_indices = @transform_9, window_bounds = array<i64: 2, 1, 32>}, {pipeline_mode = #tpu.pipeline_mode<synchronous>, transform_indices = @transform_10, window_bounds = array<i64: 2, 1, 32>}, {pipeline_mode = #tpu.pipeline_mode<synchronous>, transform_indices = @transform_11, window_bounds = array<i64: 2, 1, 32>}, {pipeline_mode = #tpu.pipeline_mode<synchronous>, transform_indices = @transform_12, window_bounds = array<i64: 2, 1, 32>}, {pipeline_mode = #tpu.pipeline_mode<synchronous>, transform_indices = @transform_13, window_bounds = array<i64: 16, 32>}, {pipeline_mode = #tpu.pipeline_mode<synchronous>, transform_indices = @transform_14, window_bounds = array<i64: 2, 64>}]} {
    %c0 = arith.constant 0 : index
    %c0_0 = arith.constant 0 : index
    %0 = vector.load %arg1[%c0, %c0_0] : memref<16x32xf32, #tpu.memory_space<vmem>>, vector<16x32xf32>
    %cst = arith.constant 0.000000e+00 : f32
    %1 = vector.broadcast %cst : f32 to vector<2x8x8xf32>
    %c0_1 = arith.constant 0 : index
    %c0_2 = arith.constant 0 : index
    %c0_3 = arith.constant 0 : index
    %2 = vector.load %arg2[%c0_1, %c0_2, %c0_3] : memref<2x32x96xf32, #tpu.memory_space<vmem>>, vector<1x32x96xf32>
    %3 = vector.shape_cast %2 : vector<1x32x96xf32> to vector<32x96xf32>
    %cst_4 = arith.constant dense<0.000000e+00> : vector<16x96xf32>
    %4 = tpu.matmul %0, %3, %cst_4 {dimension_numbers = #tpu.dot_dimension_numbers<[1], [0], [0], [1], [0, 0, 1, 1], [], []>} : vector<16x32xf32>, vector<32x96xf32>, vector<16x96xf32> -> vector<16x96xf32>
    %c0_5 = arith.constant 0 : index
    %c0_6 = arith.constant 0 : index
    %c0_7 = arith.constant 0 : index
    %5 = vector.load %arg3[%c0_5, %c0_6, %c0_7] : memref<2x1x96xf32, #tpu.memory_space<vmem>>, vector<1x1x96xf32>
    %6 = vector.shape_cast %5 : vector<1x1x96xf32> to vector<1x96xf32>
    %7 = vector.broadcast %6 : vector<1x96xf32> to vector<16x96xf32>
    %8 = arith.addf %4, %7 : vector<16x96xf32>
    %9 = vector.extract_strided_slice %8 {offsets = [0, 0], sizes = [16, 32], strides = [1, 1]} : vector<16x96xf32> to vector<16x32xf32>
    %10 = vector.extract_strided_slice %8 {offsets = [0, 32], sizes = [16, 32], strides = [1, 1]} : vector<16x96xf32> to vector<16x32xf32>
    %11 = vector.extract_strided_slice %8 {offsets = [0, 64], sizes = [16, 32], strides = [1, 1]} : vector<16x96xf32> to vector<16x32xf32>
    %12 = vector.extract_strided_slice %9 {offsets = [0, 0], sizes = [16, 8], strides = [1, 1]} : vector<16x32xf32> to vector<16x8xf32>
    %13 = vector.shape_cast %12 : vector<16x8xf32> to vector<2x8x8xf32>
    %14 = vector.extract_strided_slice %9 {offsets = [0, 8], sizes = [16, 8], strides = [1, 1]} : vector<16x32xf32> to vector<16x8xf32>
    %15 = vector.shape_cast %14 : vector<16x8xf32> to vector<2x8x8xf32>
    %16 = vector.extract_strided_slice %9 {offsets = [0, 16], sizes = [16, 8], strides = [1, 1]} : vector<16x32xf32> to vector<16x8xf32>
    %17 = vector.shape_cast %16 : vector<16x8xf32> to vector<2x8x8xf32>
    %18 = vector.extract_strided_slice %9 {offsets = [0, 24], sizes = [16, 8], strides = [1, 1]} : vector<16x32xf32> to vector<16x8xf32>
    %19 = vector.shape_cast %18 : vector<16x8xf32> to vector<2x8x8xf32>
    %20 = tpu.concatenate %13, %15, %17, %19 in 0 : vector<2x8x8xf32>, vector<2x8x8xf32>, vector<2x8x8xf32>, vector<2x8x8xf32> -> vector<8x8x8xf32>
    %21 = vector.extract_strided_slice %10 {offsets = [0, 0], sizes = [16, 8], strides = [1, 1]} : vector<16x32xf32> to vector<16x8xf32>
    %22 = vector.shape_cast %21 : vector<16x8xf32> to vector<2x8x8xf32>
    %23 = vector.extract_strided_slice %10 {offsets = [0, 8], sizes = [16, 8], strides = [1, 1]} : vector<16x32xf32> to vector<16x8xf32>
    %24 = vector.shape_cast %23 : vector<16x8xf32> to vector<2x8x8xf32>
    %25 = vector.extract_strided_slice %10 {offsets = [0, 16], sizes = [16, 8], strides = [1, 1]} : vector<16x32xf32> to vector<16x8xf32>
    %26 = vector.shape_cast %25 : vector<16x8xf32> to vector<2x8x8xf32>
    %27 = vector.extract_strided_slice %10 {offsets = [0, 24], sizes = [16, 8], strides = [1, 1]} : vector<16x32xf32> to vector<16x8xf32>
    %28 = vector.shape_cast %27 : vector<16x8xf32> to vector<2x8x8xf32>
    %29 = tpu.concatenate %22, %24, %26, %28 in 0 : vector<2x8x8xf32>, vector<2x8x8xf32>, vector<2x8x8xf32>, vector<2x8x8xf32> -> vector<8x8x8xf32>
    %30 = vector.extract_strided_slice %11 {offsets = [0, 0], sizes = [16, 8], strides = [1, 1]} : vector<16x32xf32> to vector<16x8xf32>
    %31 = vector.shape_cast %30 : vector<16x8xf32> to vector<2x8x8xf32>
    %32 = vector.extract_strided_slice %11 {offsets = [0, 8], sizes = [16, 8], strides = [1, 1]} : vector<16x32xf32> to vector<16x8xf32>
    %33 = vector.shape_cast %32 : vector<16x8xf32> to vector<2x8x8xf32>
    %34 = vector.extract_strided_slice %11 {offsets = [0, 16], sizes = [16, 8], strides = [1, 1]} : vector<16x32xf32> to vector<16x8xf32>
    %35 = vector.shape_cast %34 : vector<16x8xf32> to vector<2x8x8xf32>
    %36 = vector.extract_strided_slice %11 {offsets = [0, 24], sizes = [16, 8], strides = [1, 1]} : vector<16x32xf32> to vector<16x8xf32>
    %37 = vector.shape_cast %36 : vector<16x8xf32> to vector<2x8x8xf32>
    %38 = tpu.concatenate %31, %33, %35, %37 in 0 : vector<2x8x8xf32>, vector<2x8x8xf32>, vector<2x8x8xf32>, vector<2x8x8xf32> -> vector<8x8x8xf32>
    "tpu.trace_start"() <{level = 10 : i32, message = "nqd,nkd->nqk"}> : () -> ()
    %cst_8 = arith.constant dense<0.000000e+00> : vector<8x8x8xf32>
    %39 = tpu.matmul %20, %29, %cst_8 {dimension_numbers = #tpu.dot_dimension_numbers<[2], [2], [1], [1], [0, 0, 0, 1, 1, 1], [0], [0]>} : vector<8x8x8xf32>, vector<8x8x8xf32>, vector<8x8x8xf32> -> vector<8x8x8xf32>
    "tpu.trace_stop"() : () -> ()
    %cst_9 = arith.constant dense<0xFF800000> : vector<8x8xf32>
    %40 = vector.multi_reduction <maximumf>, %39, %cst_9 [2] : vector<8x8x8xf32> to vector<8x8xf32>
    %41 = vector.shape_cast %40 : vector<8x8xf32> to vector<8x8x1xf32>
    %42 = vector.broadcast %41 : vector<8x8x1xf32> to vector<8x8x8xf32>
    %43 = arith.subf %39, %42 : vector<8x8x8xf32>
    %44 = math.exp %43 : vector<8x8x8xf32>
    %cst_10 = arith.constant dense<0.000000e+00> : vector<8x8xf32>
    %45 = vector.multi_reduction <add>, %44, %cst_10 [2] : vector<8x8x8xf32> to vector<8x8xf32>
    %46 = vector.shape_cast %45 : vector<8x8xf32> to vector<8x8x1xf32>
    %47 = tpu.reciprocal %46 {approx = true} : vector<8x8x1xf32> -> vector<8x8x1xf32>
    %48 = vector.broadcast %47 : vector<8x8x1xf32> to vector<8x8x8xf32>
    %49 = arith.mulf %44, %48 : vector<8x8x8xf32>
    %50 = vector.extract_strided_slice %49 {offsets = [0, 0, 0], sizes = [2, 8, 8], strides = [1, 1, 1]} : vector<8x8x8xf32> to vector<2x8x8xf32>
    %51 = vector.extract_strided_slice %49 {offsets = [2, 0, 0], sizes = [2, 8, 8], strides = [1, 1, 1]} : vector<8x8x8xf32> to vector<2x8x8xf32>
    %52 = arith.addf %50, %51 : vector<2x8x8xf32>
    %53 = vector.extract_strided_slice %49 {offsets = [4, 0, 0], sizes = [2, 8, 8], strides = [1, 1, 1]} : vector<8x8x8xf32> to vector<2x8x8xf32>
    %54 = arith.addf %52, %53 : vector<2x8x8xf32>
    %55 = vector.extract_strided_slice %49 {offsets = [6, 0, 0], sizes = [2, 8, 8], strides = [1, 1, 1]} : vector<8x8x8xf32> to vector<2x8x8xf32>
    %56 = arith.addf %54, %55 : vector<2x8x8xf32>
    %cst_11 = arith.constant 2.500000e-01 : f32
    %57 = vector.broadcast %cst_11 : f32 to vector<2x8x8xf32>
    %58 = arith.mulf %56, %57 : vector<2x8x8xf32>
    %59 = arith.addf %1, %58 : vector<2x8x8xf32>
    "tpu.trace_start"() <{level = 10 : i32, message = "nqk,nkd->nqd"}> : () -> ()
    %cst_12 = arith.constant dense<0.000000e+00> : vector<8x8x8xf32>
    %60 = tpu.matmul %49, %38, %cst_12 {dimension_numbers = #tpu.dot_dimension_numbers<[2], [1], [1], [2], [0, 0, 0, 1, 1, 2], [0], [0]>} : vector<8x8x8xf32>, vector<8x8x8xf32>, vector<8x8x8xf32> -> vector<8x8x8xf32>
    "tpu.trace_stop"() : () -> ()
    %61 = vector.extract_strided_slice %60 {offsets = [0, 0, 0], sizes = [2, 8, 8], strides = [1, 1, 1]} : vector<8x8x8xf32> to vector<2x8x8xf32>
    %62 = vector.extract_strided_slice %60 {offsets = [2, 0, 0], sizes = [2, 8, 8], strides = [1, 1, 1]} : vector<8x8x8xf32> to vector<2x8x8xf32>
    %63 = vector.extract_strided_slice %60 {offsets = [4, 0, 0], sizes = [2, 8, 8], strides = [1, 1, 1]} : vector<8x8x8xf32> to vector<2x8x8xf32>
    %64 = vector.extract_strided_slice %60 {offsets = [6, 0, 0], sizes = [2, 8, 8], strides = [1, 1, 1]} : vector<8x8x8xf32> to vector<2x8x8xf32>
    %65 = tpu.concatenate %61, %62, %63, %64 in 2 : vector<2x8x8xf32>, vector<2x8x8xf32>, vector<2x8x8xf32>, vector<2x8x8xf32> -> vector<2x8x32xf32>
    %66 = vector.shape_cast %65 : vector<2x8x32xf32> to vector<16x32xf32>
    %c0_13 = arith.constant 0 : index
    %c0_14 = arith.constant 0 : index
    %c0_15 = arith.constant 0 : index
    %67 = vector.load %arg4[%c0_13, %c0_14, %c0_15] : memref<2x32x32xf32, #tpu.memory_space<vmem>>, vector<1x32x32xf32>
    %68 = vector.shape_cast %67 : vector<1x32x32xf32> to vector<32x32xf32>
    %cst_16 = arith.constant dense<0.000000e+00> : vector<16x32xf32>
    %69 = tpu.matmul %66, %68, %cst_16 {dimension_numbers = #tpu.dot_dimension_numbers<[1], [0], [0], [1], [0, 0, 1, 1], [], []>} : vector<16x32xf32>, vector<32x32xf32>, vector<16x32xf32> -> vector<16x32xf32>
    %c0_17 = arith.constant 0 : index
    %c0_18 = arith.constant 0 : index
    %c0_19 = arith.constant 0 : index
    %70 = vector.load %arg5[%c0_17, %c0_18, %c0_19] : memref<2x1x32xf32, #tpu.memory_space<vmem>>, vector<1x1x32xf32>
    %71 = vector.shape_cast %70 : vector<1x1x32xf32> to vector<1x32xf32>
    %72 = vector.broadcast %71 : vector<1x32xf32> to vector<16x32xf32>
    %73 = arith.addf %69, %72 : vector<16x32xf32>
    %74 = arith.addf %0, %73 : vector<16x32xf32>
    %c0_20 = arith.constant 0 : index
    %c0_21 = arith.constant 0 : index
    %c0_22 = arith.constant 0 : index
    %75 = vector.load %arg10[%c0_20, %c0_21, %c0_22] : memref<2x1x32xf32, #tpu.memory_space<vmem>>, vector<1x1x32xf32>
    %76 = vector.shape_cast %75 : vector<1x1x32xf32> to vector<1x32xf32>
    %c0_23 = arith.constant 0 : index
    %c0_24 = arith.constant 0 : index
    %c0_25 = arith.constant 0 : index
    %77 = vector.load %arg11[%c0_23, %c0_24, %c0_25] : memref<2x1x32xf32, #tpu.memory_space<vmem>>, vector<1x1x32xf32>
    %78 = vector.shape_cast %77 : vector<1x1x32xf32> to vector<1x32xf32>
    %cst_26 = arith.constant dense<0.000000e+00> : vector<16xf32>
    %79 = vector.multi_reduction <add>, %74, %cst_26 [1] : vector<16x32xf32> to vector<16xf32>
    %80 = vector.shape_cast %79 : vector<16xf32> to vector<16x1xf32>
    %cst_27 = arith.constant 3.200000e+01 : f32
    %81 = vector.broadcast %cst_27 : f32 to vector<16x1xf32>
    %82 = arith.divf %80, %81 : vector<16x1xf32>
    %83 = vector.broadcast %82 : vector<16x1xf32> to vector<16x32xf32>
    %84 = arith.subf %74, %83 : vector<16x32xf32>
    %85 = arith.mulf %84, %84 : vector<16x32xf32>
    %cst_28 = arith.constant dense<0.000000e+00> : vector<16xf32>
    %86 = vector.multi_reduction <add>, %85, %cst_28 [1] : vector<16x32xf32> to vector<16xf32>
    %87 = vector.shape_cast %86 : vector<16xf32> to vector<16x1xf32>
    %cst_29 = arith.constant 3.200000e+01 : f32
    %88 = vector.broadcast %cst_29 : f32 to vector<16x1xf32>
    %89 = arith.divf %87, %88 : vector<16x1xf32>
    %90 = vector.broadcast %82 : vector<16x1xf32> to vector<16x32xf32>
    %91 = arith.subf %74, %90 : vector<16x32xf32>
    %cst_30 = arith.constant 9.99999974E-6 : f32
    %92 = vector.broadcast %cst_30 : f32 to vector<16x1xf32>
    %93 = arith.addf %89, %92 : vector<16x1xf32>
    %94 = math.rsqrt %93 : vector<16x1xf32>
    %95 = vector.broadcast %94 : vector<16x1xf32> to vector<16x32xf32>
    %96 = arith.mulf %91, %95 : vector<16x32xf32>
    %97 = vector.broadcast %76 : vector<1x32xf32> to vector<16x32xf32>
    %98 = arith.mulf %96, %97 : vector<16x32xf32>
    %99 = vector.broadcast %78 : vector<1x32xf32> to vector<16x32xf32>
    %100 = arith.addf %98, %99 : vector<16x32xf32>
    %c0_31 = arith.constant 0 : index
    %c0_32 = arith.constant 0 : index
    %c0_33 = arith.constant 0 : index
    %101 = vector.load %arg6[%c0_31, %c0_32, %c0_33] : memref<2x32x64xf32, #tpu.memory_space<vmem>>, vector<1x32x64xf32>
    %102 = vector.shape_cast %101 : vector<1x32x64xf32> to vector<32x64xf32>
    %cst_34 = arith.constant dense<0.000000e+00> : vector<16x64xf32>
    %103 = tpu.matmul %100, %102, %cst_34 {dimension_numbers = #tpu.dot_dimension_numbers<[1], [0], [0], [1], [0, 0, 1, 1], [], []>} : vector<16x32xf32>, vector<32x64xf32>, vector<16x64xf32> -> vector<16x64xf32>
    %c0_35 = arith.constant 0 : index
    %c0_36 = arith.constant 0 : index
    %c0_37 = arith.constant 0 : index
    %104 = vector.load %arg7[%c0_35, %c0_36, %c0_37] : memref<2x1x64xf32, #tpu.memory_space<vmem>>, vector<1x1x64xf32>
    %105 = vector.shape_cast %104 : vector<1x1x64xf32> to vector<1x64xf32>
    %106 = vector.broadcast %105 : vector<1x64xf32> to vector<16x64xf32>
    %107 = arith.addf %103, %106 : vector<16x64xf32>
    %cst_38 = arith.constant 0.000000e+00 : f32
    %108 = vector.broadcast %cst_38 : f32 to vector<16x64xf32>
    %109 = arith.maximumf %107, %108 : vector<16x64xf32>
    %c0_39 = arith.constant 0 : index
    %c0_40 = arith.constant 0 : index
    %c0_41 = arith.constant 0 : index
    %110 = vector.load %arg8[%c0_39, %c0_40, %c0_41] : memref<2x64x32xf32, #tpu.memory_space<vmem>>, vector<1x64x32xf32>
    %111 = vector.shape_cast %110 : vector<1x64x32xf32> to vector<64x32xf32>
    %cst_42 = arith.constant dense<0.000000e+00> : vector<16x32xf32>
    %112 = tpu.matmul %109, %111, %cst_42 {dimension_numbers = #tpu.dot_dimension_numbers<[1], [0], [0], [1], [0, 0, 1, 1], [], []>} : vector<16x64xf32>, vector<64x32xf32>, vector<16x32xf32> -> vector<16x32xf32>
    %c0_43 = arith.constant 0 : index
    %c0_44 = arith.constant 0 : index
    %c0_45 = arith.constant 0 : index
    %113 = vector.load %arg9[%c0_43, %c0_44, %c0_45] : memref<2x1x32xf32, #tpu.memory_space<vmem>>, vector<1x1x32xf32>
    %114 = vector.shape_cast %113 : vector<1x1x32xf32> to vector<1x32xf32>
    %115 = vector.broadcast %114 : vector<1x32xf32> to vector<16x32xf32>
    %116 = arith.addf %112, %115 : vector<16x32xf32>
    %117 = arith.addf %100, %116 : vector<16x32xf32>
    %c0_46 = arith.constant 0 : index
    %c0_47 = arith.constant 0 : index
    %c0_48 = arith.constant 0 : index
    %118 = vector.load %arg12[%c0_46, %c0_47, %c0_48] : memref<2x1x32xf32, #tpu.memory_space<vmem>>, vector<1x1x32xf32>
    %119 = vector.shape_cast %118 : vector<1x1x32xf32> to vector<1x32xf32>
    %c0_49 = arith.constant 0 : index
    %c0_50 = arith.constant 0 : index
    %c0_51 = arith.constant 0 : index
    %120 = vector.load %arg13[%c0_49, %c0_50, %c0_51] : memref<2x1x32xf32, #tpu.memory_space<vmem>>, vector<1x1x32xf32>
    %121 = vector.shape_cast %120 : vector<1x1x32xf32> to vector<1x32xf32>
    %cst_52 = arith.constant dense<0.000000e+00> : vector<16xf32>
    %122 = vector.multi_reduction <add>, %117, %cst_52 [1] : vector<16x32xf32> to vector<16xf32>
    %123 = vector.shape_cast %122 : vector<16xf32> to vector<16x1xf32>
    %cst_53 = arith.constant 3.200000e+01 : f32
    %124 = vector.broadcast %cst_53 : f32 to vector<16x1xf32>
    %125 = arith.divf %123, %124 : vector<16x1xf32>
    %126 = vector.broadcast %125 : vector<16x1xf32> to vector<16x32xf32>
    %127 = arith.subf %117, %126 : vector<16x32xf32>
    %128 = arith.mulf %127, %127 : vector<16x32xf32>
    %cst_54 = arith.constant dense<0.000000e+00> : vector<16xf32>
    %129 = vector.multi_reduction <add>, %128, %cst_54 [1] : vector<16x32xf32> to vector<16xf32>
    %130 = vector.shape_cast %129 : vector<16xf32> to vector<16x1xf32>
    %cst_55 = arith.constant 3.200000e+01 : f32
    %131 = vector.broadcast %cst_55 : f32 to vector<16x1xf32>
    %132 = arith.divf %130, %131 : vector<16x1xf32>
    %133 = vector.broadcast %125 : vector<16x1xf32> to vector<16x32xf32>
    %134 = arith.subf %117, %133 : vector<16x32xf32>
    %cst_56 = arith.constant 9.99999974E-6 : f32
    %135 = vector.broadcast %cst_56 : f32 to vector<16x1xf32>
    %136 = arith.addf %132, %135 : vector<16x1xf32>
    %137 = math.rsqrt %136 : vector<16x1xf32>
    %138 = vector.broadcast %137 : vector<16x1xf32> to vector<16x32xf32>
    %139 = arith.mulf %134, %138 : vector<16x32xf32>
    %140 = vector.broadcast %119 : vector<1x32xf32> to vector<16x32xf32>
    %141 = arith.mulf %139, %140 : vector<16x32xf32>
    %142 = vector.broadcast %121 : vector<1x32xf32> to vector<16x32xf32>
    %143 = arith.addf %141, %142 : vector<16x32xf32>
    %c1 = arith.constant 1 : index
    %c0_57 = arith.constant 0 : index
    %c0_58 = arith.constant 0 : index
    %144 = vector.load %arg2[%c1, %c0_57, %c0_58] : memref<2x32x96xf32, #tpu.memory_space<vmem>>, vector<1x32x96xf32>
    %145 = vector.shape_cast %144 : vector<1x32x96xf32> to vector<32x96xf32>
    %cst_59 = arith.constant dense<0.000000e+00> : vector<16x96xf32>
    %146 = tpu.matmul %143, %145, %cst_59 {dimension_numbers = #tpu.dot_dimension_numbers<[1], [0], [0], [1], [0, 0, 1, 1], [], []>} : vector<16x32xf32>, vector<32x96xf32>, vector<16x96xf32> -> vector<16x96xf32>
    %c1_60 = arith.constant 1 : index
    %c0_61 = arith.constant 0 : index
    %c0_62 = arith.constant 0 : index
    %147 = vector.load %arg3[%c1_60, %c0_61, %c0_62] : memref<2x1x96xf32, #tpu.memory_space<vmem>>, vector<1x1x96xf32>
    %148 = vector.shape_cast %147 : vector<1x1x96xf32> to vector<1x96xf32>
    %149 = vector.broadcast %148 : vector<1x96xf32> to vector<16x96xf32>
    %150 = arith.addf %146, %149 : vector<16x96xf32>
    %151 = vector.extract_strided_slice %150 {offsets = [0, 0], sizes = [16, 32], strides = [1, 1]} : vector<16x96xf32> to vector<16x32xf32>
    %152 = vector.extract_strided_slice %150 {offsets = [0, 32], sizes = [16, 32], strides = [1, 1]} : vector<16x96xf32> to vector<16x32xf32>
    %153 = vector.extract_strided_slice %150 {offsets = [0, 64], sizes = [16, 32], strides = [1, 1]} : vector<16x96xf32> to vector<16x32xf32>
    %154 = vector.extract_strided_slice %151 {offsets = [0, 0], sizes = [16, 8], strides = [1, 1]} : vector<16x32xf32> to vector<16x8xf32>
    %155 = vector.shape_cast %154 : vector<16x8xf32> to vector<2x8x8xf32>
    %156 = vector.extract_strided_slice %151 {offsets = [0, 8], sizes = [16, 8], strides = [1, 1]} : vector<16x32xf32> to vector<16x8xf32>
    %157 = vector.shape_cast %156 : vector<16x8xf32> to vector<2x8x8xf32>
    %158 = vector.extract_strided_slice %151 {offsets = [0, 16], sizes = [16, 8], strides = [1, 1]} : vector<16x32xf32> to vector<16x8xf32>
    %159 = vector.shape_cast %158 : vector<16x8xf32> to vector<2x8x8xf32>
    %160 = vector.extract_strided_slice %151 {offsets = [0, 24], sizes = [16, 8], strides = [1, 1]} : vector<16x32xf32> to vector<16x8xf32>
    %161 = vector.shape_cast %160 : vector<16x8xf32> to vector<2x8x8xf32>
    %162 = tpu.concatenate %155, %157, %159, %161 in 0 : vector<2x8x8xf32>, vector<2x8x8xf32>, vector<2x8x8xf32>, vector<2x8x8xf32> -> vector<8x8x8xf32>
    %163 = vector.extract_strided_slice %152 {offsets = [0, 0], sizes = [16, 8], strides = [1, 1]} : vector<16x32xf32> to vector<16x8xf32>
    %164 = vector.shape_cast %163 : vector<16x8xf32> to vector<2x8x8xf32>
    %165 = vector.extract_strided_slice %152 {offsets = [0, 8], sizes = [16, 8], strides = [1, 1]} : vector<16x32xf32> to vector<16x8xf32>
    %166 = vector.shape_cast %165 : vector<16x8xf32> to vector<2x8x8xf32>
    %167 = vector.extract_strided_slice %152 {offsets = [0, 16], sizes = [16, 8], strides = [1, 1]} : vector<16x32xf32> to vector<16x8xf32>
    %168 = vector.shape_cast %167 : vector<16x8xf32> to vector<2x8x8xf32>
    %169 = vector.extract_strided_slice %152 {offsets = [0, 24], sizes = [16, 8], strides = [1, 1]} : vector<16x32xf32> to vector<16x8xf32>
    %170 = vector.shape_cast %169 : vector<16x8xf32> to vector<2x8x8xf32>
    %171 = tpu.concatenate %164, %166, %168, %170 in 0 : vector<2x8x8xf32>, vector<2x8x8xf32>, vector<2x8x8xf32>, vector<2x8x8xf32> -> vector<8x8x8xf32>
    %172 = vector.extract_strided_slice %153 {offsets = [0, 0], sizes = [16, 8], strides = [1, 1]} : vector<16x32xf32> to vector<16x8xf32>
    %173 = vector.shape_cast %172 : vector<16x8xf32> to vector<2x8x8xf32>
    %174 = vector.extract_strided_slice %153 {offsets = [0, 8], sizes = [16, 8], strides = [1, 1]} : vector<16x32xf32> to vector<16x8xf32>
    %175 = vector.shape_cast %174 : vector<16x8xf32> to vector<2x8x8xf32>
    %176 = vector.extract_strided_slice %153 {offsets = [0, 16], sizes = [16, 8], strides = [1, 1]} : vector<16x32xf32> to vector<16x8xf32>
    %177 = vector.shape_cast %176 : vector<16x8xf32> to vector<2x8x8xf32>
    %178 = vector.extract_strided_slice %153 {offsets = [0, 24], sizes = [16, 8], strides = [1, 1]} : vector<16x32xf32> to vector<16x8xf32>
    %179 = vector.shape_cast %178 : vector<16x8xf32> to vector<2x8x8xf32>
    %180 = tpu.concatenate %173, %175, %177, %179 in 0 : vector<2x8x8xf32>, vector<2x8x8xf32>, vector<2x8x8xf32>, vector<2x8x8xf32> -> vector<8x8x8xf32>
    "tpu.trace_start"() <{level = 10 : i32, message = "nqd,nkd->nqk"}> : () -> ()
    %cst_63 = arith.constant dense<0.000000e+00> : vector<8x8x8xf32>
    %181 = tpu.matmul %162, %171, %cst_63 {dimension_numbers = #tpu.dot_dimension_numbers<[2], [2], [1], [1], [0, 0, 0, 1, 1, 1], [0], [0]>} : vector<8x8x8xf32>, vector<8x8x8xf32>, vector<8x8x8xf32> -> vector<8x8x8xf32>
    "tpu.trace_stop"() : () -> ()
    %cst_64 = arith.constant dense<0xFF800000> : vector<8x8xf32>
    %182 = vector.multi_reduction <maximumf>, %181, %cst_64 [2] : vector<8x8x8xf32> to vector<8x8xf32>
    %183 = vector.shape_cast %182 : vector<8x8xf32> to vector<8x8x1xf32>
    %184 = vector.broadcast %183 : vector<8x8x1xf32> to vector<8x8x8xf32>
    %185 = arith.subf %181, %184 : vector<8x8x8xf32>
    %186 = math.exp %185 : vector<8x8x8xf32>
    %cst_65 = arith.constant dense<0.000000e+00> : vector<8x8xf32>
    %187 = vector.multi_reduction <add>, %186, %cst_65 [2] : vector<8x8x8xf32> to vector<8x8xf32>
    %188 = vector.shape_cast %187 : vector<8x8xf32> to vector<8x8x1xf32>
    %189 = tpu.reciprocal %188 {approx = true} : vector<8x8x1xf32> -> vector<8x8x1xf32>
    %190 = vector.broadcast %189 : vector<8x8x1xf32> to vector<8x8x8xf32>
    %191 = arith.mulf %186, %190 : vector<8x8x8xf32>
    %192 = vector.extract_strided_slice %191 {offsets = [0, 0, 0], sizes = [2, 8, 8], strides = [1, 1, 1]} : vector<8x8x8xf32> to vector<2x8x8xf32>
    %193 = vector.extract_strided_slice %191 {offsets = [2, 0, 0], sizes = [2, 8, 8], strides = [1, 1, 1]} : vector<8x8x8xf32> to vector<2x8x8xf32>
    %194 = arith.addf %192, %193 : vector<2x8x8xf32>
    %195 = vector.extract_strided_slice %191 {offsets = [4, 0, 0], sizes = [2, 8, 8], strides = [1, 1, 1]} : vector<8x8x8xf32> to vector<2x8x8xf32>
    %196 = arith.addf %194, %195 : vector<2x8x8xf32>
    %197 = vector.extract_strided_slice %191 {offsets = [6, 0, 0], sizes = [2, 8, 8], strides = [1, 1, 1]} : vector<8x8x8xf32> to vector<2x8x8xf32>
    %198 = arith.addf %196, %197 : vector<2x8x8xf32>
    %cst_66 = arith.constant 2.500000e-01 : f32
    %199 = vector.broadcast %cst_66 : f32 to vector<2x8x8xf32>
    %200 = arith.mulf %198, %199 : vector<2x8x8xf32>
    %201 = arith.addf %59, %200 : vector<2x8x8xf32>
    "tpu.trace_start"() <{level = 10 : i32, message = "nqk,nkd->nqd"}> : () -> ()
    %cst_67 = arith.constant dense<0.000000e+00> : vector<8x8x8xf32>
    %202 = tpu.matmul %191, %180, %cst_67 {dimension_numbers = #tpu.dot_dimension_numbers<[2], [1], [1], [2], [0, 0, 0, 1, 1, 2], [0], [0]>} : vector<8x8x8xf32>, vector<8x8x8xf32>, vector<8x8x8xf32> -> vector<8x8x8xf32>
    "tpu.trace_stop"() : () -> ()
    %203 = vector.extract_strided_slice %202 {offsets = [0, 0, 0], sizes = [2, 8, 8], strides = [1, 1, 1]} : vector<8x8x8xf32> to vector<2x8x8xf32>
    %204 = vector.extract_strided_slice %202 {offsets = [2, 0, 0], sizes = [2, 8, 8], strides = [1, 1, 1]} : vector<8x8x8xf32> to vector<2x8x8xf32>
    %205 = vector.extract_strided_slice %202 {offsets = [4, 0, 0], sizes = [2, 8, 8], strides = [1, 1, 1]} : vector<8x8x8xf32> to vector<2x8x8xf32>
    %206 = vector.extract_strided_slice %202 {offsets = [6, 0, 0], sizes = [2, 8, 8], strides = [1, 1, 1]} : vector<8x8x8xf32> to vector<2x8x8xf32>
    %207 = tpu.concatenate %203, %204, %205, %206 in 2 : vector<2x8x8xf32>, vector<2x8x8xf32>, vector<2x8x8xf32>, vector<2x8x8xf32> -> vector<2x8x32xf32>
    %208 = vector.shape_cast %207 : vector<2x8x32xf32> to vector<16x32xf32>
    %c1_68 = arith.constant 1 : index
    %c0_69 = arith.constant 0 : index
    %c0_70 = arith.constant 0 : index
    %209 = vector.load %arg4[%c1_68, %c0_69, %c0_70] : memref<2x32x32xf32, #tpu.memory_space<vmem>>, vector<1x32x32xf32>
    %210 = vector.shape_cast %209 : vector<1x32x32xf32> to vector<32x32xf32>
    %cst_71 = arith.constant dense<0.000000e+00> : vector<16x32xf32>
    %211 = tpu.matmul %208, %210, %cst_71 {dimension_numbers = #tpu.dot_dimension_numbers<[1], [0], [0], [1], [0, 0, 1, 1], [], []>} : vector<16x32xf32>, vector<32x32xf32>, vector<16x32xf32> -> vector<16x32xf32>
    %c1_72 = arith.constant 1 : index
    %c0_73 = arith.constant 0 : index
    %c0_74 = arith.constant 0 : index
    %212 = vector.load %arg5[%c1_72, %c0_73, %c0_74] : memref<2x1x32xf32, #tpu.memory_space<vmem>>, vector<1x1x32xf32>
    %213 = vector.shape_cast %212 : vector<1x1x32xf32> to vector<1x32xf32>
    %214 = vector.broadcast %213 : vector<1x32xf32> to vector<16x32xf32>
    %215 = arith.addf %211, %214 : vector<16x32xf32>
    %216 = arith.addf %143, %215 : vector<16x32xf32>
    %c1_75 = arith.constant 1 : index
    %c0_76 = arith.constant 0 : index
    %c0_77 = arith.constant 0 : index
    %217 = vector.load %arg10[%c1_75, %c0_76, %c0_77] : memref<2x1x32xf32, #tpu.memory_space<vmem>>, vector<1x1x32xf32>
    %218 = vector.shape_cast %217 : vector<1x1x32xf32> to vector<1x32xf32>
    %c1_78 = arith.constant 1 : index
    %c0_79 = arith.constant 0 : index
    %c0_80 = arith.constant 0 : index
    %219 = vector.load %arg11[%c1_78, %c0_79, %c0_80] : memref<2x1x32xf32, #tpu.memory_space<vmem>>, vector<1x1x32xf32>
    %220 = vector.shape_cast %219 : vector<1x1x32xf32> to vector<1x32xf32>
    %cst_81 = arith.constant dense<0.000000e+00> : vector<16xf32>
    %221 = vector.multi_reduction <add>, %216, %cst_81 [1] : vector<16x32xf32> to vector<16xf32>
    %222 = vector.shape_cast %221 : vector<16xf32> to vector<16x1xf32>
    %cst_82 = arith.constant 3.200000e+01 : f32
    %223 = vector.broadcast %cst_82 : f32 to vector<16x1xf32>
    %224 = arith.divf %222, %223 : vector<16x1xf32>
    %225 = vector.broadcast %224 : vector<16x1xf32> to vector<16x32xf32>
    %226 = arith.subf %216, %225 : vector<16x32xf32>
    %227 = arith.mulf %226, %226 : vector<16x32xf32>
    %cst_83 = arith.constant dense<0.000000e+00> : vector<16xf32>
    %228 = vector.multi_reduction <add>, %227, %cst_83 [1] : vector<16x32xf32> to vector<16xf32>
    %229 = vector.shape_cast %228 : vector<16xf32> to vector<16x1xf32>
    %cst_84 = arith.constant 3.200000e+01 : f32
    %230 = vector.broadcast %cst_84 : f32 to vector<16x1xf32>
    %231 = arith.divf %229, %230 : vector<16x1xf32>
    %232 = vector.broadcast %224 : vector<16x1xf32> to vector<16x32xf32>
    %233 = arith.subf %216, %232 : vector<16x32xf32>
    %cst_85 = arith.constant 9.99999974E-6 : f32
    %234 = vector.broadcast %cst_85 : f32 to vector<16x1xf32>
    %235 = arith.addf %231, %234 : vector<16x1xf32>
    %236 = math.rsqrt %235 : vector<16x1xf32>
    %237 = vector.broadcast %236 : vector<16x1xf32> to vector<16x32xf32>
    %238 = arith.mulf %233, %237 : vector<16x32xf32>
    %239 = vector.broadcast %218 : vector<1x32xf32> to vector<16x32xf32>
    %240 = arith.mulf %238, %239 : vector<16x32xf32>
    %241 = vector.broadcast %220 : vector<1x32xf32> to vector<16x32xf32>
    %242 = arith.addf %240, %241 : vector<16x32xf32>
    %c1_86 = arith.constant 1 : index
    %c0_87 = arith.constant 0 : index
    %c0_88 = arith.constant 0 : index
    %243 = vector.load %arg6[%c1_86, %c0_87, %c0_88] : memref<2x32x64xf32, #tpu.memory_space<vmem>>, vector<1x32x64xf32>
    %244 = vector.shape_cast %243 : vector<1x32x64xf32> to vector<32x64xf32>
    %cst_89 = arith.constant dense<0.000000e+00> : vector<16x64xf32>
    %245 = tpu.matmul %242, %244, %cst_89 {dimension_numbers = #tpu.dot_dimension_numbers<[1], [0], [0], [1], [0, 0, 1, 1], [], []>} : vector<16x32xf32>, vector<32x64xf32>, vector<16x64xf32> -> vector<16x64xf32>
    %c1_90 = arith.constant 1 : index
    %c0_91 = arith.constant 0 : index
    %c0_92 = arith.constant 0 : index
    %246 = vector.load %arg7[%c1_90, %c0_91, %c0_92] : memref<2x1x64xf32, #tpu.memory_space<vmem>>, vector<1x1x64xf32>
    %247 = vector.shape_cast %246 : vector<1x1x64xf32> to vector<1x64xf32>
    %248 = vector.broadcast %247 : vector<1x64xf32> to vector<16x64xf32>
    %249 = arith.addf %245, %248 : vector<16x64xf32>
    %cst_93 = arith.constant 0.000000e+00 : f32
    %250 = vector.broadcast %cst_93 : f32 to vector<16x64xf32>
    %251 = arith.maximumf %249, %250 : vector<16x64xf32>
    %c1_94 = arith.constant 1 : index
    %c0_95 = arith.constant 0 : index
    %c0_96 = arith.constant 0 : index
    %252 = vector.load %arg8[%c1_94, %c0_95, %c0_96] : memref<2x64x32xf32, #tpu.memory_space<vmem>>, vector<1x64x32xf32>
    %253 = vector.shape_cast %252 : vector<1x64x32xf32> to vector<64x32xf32>
    %cst_97 = arith.constant dense<0.000000e+00> : vector<16x32xf32>
    %254 = tpu.matmul %251, %253, %cst_97 {dimension_numbers = #tpu.dot_dimension_numbers<[1], [0], [0], [1], [0, 0, 1, 1], [], []>} : vector<16x64xf32>, vector<64x32xf32>, vector<16x32xf32> -> vector<16x32xf32>
    %c1_98 = arith.constant 1 : index
    %c0_99 = arith.constant 0 : index
    %c0_100 = arith.constant 0 : index
    %255 = vector.load %arg9[%c1_98, %c0_99, %c0_100] : memref<2x1x32xf32, #tpu.memory_space<vmem>>, vector<1x1x32xf32>
    %256 = vector.shape_cast %255 : vector<1x1x32xf32> to vector<1x32xf32>
    %257 = vector.broadcast %256 : vector<1x32xf32> to vector<16x32xf32>
    %258 = arith.addf %254, %257 : vector<16x32xf32>
    %259 = arith.addf %242, %258 : vector<16x32xf32>
    %c1_101 = arith.constant 1 : index
    %c0_102 = arith.constant 0 : index
    %c0_103 = arith.constant 0 : index
    %260 = vector.load %arg12[%c1_101, %c0_102, %c0_103] : memref<2x1x32xf32, #tpu.memory_space<vmem>>, vector<1x1x32xf32>
    %261 = vector.shape_cast %260 : vector<1x1x32xf32> to vector<1x32xf32>
    %c1_104 = arith.constant 1 : index
    %c0_105 = arith.constant 0 : index
    %c0_106 = arith.constant 0 : index
    %262 = vector.load %arg13[%c1_104, %c0_105, %c0_106] : memref<2x1x32xf32, #tpu.memory_space<vmem>>, vector<1x1x32xf32>
    %263 = vector.shape_cast %262 : vector<1x1x32xf32> to vector<1x32xf32>
    %cst_107 = arith.constant dense<0.000000e+00> : vector<16xf32>
    %264 = vector.multi_reduction <add>, %259, %cst_107 [1] : vector<16x32xf32> to vector<16xf32>
    %265 = vector.shape_cast %264 : vector<16xf32> to vector<16x1xf32>
    %cst_108 = arith.constant 3.200000e+01 : f32
    %266 = vector.broadcast %cst_108 : f32 to vector<16x1xf32>
    %267 = arith.divf %265, %266 : vector<16x1xf32>
    %268 = vector.broadcast %267 : vector<16x1xf32> to vector<16x32xf32>
    %269 = arith.subf %259, %268 : vector<16x32xf32>
    %270 = arith.mulf %269, %269 : vector<16x32xf32>
    %cst_109 = arith.constant dense<0.000000e+00> : vector<16xf32>
    %271 = vector.multi_reduction <add>, %270, %cst_109 [1] : vector<16x32xf32> to vector<16xf32>
    %272 = vector.shape_cast %271 : vector<16xf32> to vector<16x1xf32>
    %cst_110 = arith.constant 3.200000e+01 : f32
    %273 = vector.broadcast %cst_110 : f32 to vector<16x1xf32>
    %274 = arith.divf %272, %273 : vector<16x1xf32>
    %275 = vector.broadcast %267 : vector<16x1xf32> to vector<16x32xf32>
    %276 = arith.subf %259, %275 : vector<16x32xf32>
    %cst_111 = arith.constant 9.99999974E-6 : f32
    %277 = vector.broadcast %cst_111 : f32 to vector<16x1xf32>
    %278 = arith.addf %274, %277 : vector<16x1xf32>
    %279 = math.rsqrt %278 : vector<16x1xf32>
    %280 = vector.broadcast %279 : vector<16x1xf32> to vector<16x32xf32>
    %281 = arith.mulf %276, %280 : vector<16x32xf32>
    %282 = vector.broadcast %261 : vector<1x32xf32> to vector<16x32xf32>
    %283 = arith.mulf %281, %282 : vector<16x32xf32>
    %284 = vector.broadcast %263 : vector<1x32xf32> to vector<16x32xf32>
    %285 = arith.addf %283, %284 : vector<16x32xf32>
    %c0_112 = arith.constant 0 : index
    %c0_113 = arith.constant 0 : index
    %286 = vector.load %arg14[%c0_112, %c0_113] : memref<16x32xf32, #tpu.memory_space<vmem>>, vector<16x32xf32>
    tpu.vector_store %arg14[%c0_112, %c0_113], %285 {strides = array<i32>} : memref<16x32xf32, #tpu.memory_space<vmem>>, vector<16x32xf32>,
    %287 = vector.extract_strided_slice %201 {offsets = [0, 0, 0], sizes = [2, 1, 8], strides = [1, 1, 1]} : vector<2x8x8xf32> to vector<2x1x8xf32>
    %288 = vector.shape_cast %287 : vector<2x1x8xf32> to vector<2x8xf32>
    %289 = vector.extract_strided_slice %201 {offsets = [0, 1, 0], sizes = [2, 1, 8], strides = [1, 1, 1]} : vector<2x8x8xf32> to vector<2x1x8xf32>
    %290 = vector.shape_cast %289 : vector<2x1x8xf32> to vector<2x8xf32>
    %291 = vector.extract_strided_slice %201 {offsets = [0, 2, 0], sizes = [2, 1, 8], strides = [1, 1, 1]} : vector<2x8x8xf32> to vector<2x1x8xf32>
    %292 = vector.shape_cast %291 : vector<2x1x8xf32> to vector<2x8xf32>
    %293 = vector.extract_strided_slice %201 {offsets = [0, 3, 0], sizes = [2, 1, 8], strides = [1, 1, 1]} : vector<2x8x8xf32> to vector<2x1x8xf32>
    %294 = vector.shape_cast %293 : vector<2x1x8xf32> to vector<2x8xf32>
    %295 = vector.extract_strided_slice %201 {offsets = [0, 4, 0], sizes = [2, 1, 8], strides = [1, 1, 1]} : vector<2x8x8xf32> to vector<2x1x8xf32>
    %296 = vector.shape_cast %295 : vector<2x1x8xf32> to vector<2x8xf32>
    %297 = vector.extract_strided_slice %201 {offsets = [0, 5, 0], sizes = [2, 1, 8], strides = [1, 1, 1]} : vector<2x8x8xf32> to vector<2x1x8xf32>
    %298 = vector.shape_cast %297 : vector<2x1x8xf32> to vector<2x8xf32>
    %299 = vector.extract_strided_slice %201 {offsets = [0, 6, 0], sizes = [2, 1, 8], strides = [1, 1, 1]} : vector<2x8x8xf32> to vector<2x1x8xf32>
    %300 = vector.shape_cast %299 : vector<2x1x8xf32> to vector<2x8xf32>
    %301 = vector.extract_strided_slice %201 {offsets = [0, 7, 0], sizes = [2, 1, 8], strides = [1, 1, 1]} : vector<2x8x8xf32> to vector<2x1x8xf32>
    %302 = vector.shape_cast %301 : vector<2x1x8xf32> to vector<2x8xf32>
    %303 = tpu.concatenate %288, %290, %292, %294, %296, %298, %300, %302 in 1 : vector<2x8xf32>, vector<2x8xf32>, vector<2x8xf32>, vector<2x8xf32>, vector<2x8xf32>, vector<2x8xf32>, vector<2x8xf32>, vector<2x8xf32> -> vector<2x64xf32>
    %c0_114 = arith.constant 0 : index
    %c0_115 = arith.constant 0 : index
    %304 = vector.load %arg15[%c0_114, %c0_115] : memref<2x64xf32, #tpu.memory_space<vmem>>, vector<2x64xf32>
    tpu.vector_store %arg15[%c0_114, %c0_115], %303 {strides = array<i32>} : memref<2x64xf32, #tpu.memory_space<vmem>>, vector<2x64xf32>,
    return
  }
  func.func @transform_0(%arg0: i32) -> (i32, i32) {
    %c0_i32 = arith.constant 0 : i32
    %c0_i32_0 = arith.constant 0 : i32
    %c0_i32_1 = arith.constant 0 : i32
    return %c0_i32, %c0_i32_0 : i32, i32
  }
  func.func @transform_1(%arg0: i32) -> (i32, i32, i32) {
    %c0_i32 = arith.constant 0 : i32
    %c0_i32_0 = arith.constant 0 : i32
    %c0_i32_1 = arith.constant 0 : i32
    %c0_i32_2 = arith.constant 0 : i32
    return %c0_i32, %c0_i32_0, %c0_i32_1 : i32, i32, i32
  }
  func.func @transform_2(%arg0: i32) -> (i32, i32, i32) {
    %c0_i32 = arith.constant 0 : i32
    %c0_i32_0 = arith.constant 0 : i32
    %c0_i32_1 = arith.constant 0 : i32
    %c0_i32_2 = arith.constant 0 : i32
    return %c0_i32, %c0_i32_0, %c0_i32_1 : i32, i32, i32
  }
  func.func @transform_3(%arg0: i32) -> (i32, i32, i32) {
    %c0_i32 = arith.constant 0 : i32
    %c0_i32_0 = arith.constant 0 : i32
    %c0_i32_1 = arith.constant 0 : i32
    %c0_i32_2 = arith.constant 0 : i32
    return %c0_i32, %c0_i32_0, %c0_i32_1 : i32, i32, i32
  }
  func.func @transform_4(%arg0: i32) -> (i32, i32, i32) {
    %c0_i32 = arith.constant 0 : i32
    %c0_i32_0 = arith.constant 0 : i32
    %c0_i32_1 = arith.constant 0 : i32
    %c0_i32_2 = arith.constant 0 : i32
    return %c0_i32, %c0_i32_0, %c0_i32_1 : i32, i32, i32
  }
  func.func @transform_5(%arg0: i32) -> (i32, i32, i32) {
    %c0_i32 = arith.constant 0 : i32
    %c0_i32_0 = arith.constant 0 : i32
    %c0_i32_1 = arith.constant 0 : i32
    %c0_i32_2 = arith.constant 0 : i32
    return %c0_i32, %c0_i32_0, %c0_i32_1 : i32, i32, i32
  }
  func.func @transform_6(%arg0: i32) -> (i32, i32, i32) {
    %c0_i32 = arith.constant 0 : i32
    %c0_i32_0 = arith.constant 0 : i32
    %c0_i32_1 = arith.constant 0 : i32
    %c0_i32_2 = arith.constant 0 : i32
    return %c0_i32, %c0_i32_0, %c0_i32_1 : i32, i32, i32
  }
  func.func @transform_7(%arg0: i32) -> (i32, i32, i32) {
    %c0_i32 = arith.constant 0 : i32
    %c0_i32_0 = arith.constant 0 : i32
    %c0_i32_1 = arith.constant 0 : i32
    %c0_i32_2 = arith.constant 0 : i32
    return %c0_i32, %c0_i32_0, %c0_i32_1 : i32, i32, i32
  }
  func.func @transform_8(%arg0: i32) -> (i32, i32, i32) {
    %c0_i32 = arith.constant 0 : i32
    %c0_i32_0 = arith.constant 0 : i32
    %c0_i32_1 = arith.constant 0 : i32
    %c0_i32_2 = arith.constant 0 : i32
    return %c0_i32, %c0_i32_0, %c0_i32_1 : i32, i32, i32
  }
  func.func @transform_9(%arg0: i32) -> (i32, i32, i32) {
    %c0_i32 = arith.constant 0 : i32
    %c0_i32_0 = arith.constant 0 : i32
    %c0_i32_1 = arith.constant 0 : i32
    %c0_i32_2 = arith.constant 0 : i32
    return %c0_i32, %c0_i32_0, %c0_i32_1 : i32, i32, i32
  }
  func.func @transform_10(%arg0: i32) -> (i32, i32, i32) {
    %c0_i32 = arith.constant 0 : i32
    %c0_i32_0 = arith.constant 0 : i32
    %c0_i32_1 = arith.constant 0 : i32
    %c0_i32_2 = arith.constant 0 : i32
    return %c0_i32, %c0_i32_0, %c0_i32_1 : i32, i32, i32
  }
  func.func @transform_11(%arg0: i32) -> (i32, i32, i32) {
    %c0_i32 = arith.constant 0 : i32
    %c0_i32_0 = arith.constant 0 : i32
    %c0_i32_1 = arith.constant 0 : i32
    %c0_i32_2 = arith.constant 0 : i32
    return %c0_i32, %c0_i32_0, %c0_i32_1 : i32, i32, i32
  }
  func.func @transform_12(%arg0: i32) -> (i32, i32, i32) {
    %c0_i32 = arith.constant 0 : i32
    %c0_i32_0 = arith.constant 0 : i32
    %c0_i32_1 = arith.constant 0 : i32
    %c0_i32_2 = arith.constant 0 : i32
    return %c0_i32, %c0_i32_0, %c0_i32_1 : i32, i32, i32
  }
  func.func @transform_13(%arg0: i32) -> (i32, i32) {
    %c0_i32 = arith.constant 0 : i32
    %c0_i32_0 = arith.constant 0 : i32
    %c0_i32_1 = arith.constant 0 : i32
    return %c0_i32, %c0_i32_0 : i32, i32
  }
  func.func @transform_14(%arg0: i32) -> (i32, i32) {
    %c0_i32 = arith.constant 0 : i32
    %c0_i32_0 = arith.constant 0 : i32
    %c0_i32_1 = arith.constant 0 : i32
    return %c0_i32, %c0_i32_0 : i32, i32
  }
}

</mosaic_0001>

<llo_original>
// kernel: transformer_encoder.1
$region0: #{transformer_encoder.1}
  #allocation0 [shape = 'u32[]', space=smem, size = 0x4, offset = 0x4, fixed_abs, tag = 'smem constant byte address 0x4 - core index']
  #allocation1 [shape = 'u32[144,128]{1,0:T(1,128)}', space=vmem, size = 0x12000, scoped, tag = 'internal scratch']
  %s0 = inlined_call_operand.vmem [shape: f32[16,32], index: 0, kind: input, shape index: {}]
  %s1 = inlined_call_operand.vmem [shape: f32[2,32,96], index: 1, kind: input, shape index: {}]
  %s2 = inlined_call_operand.vmem [shape: f32[2,1,96], index: 2, kind: input, shape index: {}]
  %s3 = inlined_call_operand.vmem [shape: f32[2,32,32], index: 3, kind: input, shape index: {}]
  %s4 = inlined_call_operand.vmem [shape: f32[2,1,32], index: 4, kind: input, shape index: {}]
  %s5 = inlined_call_operand.vmem [shape: f32[2,32,64], index: 5, kind: input, shape index: {}]
  %s6 = inlined_call_operand.vmem [shape: f32[2,1,64], index: 6, kind: input, shape index: {}]
  %s7 = inlined_call_operand.vmem [shape: f32[2,64,32], index: 7, kind: input, shape index: {}]
  %s8 = inlined_call_operand.vmem [shape: f32[2,1,32], index: 8, kind: input, shape index: {}]
  %s9 = inlined_call_operand.vmem [shape: f32[2,1,32], index: 9, kind: input, shape index: {}]
  %s10 = inlined_call_operand.vmem [shape: f32[2,1,32], index: 10, kind: input, shape index: {}]
  %s11 = inlined_call_operand.vmem [shape: f32[2,1,32], index: 11, kind: input, shape index: {}]
  %s12 = inlined_call_operand.vmem [shape: f32[2,1,32], index: 12, kind: input, shape index: {}]
  %s13 = inlined_call_operand.vmem [shape: f32[16,32], index: 13, kind: output, shape index: {0}]
  %s14 = inlined_call_operand.vmem [shape: f32[2,64], index: 14, kind: output, shape index: {1}]
  %15 = xla_tuple %s13, %s14
  %s16 = sld [smem:[#allocation0]]
  $region70: #{transformer_encoder.1} parent=0
    _
  %s18 = ssub.s32 1, %s16
  %s19 = scalar_select 0, %s18, %s16
  // Predicated region
  $region2: #{transformer_encoder.1} parent=0 // pred_check
    _
  $region3: #{transformer_encoder.1} parent=0 // pred_check_branch
    %21 = sbr.rel (0) target = $region5
  $region4: #{transformer_encoder.1} parent=0 // pred_region
    _
  $region5: #{transformer_encoder.1} parent=0 // pred_fallthru
    _
  // Predicated region
  $region6: #{transformer_encoder.1} parent=0 // pred_check
    _
  $region7: #{transformer_encoder.1} parent=0 // pred_check_branch
    %23 = sbr.rel (0) target = $region9
  $region8: #{transformer_encoder.1} parent=0 // pred_region
    _
  $region9: #{transformer_encoder.1} parent=0 // pred_fallthru
    _
  // Predicated region
  $region10: #{transformer_encoder.1} parent=0 // pred_check
    _
  $region11: #{transformer_encoder.1} parent=0 // pred_check_branch
    %25 = sbr.rel (0) target = $region13
  $region12: #{transformer_encoder.1} parent=0 // pred_region
    _
  $region13: #{transformer_encoder.1} parent=0 // pred_fallthru
    _
  // Predicated region
  $region14: #{transformer_encoder.1} parent=0 // pred_check
    _
  $region15: #{transformer_encoder.1} parent=0 // pred_check_branch
    %27 = sbr.rel (0) target = $region17
  $region16: #{transformer_encoder.1} parent=0 // pred_region
    _
  $region17: #{transformer_encoder.1} parent=0 // pred_fallthru
    _
  // Predicated region
  $region18: #{transformer_encoder.1} parent=0 // pred_check
    _
  $region19: #{transformer_encoder.1} parent=0 // pred_check_branch
    %29 = sbr.rel (0) target = $region21
  $region20: #{transformer_encoder.1} parent=0 // pred_region
    _
  $region21: #{transformer_encoder.1} parent=0 // pred_fallthru
    _
  // Predicated region
  $region22: #{transformer_encoder.1} parent=0 // pred_check
    _
  $region23: #{transformer_encoder.1} parent=0 // pred_check_branch
    %31 = sbr.rel (0) target = $region25
  $region24: #{transformer_encoder.1} parent=0 // pred_region
    _
  $region25: #{transformer_encoder.1} parent=0 // pred_fallthru
    _
  // Predicated region
  $region26: #{transformer_encoder.1} parent=0 // pred_check
    _
  $region27: #{transformer_encoder.1} parent=0 // pred_check_branch
    %33 = sbr.rel (0) target = $region29
  $region28: #{transformer_encoder.1} parent=0 // pred_region
    _
  $region29: #{transformer_encoder.1} parent=0 // pred_fallthru
    _
  // Predicated region
  $region30: #{transformer_encoder.1} parent=0 // pred_check
    _
  $region31: #{transformer_encoder.1} parent=0 // pred_check_branch
    %35 = sbr.rel (0) target = $region33
  $region32: #{transformer_encoder.1} parent=0 // pred_region
    _
  $region33: #{transformer_encoder.1} parent=0 // pred_fallthru
    _
  // Predicated region
  $region34: #{transformer_encoder.1} parent=0 // pred_check
    _
  $region35: #{transformer_encoder.1} parent=0 // pred_check_branch
    %37 = sbr.rel (0) target = $region37
  $region36: #{transformer_encoder.1} parent=0 // pred_region
    _
  $region37: #{transformer_encoder.1} parent=0 // pred_fallthru
    _
  // Predicated region
  $region38: #{transformer_encoder.1} parent=0 // pred_check
    _
  $region39: #{transformer_encoder.1} parent=0 // pred_check_branch
    %39 = sbr.rel (0) target = $region41
  $region40: #{transformer_encoder.1} parent=0 // pred_region
    _
  $region41: #{transformer_encoder.1} parent=0 // pred_fallthru
    _
  // Predicated region
  $region42: #{transformer_encoder.1} parent=0 // pred_check
    _
  $region43: #{transformer_encoder.1} parent=0 // pred_check_branch
    %41 = sbr.rel (0) target = $region45
  $region44: #{transformer_encoder.1} parent=0 // pred_region
    _
  $region45: #{transformer_encoder.1} parent=0 // pred_fallthru
    _
  // Predicated region
  $region46: #{transformer_encoder.1} parent=0 // pred_check
    _
  $region47: #{transformer_encoder.1} parent=0 // pred_check_branch
    %43 = sbr.rel (0) target = $region49
  $region48: #{transformer_encoder.1} parent=0 // pred_region
    _
  $region49: #{transformer_encoder.1} parent=0 // pred_fallthru
    _
  // Predicated region
  $region50: #{transformer_encoder.1} parent=0 // pred_check
    _
  $region51: #{transformer_encoder.1} parent=0 // pred_check_branch
    %45 = sbr.rel (0) target = $region53
  $region52: #{transformer_encoder.1} parent=0 // pred_region
    _
  $region53: #{transformer_encoder.1} parent=0 // pred_fallthru
    _
  %v46 = vld [vmem:[%s0] sm:$0xff]
  %v47 = vld [vmem:[%s0 + $0x8] sm:$0xff]
  %v48 = vld [vmem:[%s1] sm:$0xff]
  %v49 = vld [vmem:[%s1 + $0x8] sm:$0xff]
  %v50 = vld [vmem:[%s1 + $0x10] sm:$0xff]
  %v51 = vld [vmem:[%s1 + $0x18] sm:$0xff]
  %v52 = vld [vmem:[%s2] sm:$0x1]
  %v54 = vlaneseq
  %v55 = vshrl.u32 %v54, 7
  %v56 = vsub.s32 0, %v55
  %v57 = vrot.slane %v52, %v56
  %vm59 = vcmask 261120
  %v61 = vsel %vm59, %v46, 0
  %v64 = vsel %vm59, %v47, 0
  %66 = vmatprep.subr.mxu0 0.0
  %67 = vmatpush1.msra.mxu0 0.0
  %68 = vmatprep.subr.mxu0 0.0
  %69 = vmatpush1.msra.mxu0 0.0
  %70 = vmatprep.subr.mxu0 0.0
  %71 = vmatpush1.msra.mxu0 0.0
  %72 = vmatprep.subr.mxu0 0.0
  %73 = vmatpush1.msra.mxu0 0.0
  %74 = vmatprep.subr.mxu0 0.0
  %75 = vmatpush1.msra.mxu0 0.0
  %76 = vmatprep.subr.mxu0 0.0
  %77 = vmatpush1.msra.mxu0 0.0
  %78 = vmatprep.subr.mxu0 0.0
  %79 = vmatpush1.msra.mxu0 0.0
  %80 = vmatprep.subr.mxu0 0.0
  %81 = vmatpush1.msra.mxu0 0.0
  %82 = vmatprep.subr.mxu0 0.0
  %83 = vmatpush1.msra.mxu0 0.0
  %84 = vmatprep.subr.mxu0 0.0
  %85 = vmatpush1.msra.mxu0 0.0
  %86 = vmatprep.subr.mxu0 0.0
  %87 = vmatpush1.msra.mxu0 0.0
  %88 = vmatprep.subr.mxu0 0.0
  %89 = vmatpush1.msra.mxu0 0.0
  %90 = vmatprep.subr.mxu0 0.0
  %91 = vmatpush1.msra.mxu0 %v51
  %92 = vmatprep.subr.mxu0 0.0
  %93 = vmatpush1.msra.mxu0 %v50
  %94 = vmatprep.subr.mxu0 0.0
  %95 = vmatpush1.msra.mxu0 %v49
  %96 = vmatprep.subr.mxu0 0.0
  %97 = vmatpush1.msra.mxu0 %v48
  %98 = vmatprep.subr.mxu0 0.0
  %99 = vmatpush2.msra.mxu0 0.0
  %100 = vmatprep.subr.mxu0 0.0
  %101 = vmatpush2.msra.mxu0 0.0
  %102 = vmatprep.subr.mxu0 0.0
  %103 = vmatpush2.msra.mxu0 0.0
  %104 = vmatprep.subr.mxu0 0.0
  %105 = vmatpush2.msra.mxu0 0.0
  %106 = vmatprep.subr.mxu0 0.0
  %107 = vmatpush2.msra.mxu0 0.0
  %108 = vmatprep.subr.mxu0 0.0
  %109 = vmatpush2.msra.mxu0 0.0
  %110 = vmatprep.subr.mxu0 0.0
  %111 = vmatpush2.msra.mxu0 0.0
  %112 = vmatprep.subr.mxu0 0.0
  %113 = vmatpush2.msra.mxu0 0.0
  %114 = vmatprep.subr.mxu0 0.0
  %115 = vmatpush2.msra.mxu0 0.0
  %116 = vmatprep.subr.mxu0 0.0
  %117 = vmatpush2.msra.mxu0 0.0
  %118 = vmatprep.subr.mxu0 0.0
  %119 = vmatpush2.msra.mxu0 0.0
  %120 = vmatprep.subr.mxu0 0.0
  %121 = vmatpush2.msra.mxu0 0.0
  %122 = vmatprep.subr.mxu0 0.0
  %123 = vmatpush2.msra.mxu0 0.0
  %124 = vmatprep.subr.mxu0 0.0
  %125 = vmatpush2.msra.mxu0 0.0
  %126 = vmatprep.subr.mxu0 0.0
  %127 = vmatpush2.msra.mxu0 0.0
  %128 = vmatprep.subr.mxu0 0.0
  %129 = vmatpush2.msra.mxu0 0.0
  %130 = vmatprep.mubr.f32.mxu0 0.0
  %131 = vmatmul.mubr.f32.gmra.mxu0 %v61
  %v132 = vpop.f32.mrf.mxu0
  %v133 = vadd.f32 %v57, %v132
  %v134 = vpop.f32.mrf.mxu0
  %135 = vmatprep.mubr.f32.mxu0 0.0
  %136 = vmatmul.mubr.f32.gmra.mxu0 %v64
  %v137 = vpop.f32.mrf.mxu0
  %v138 = vadd.f32 %v57, %v137
  %v139 = vpop.f32.mrf.mxu0
  %140 = vdwg.mxu0
  %143 = vrot.lane.b32.xlu0 %v133, 120
  %v144 = vpop.permute.xlu0 %143
  %145 = vrot.lane.b32.xlu0 %v138, 120
  %v146 = vpop.permute.xlu0 %145
  %147 = vrot.lane.b32.xlu0 %v133, 112
  %v148 = vpop.permute.xlu0 %147
  %149 = vrot.lane.b32.xlu0 %v138, 112
  %v150 = vpop.permute.xlu0 %149
  %151 = vrot.lane.b32.xlu0 %v133, 104
  %v152 = vpop.permute.xlu0 %151
  %153 = vrot.lane.b32.xlu0 %v138, 104
  %v154 = vpop.permute.xlu0 %153
  %155 = vrot.lane.b32.xlu0 %v133, 96
  %v156 = vpop.permute.xlu0 %155
  %vm157 = vcmask 64512
  %v158 = vsel %vm157, %v133, 0
  %v160 = vsel %vm157, %v156, 0
  %162 = vmatprep.subr.mxu0 0.0
  %163 = vmatpush1.xpose.msra.mxu0 0.0
  %164 = vmatprep.subr.mxu0 0.0
  %165 = vmatpush1.xpose.msra.mxu0 0.0
  %166 = vmatprep.subr.mxu0 0.0
  %167 = vmatpush1.xpose.msra.mxu0 0.0
  %168 = vmatprep.subr.mxu0 0.0
  %169 = vmatpush1.xpose.msra.mxu0 0.0
  %170 = vmatprep.subr.mxu0 0.0
  %171 = vmatpush1.xpose.msra.mxu0 0.0
  %172 = vmatprep.subr.mxu0 0.0
  %173 = vmatpush1.xpose.msra.mxu0 0.0
  %174 = vmatprep.subr.mxu0 0.0
  %175 = vmatpush1.xpose.msra.mxu0 0.0
  %176 = vmatprep.subr.mxu0 0.0
  %177 = vmatpush1.xpose.msra.mxu0 0.0
  %178 = vmatprep.subr.mxu0 0.0
  %179 = vmatpush1.xpose.msra.mxu0 0.0
  %180 = vmatprep.subr.mxu0 0.0
  %181 = vmatpush1.xpose.msra.mxu0 0.0
  %182 = vmatprep.subr.mxu0 0.0
  %183 = vmatpush1.xpose.msra.mxu0 0.0
  %184 = vmatprep.subr.mxu0 0.0
  %185 = vmatpush1.xpose.msra.mxu0 0.0
  %186 = vmatprep.subr.mxu0 0.0
  %187 = vmatpush1.xpose.msra.mxu0 0.0
  %188 = vmatprep.subr.mxu0 0.0
  %189 = vmatpush1.xpose.msra.mxu0 0.0
  %190 = vmatprep.subr.mxu0 0.0
  %191 = vmatpush1.xpose.msra.mxu0 0.0
  %192 = vmatprep.subr.mxu0 0.0
  %193 = vmatpush1.xpose.msra.mxu0 %v160
  %194 = vmatprep.subr.mxu0 0.0
  %195 = vmatpush2.xpose.msra.mxu0 0.0
  %196 = vmatprep.subr.mxu0 0.0
  %197 = vmatpush2.xpose.msra.mxu0 0.0
  %198 = vmatprep.subr.mxu0 0.0
  %199 = vmatpush2.xpose.msra.mxu0 0.0
  %200 = vmatprep.subr.mxu0 0.0
  %201 = vmatpush2.xpose.msra.mxu0 0.0
  %202 = vmatprep.subr.mxu0 0.0
  %203 = vmatpush2.xpose.msra.mxu0 0.0
  %204 = vmatprep.subr.mxu0 0.0
  %205 = vmatpush2.xpose.msra.mxu0 0.0
  %206 = vmatprep.subr.mxu0 0.0
  %207 = vmatpush2.xpose.msra.mxu0 0.0
  %208 = vmatprep.subr.mxu0 0.0
  %209 = vmatpush2.xpose.msra.mxu0 0.0
  %210 = vmatprep.subr.mxu0 0.0
  %211 = vmatpush2.xpose.msra.mxu0 0.0
  %212 = vmatprep.subr.mxu0 0.0
  %213 = vmatpush2.xpose.msra.mxu0 0.0
  %214 = vmatprep.subr.mxu0 0.0
  %215 = vmatpush2.xpose.msra.mxu0 0.0
  %216 = vmatprep.subr.mxu0 0.0
  %217 = vmatpush2.xpose.msra.mxu0 0.0
  %218 = vmatprep.subr.mxu0 0.0
  %219 = vmatpush2.xpose.msra.mxu0 0.0
  %220 = vmatprep.subr.mxu0 0.0
  %221 = vmatpush2.xpose.msra.mxu0 0.0
  %222 = vmatprep.subr.mxu0 0.0
  %223 = vmatpush2.xpose.msra.mxu0 0.0
  %224 = vmatprep.subr.mxu0 0.0
  %225 = vmatpush2.xpose.msra.mxu0 0.0
  %226 = vmatprep.mubr.f32.mxu0 0.0
  %227 = vmatmul.mubr.f32.gmra.mxu0 %v158
  %v228 = vpop.f32.mrf.mxu0
  %v229 = vadd.f32 0.0, %v228
  %v230 = vpop.f32.mrf.mxu0
  %231 = vdwg.mxu0
  %232 = vrot.lane.b32.xlu0 %v138, 96
  %v233 = vpop.permute.xlu0 %232
  %v234 = vsel %vm157, %v138, 0
  %v236 = vsel %vm157, %v233, 0
  %238 = vmatprep.subr.mxu0 0.0
  %239 = vmatpush1.xpose.msra.mxu0 0.0
  %240 = vmatprep.subr.mxu0 0.0
  %241 = vmatpush1.xpose.msra.mxu0 0.0
  %242 = vmatprep.subr.mxu0 0.0
  %243 = vmatpush1.xpose.msra.mxu0 0.0
  %244 = vmatprep.subr.mxu0 0.0
  %245 = vmatpush1.xpose.msra.mxu0 0.0
  %246 = vmatprep.subr.mxu0 0.0
  %247 = vmatpush1.xpose.msra.mxu0 0.0
  %248 = vmatprep.subr.mxu0 0.0
  %249 = vmatpush1.xpose.msra.mxu0 0.0
  %250 = vmatprep.subr.mxu0 0.0
  %251 = vmatpush1.xpose.msra.mxu0 0.0
  %252 = vmatprep.subr.mxu0 0.0
  %253 = vmatpush1.xpose.msra.mxu0 0.0
  %254 = vmatprep.subr.mxu0 0.0
  %255 = vmatpush1.xpose.msra.mxu0 0.0
  %256 = vmatprep.subr.mxu0 0.0
  %257 = vmatpush1.xpose.msra.mxu0 0.0
  %258 = vmatprep.subr.mxu0 0.0
  %259 = vmatpush1.xpose.msra.mxu0 0.0
  %260 = vmatprep.subr.mxu0 0.0
  %261 = vmatpush1.xpose.msra.mxu0 0.0
  %262 = vmatprep.subr.mxu0 0.0
  %263 = vmatpush1.xpose.msra.mxu0 0.0
  %264 = vmatprep.subr.mxu0 0.0
  %265 = vmatpush1.xpose.msra.mxu0 0.0
  %266 = vmatprep.subr.mxu0 0.0
  %267 = vmatpush1.xpose.msra.mxu0 0.0
  %268 = vmatprep.subr.mxu0 0.0
  %269 = vmatpush1.xpose.msra.mxu0 %v236
  %270 = vmatprep.subr.mxu0 0.0
  %271 = vmatpush2.xpose.msra.mxu0 0.0
  %272 = vmatprep.subr.mxu0 0.0
  %273 = vmatpush2.xpose.msra.mxu0 0.0
  %274 = vmatprep.subr.mxu0 0.0
  %275 = vmatpush2.xpose.msra.mxu0 0.0
  %276 = vmatprep.subr.mxu0 0.0
  %277 = vmatpush2.xpose.msra.mxu0 0.0
  %278 = vmatprep.subr.mxu0 0.0
  %279 = vmatpush2.xpose.msra.mxu0 0.0
  %280 = vmatprep.subr.mxu0 0.0
  %281 = vmatpush2.xpose.msra.mxu0 0.0
  %282 = vmatprep.subr.mxu0 0.0
  %283 = vmatpush2.xpose.msra.mxu0 0.0
  %284 = vmatprep.subr.mxu0 0.0
  %285 = vmatpush2.xpose.msra.mxu0 0.0
  %286 = vmatprep.subr.mxu0 0.0
  %287 = vmatpush2.xpose.msra.mxu0 0.0
  %288 = vmatprep.subr.mxu0 0.0
  %289 = vmatpush2.xpose.msra.mxu0 0.0
  %290 = vmatprep.subr.mxu0 0.0
  %291 = vmatpush2.xpose.msra.mxu0 0.0
  %292 = vmatprep.subr.mxu0 0.0
  %293 = vmatpush2.xpose.msra.mxu0 0.0
  %294 = vmatprep.subr.mxu0 0.0
  %295 = vmatpush2.xpose.msra.mxu0 0.0
  %296 = vmatprep.subr.mxu0 0.0
  %297 = vmatpush2.xpose.msra.mxu0 0.0
  %298 = vmatprep.subr.mxu0 0.0
  %299 = vmatpush2.xpose.msra.mxu0 0.0
  %300 = vmatprep.subr.mxu0 0.0
  %301 = vmatpush2.xpose.msra.mxu0 0.0
  %302 = vmatprep.mubr.f32.mxu0 0.0
  %303 = vmatmul.mubr.f32.gmra.mxu0 %v234
  %v304 = vpop.f32.mrf.mxu0
  %v305 = vadd.f32 0.0, %v304
  %v306 = vpop.f32.mrf.mxu0
  %307 = vdwg.mxu0
  %308 = vrot.lane.b32.xlu0 %v144, 96
  %v309 = vpop.permute.xlu0 %308
  %v310 = vsel %vm157, %v144, 0
  %v312 = vsel %vm157, %v309, 0
  %314 = vmatprep.subr.mxu0 0.0
  %315 = vmatpush1.xpose.msra.mxu0 0.0
  %316 = vmatprep.subr.mxu0 0.0
  %317 = vmatpush1.xpose.msra.mxu0 0.0
  %318 = vmatprep.subr.mxu0 0.0
  %319 = vmatpush1.xpose.msra.mxu0 0.0
  %320 = vmatprep.subr.mxu0 0.0
  %321 = vmatpush1.xpose.msra.mxu0 0.0
  %322 = vmatprep.subr.mxu0 0.0
  %323 = vmatpush1.xpose.msra.mxu0 0.0
  %324 = vmatprep.subr.mxu0 0.0
  %325 = vmatpush1.xpose.msra.mxu0 0.0
  %326 = vmatprep.subr.mxu0 0.0
  %327 = vmatpush1.xpose.msra.mxu0 0.0
  %328 = vmatprep.subr.mxu0 0.0
  %329 = vmatpush1.xpose.msra.mxu0 0.0
  %330 = vmatprep.subr.mxu0 0.0
  %331 = vmatpush1.xpose.msra.mxu0 0.0
  %332 = vmatprep.subr.mxu0 0.0
  %333 = vmatpush1.xpose.msra.mxu0 0.0
  %334 = vmatprep.subr.mxu0 0.0
  %335 = vmatpush1.xpose.msra.mxu0 0.0
  %336 = vmatprep.subr.mxu0 0.0
  %337 = vmatpush1.xpose.msra.mxu0 0.0
  %338 = vmatprep.subr.mxu0 0.0
  %339 = vmatpush1.xpose.msra.mxu0 0.0
  %340 = vmatprep.subr.mxu0 0.0
  %341 = vmatpush1.xpose.msra.mxu0 0.0
  %342 = vmatprep.subr.mxu0 0.0
  %343 = vmatpush1.xpose.msra.mxu0 0.0
  %344 = vmatprep.subr.mxu0 0.0
  %345 = vmatpush1.xpose.msra.mxu0 %v312
  %346 = vmatprep.subr.mxu0 0.0
  %347 = vmatpush2.xpose.msra.mxu0 0.0
  %348 = vmatprep.subr.mxu0 0.0
  %349 = vmatpush2.xpose.msra.mxu0 0.0
  %350 = vmatprep.subr.mxu0 0.0
  %351 = vmatpush2.xpose.msra.mxu0 0.0
  %352 = vmatprep.subr.mxu0 0.0
  %353 = vmatpush2.xpose.msra.mxu0 0.0
  %354 = vmatprep.subr.mxu0 0.0
  %355 = vmatpush2.xpose.msra.mxu0 0.0
  %356 = vmatprep.subr.mxu0 0.0
  %357 = vmatpush2.xpose.msra.mxu0 0.0
  %358 = vmatprep.subr.mxu0 0.0
  %359 = vmatpush2.xpose.msra.mxu0 0.0
  %360 = vmatprep.subr.mxu0 0.0
  %361 = vmatpush2.xpose.msra.mxu0 0.0
  %362 = vmatprep.subr.mxu0 0.0
  %363 = vmatpush2.xpose.msra.mxu0 0.0
  %364 = vmatprep.subr.mxu0 0.0
  %365 = vmatpush2.xpose.msra.mxu0 0.0
  %366 = vmatprep.subr.mxu0 0.0
  %367 = vmatpush2.xpose.msra.mxu0 0.0
  %368 = vmatprep.subr.mxu0 0.0
  %369 = vmatpush2.xpose.msra.mxu0 0.0
  %370 = vmatprep.subr.mxu0 0.0
  %371 = vmatpush2.xpose.msra.mxu0 0.0
  %372 = vmatprep.subr.mxu0 0.0
  %373 = vmatpush2.xpose.msra.mxu0 0.0
  %374 = vmatprep.subr.mxu0 0.0
  %375 = vmatpush2.xpose.msra.mxu0 0.0
  %376 = vmatprep.subr.mxu0 0.0
  %377 = vmatpush2.xpose.msra.mxu0 0.0
  %378 = vmatprep.mubr.f32.mxu0 0.0
  %379 = vmatmul.mubr.f32.gmra.mxu0 %v310
  %v380 = vpop.f32.mrf.mxu0
  %v381 = vadd.f32 0.0, %v380
  %v382 = vpop.f32.mrf.mxu0
  %383 = vdwg.mxu0
  %384 = vrot.lane.b32.xlu0 %v146, 96
  %v385 = vpop.permute.xlu0 %384
  %v386 = vsel %vm157, %v146, 0
  %v388 = vsel %vm157, %v385, 0
  %390 = vmatprep.subr.mxu0 0.0
  %391 = vmatpush1.xpose.msra.mxu0 0.0
  %392 = vmatprep.subr.mxu0 0.0
  %393 = vmatpush1.xpose.msra.mxu0 0.0
  %394 = vmatprep.subr.mxu0 0.0
  %395 = vmatpush1.xpose.msra.mxu0 0.0
  %396 = vmatprep.subr.mxu0 0.0
  %397 = vmatpush1.xpose.msra.mxu0 0.0
  %398 = vmatprep.subr.mxu0 0.0
  %399 = vmatpush1.xpose.msra.mxu0 0.0
  %400 = vmatprep.subr.mxu0 0.0
  %401 = vmatpush1.xpose.msra.mxu0 0.0
  %402 = vmatprep.subr.mxu0 0.0
  %403 = vmatpush1.xpose.msra.mxu0 0.0
  %404 = vmatprep.subr.mxu0 0.0
  %405 = vmatpush1.xpose.msra.mxu0 0.0
  %406 = vmatprep.subr.mxu0 0.0
  %407 = vmatpush1.xpose.msra.mxu0 0.0
  %408 = vmatprep.subr.mxu0 0.0
  %409 = vmatpush1.xpose.msra.mxu0 0.0
  %410 = vmatprep.subr.mxu0 0.0
  %411 = vmatpush1.xpose.msra.mxu0 0.0
  %412 = vmatprep.subr.mxu0 0.0
  %413 = vmatpush1.xpose.msra.mxu0 0.0
  %414 = vmatprep.subr.mxu0 0.0
  %415 = vmatpush1.xpose.msra.mxu0 0.0
  %416 = vmatprep.subr.mxu0 0.0
  %417 = vmatpush1.xpose.msra.mxu0 0.0
  %418 = vmatprep.subr.mxu0 0.0
  %419 = vmatpush1.xpose.msra.mxu0 0.0
  %420 = vmatprep.subr.mxu0 0.0
  %421 = vmatpush1.xpose.msra.mxu0 %v388
  %422 = vmatprep.subr.mxu0 0.0
  %423 = vmatpush2.xpose.msra.mxu0 0.0
  %424 = vmatprep.subr.mxu0 0.0
  %425 = vmatpush2.xpose.msra.mxu0 0.0
  %426 = vmatprep.subr.mxu0 0.0
  %427 = vmatpush2.xpose.msra.mxu0 0.0
  %428 = vmatprep.subr.mxu0 0.0
  %429 = vmatpush2.xpose.msra.mxu0 0.0
  %430 = vmatprep.subr.mxu0 0.0
  %431 = vmatpush2.xpose.msra.mxu0 0.0
  %432 = vmatprep.subr.mxu0 0.0
  %433 = vmatpush2.xpose.msra.mxu0 0.0
  %434 = vmatprep.subr.mxu0 0.0
  %435 = vmatpush2.xpose.msra.mxu0 0.0
  %436 = vmatprep.subr.mxu0 0.0
  %437 = vmatpush2.xpose.msra.mxu0 0.0
  %438 = vmatprep.subr.mxu0 0.0
  %439 = vmatpush2.xpose.msra.mxu0 0.0
  %440 = vmatprep.subr.mxu0 0.0
  %441 = vmatpush2.xpose.msra.mxu0 0.0
  %442 = vmatprep.subr.mxu0 0.0
  %443 = vmatpush2.xpose.msra.mxu0 0.0
  %444 = vmatprep.subr.mxu0 0.0
  %445 = vmatpush2.xpose.msra.mxu0 0.0
  %446 = vmatprep.subr.mxu0 0.0
  %447 = vmatpush2.xpose.msra.mxu0 0.0
  %448 = vmatprep.subr.mxu0 0.0
  %449 = vmatpush2.xpose.msra.mxu0 0.0
  %450 = vmatprep.subr.mxu0 0.0
  %451 = vmatpush2.xpose.msra.mxu0 0.0
  %452 = vmatprep.subr.mxu0 0.0
  %453 = vmatpush2.xpose.msra.mxu0 0.0
  %454 = vmatprep.mubr.f32.mxu0 0.0
  %455 = vmatmul.mubr.f32.gmra.mxu0 %v386
  %v456 = vpop.f32.mrf.mxu0
  %v457 = vadd.f32 0.0, %v456
  %v458 = vpop.f32.mrf.mxu0
  %459 = vdwg.mxu0
  %460 = vrot.lane.b32.xlu0 %v148, 96
  %v461 = vpop.permute.xlu0 %460
  %v462 = vsel %vm157, %v148, 0
  %v464 = vsel %vm157, %v461, 0
  %466 = vmatprep.subr.mxu0 0.0
  %467 = vmatpush1.xpose.msra.mxu0 0.0
  %468 = vmatprep.subr.mxu0 0.0
  %469 = vmatpush1.xpose.msra.mxu0 0.0
  %470 = vmatprep.subr.mxu0 0.0
  %471 = vmatpush1.xpose.msra.mxu0 0.0
  %472 = vmatprep.subr.mxu0 0.0
  %473 = vmatpush1.xpose.msra.mxu0 0.0
  %474 = vmatprep.subr.mxu0 0.0
  %475 = vmatpush1.xpose.msra.mxu0 0.0
  %476 = vmatprep.subr.mxu0 0.0
  %477 = vmatpush1.xpose.msra.mxu0 0.0
  %478 = vmatprep.subr.mxu0 0.0
  %479 = vmatpush1.xpose.msra.mxu0 0.0
  %480 = vmatprep.subr.mxu0 0.0
  %481 = vmatpush1.xpose.msra.mxu0 0.0
  %482 = vmatprep.subr.mxu0 0.0
  %483 = vmatpush1.xpose.msra.mxu0 0.0
  %484 = vmatprep.subr.mxu0 0.0
  %485 = vmatpush1.xpose.msra.mxu0 0.0
  %486 = vmatprep.subr.mxu0 0.0
  %487 = vmatpush1.xpose.msra.mxu0 0.0
  %488 = vmatprep.subr.mxu0 0.0
  %489 = vmatpush1.xpose.msra.mxu0 0.0
  %490 = vmatprep.subr.mxu0 0.0
  %491 = vmatpush1.xpose.msra.mxu0 0.0
  %492 = vmatprep.subr.mxu0 0.0
  %493 = vmatpush1.xpose.msra.mxu0 0.0
  %494 = vmatprep.subr.mxu0 0.0
  %495 = vmatpush1.xpose.msra.mxu0 0.0
  %496 = vmatprep.subr.mxu0 0.0
  %497 = vmatpush1.xpose.msra.mxu0 %v464
  %498 = vmatprep.subr.mxu0 0.0
  %499 = vmatpush2.xpose.msra.mxu0 0.0
  %500 = vmatprep.subr.mxu0 0.0
  %501 = vmatpush2.xpose.msra.mxu0 0.0
  %502 = vmatprep.subr.mxu0 0.0
  %503 = vmatpush2.xpose.msra.mxu0 0.0
  %504 = vmatprep.subr.mxu0 0.0
  %505 = vmatpush2.xpose.msra.mxu0 0.0
  %506 = vmatprep.subr.mxu0 0.0
  %507 = vmatpush2.xpose.msra.mxu0 0.0
  %508 = vmatprep.subr.mxu0 0.0
  %509 = vmatpush2.xpose.msra.mxu0 0.0
  %510 = vmatprep.subr.mxu0 0.0
  %511 = vmatpush2.xpose.msra.mxu0 0.0
  %512 = vmatprep.subr.mxu0 0.0
  %513 = vmatpush2.xpose.msra.mxu0 0.0
  %514 = vmatprep.subr.mxu0 0.0
  %515 = vmatpush2.xpose.msra.mxu0 0.0
  %516 = vmatprep.subr.mxu0 0.0
  %517 = vmatpush2.xpose.msra.mxu0 0.0
  %518 = vmatprep.subr.mxu0 0.0
  %519 = vmatpush2.xpose.msra.mxu0 0.0
  %520 = vmatprep.subr.mxu0 0.0
  %521 = vmatpush2.xpose.msra.mxu0 0.0
  %522 = vmatprep.subr.mxu0 0.0
  %523 = vmatpush2.xpose.msra.mxu0 0.0
  %524 = vmatprep.subr.mxu0 0.0
  %525 = vmatpush2.xpose.msra.mxu0 0.0
  %526 = vmatprep.subr.mxu0 0.0
  %527 = vmatpush2.xpose.msra.mxu0 0.0
  %528 = vmatprep.subr.mxu0 0.0
  %529 = vmatpush2.xpose.msra.mxu0 0.0
  %530 = vmatprep.mubr.f32.mxu0 0.0
  %531 = vmatmul.mubr.f32.gmra.mxu0 %v462
  %v532 = vpop.f32.mrf.mxu0
  %v533 = vadd.f32 0.0, %v532
  %v534 = vpop.f32.mrf.mxu0
  %535 = vdwg.mxu0
  %536 = vrot.lane.b32.xlu0 %v150, 96
  %v537 = vpop.permute.xlu0 %536
  %v538 = vsel %vm157, %v150, 0
  %v540 = vsel %vm157, %v537, 0
  %542 = vmatprep.subr.mxu0 0.0
  %543 = vmatpush1.xpose.msra.mxu0 0.0
  %544 = vmatprep.subr.mxu0 0.0
  %545 = vmatpush1.xpose.msra.mxu0 0.0
  %546 = vmatprep.subr.mxu0 0.0
  %547 = vmatpush1.xpose.msra.mxu0 0.0
  %548 = vmatprep.subr.mxu0 0.0
  %549 = vmatpush1.xpose.msra.mxu0 0.0
  %550 = vmatprep.subr.mxu0 0.0
  %551 = vmatpush1.xpose.msra.mxu0 0.0
  %552 = vmatprep.subr.mxu0 0.0
  %553 = vmatpush1.xpose.msra.mxu0 0.0
  %554 = vmatprep.subr.mxu0 0.0
  %555 = vmatpush1.xpose.msra.mxu0 0.0
  %556 = vmatprep.subr.mxu0 0.0
  %557 = vmatpush1.xpose.msra.mxu0 0.0
  %558 = vmatprep.subr.mxu0 0.0
  %559 = vmatpush1.xpose.msra.mxu0 0.0
  %560 = vmatprep.subr.mxu0 0.0
  %561 = vmatpush1.xpose.msra.mxu0 0.0
  %562 = vmatprep.subr.mxu0 0.0
  %563 = vmatpush1.xpose.msra.mxu0 0.0
  %564 = vmatprep.subr.mxu0 0.0
  %565 = vmatpush1.xpose.msra.mxu0 0.0
  %566 = vmatprep.subr.mxu0 0.0
  %567 = vmatpush1.xpose.msra.mxu0 0.0
  %568 = vmatprep.subr.mxu0 0.0
  %569 = vmatpush1.xpose.msra.mxu0 0.0
  %570 = vmatprep.subr.mxu0 0.0
  %571 = vmatpush1.xpose.msra.mxu0 0.0
  %572 = vmatprep.subr.mxu0 0.0
  %573 = vmatpush1.xpose.msra.mxu0 %v540
  %574 = vmatprep.subr.mxu0 0.0
  %575 = vmatpush2.xpose.msra.mxu0 0.0
  %576 = vmatprep.subr.mxu0 0.0
  %577 = vmatpush2.xpose.msra.mxu0 0.0
  %578 = vmatprep.subr.mxu0 0.0
  %579 = vmatpush2.xpose.msra.mxu0 0.0
  %580 = vmatprep.subr.mxu0 0.0
  %581 = vmatpush2.xpose.msra.mxu0 0.0
  %582 = vmatprep.subr.mxu0 0.0
  %583 = vmatpush2.xpose.msra.mxu0 0.0
  %584 = vmatprep.subr.mxu0 0.0
  %585 = vmatpush2.xpose.msra.mxu0 0.0
  %586 = vmatprep.subr.mxu0 0.0
  %587 = vmatpush2.xpose.msra.mxu0 0.0
  %588 = vmatprep.subr.mxu0 0.0
  %589 = vmatpush2.xpose.msra.mxu0 0.0
  %590 = vmatprep.subr.mxu0 0.0
  %591 = vmatpush2.xpose.msra.mxu0 0.0
  %592 = vmatprep.subr.mxu0 0.0
  %593 = vmatpush2.xpose.msra.mxu0 0.0
  %594 = vmatprep.subr.mxu0 0.0
  %595 = vmatpush2.xpose.msra.mxu0 0.0
  %596 = vmatprep.subr.mxu0 0.0
  %597 = vmatpush2.xpose.msra.mxu0 0.0
  %598 = vmatprep.subr.mxu0 0.0
  %599 = vmatpush2.xpose.msra.mxu0 0.0
  %600 = vmatprep.subr.mxu0 0.0
  %601 = vmatpush2.xpose.msra.mxu0 0.0
  %602 = vmatprep.subr.mxu0 0.0
  %603 = vmatpush2.xpose.msra.mxu0 0.0
  %604 = vmatprep.subr.mxu0 0.0
  %605 = vmatpush2.xpose.msra.mxu0 0.0
  %606 = vmatprep.mubr.f32.mxu0 0.0
  %607 = vmatmul.mubr.f32.gmra.mxu0 %v538
  %v608 = vpop.f32.mrf.mxu0
  %v609 = vadd.f32 0.0, %v608
  %v610 = vpop.f32.mrf.mxu0
  %611 = vdwg.mxu0
  %612 = vrot.lane.b32.xlu0 %v152, 96
  %v613 = vpop.permute.xlu0 %612
  %v614 = vsel %vm157, %v152, 0
  %v616 = vsel %vm157, %v613, 0
  %618 = vmatprep.subr.mxu0 0.0
  %619 = vmatpush1.xpose.msra.mxu0 0.0
  %620 = vmatprep.subr.mxu0 0.0
  %621 = vmatpush1.xpose.msra.mxu0 0.0
  %622 = vmatprep.subr.mxu0 0.0
  %623 = vmatpush1.xpose.msra.mxu0 0.0
  %624 = vmatprep.subr.mxu0 0.0
  %625 = vmatpush1.xpose.msra.mxu0 0.0
  %626 = vmatprep.subr.mxu0 0.0
  %627 = vmatpush1.xpose.msra.mxu0 0.0
  %628 = vmatprep.subr.mxu0 0.0
  %629 = vmatpush1.xpose.msra.mxu0 0.0
  %630 = vmatprep.subr.mxu0 0.0
  %631 = vmatpush1.xpose.msra.mxu0 0.0
  %632 = vmatprep.subr.mxu0 0.0
  %633 = vmatpush1.xpose.msra.mxu0 0.0
  %634 = vmatprep.subr.mxu0 0.0
  %635 = vmatpush1.xpose.msra.mxu0 0.0
  %636 = vmatprep.subr.mxu0 0.0
  %637 = vmatpush1.xpose.msra.mxu0 0.0
  %638 = vmatprep.subr.mxu0 0.0
  %639 = vmatpush1.xpose.msra.mxu0 0.0
  %640 = vmatprep.subr.mxu0 0.0
  %641 = vmatpush1.xpose.msra.mxu0 0.0
  %642 = vmatprep.subr.mxu0 0.0
  %643 = vmatpush1.xpose.msra.mxu0 0.0
  %644 = vmatprep.subr.mxu0 0.0
  %645 = vmatpush1.xpose.msra.mxu0 0.0
  %646 = vmatprep.subr.mxu0 0.0
  %647 = vmatpush1.xpose.msra.mxu0 0.0
  %648 = vmatprep.subr.mxu0 0.0
  %649 = vmatpush1.xpose.msra.mxu0 %v616
  %650 = vmatprep.subr.mxu0 0.0
  %651 = vmatpush2.xpose.msra.mxu0 0.0
  %652 = vmatprep.subr.mxu0 0.0
  %653 = vmatpush2.xpose.msra.mxu0 0.0
  %654 = vmatprep.subr.mxu0 0.0
  %655 = vmatpush2.xpose.msra.mxu0 0.0
  %656 = vmatprep.subr.mxu0 0.0
  %657 = vmatpush2.xpose.msra.mxu0 0.0
  %658 = vmatprep.subr.mxu0 0.0
  %659 = vmatpush2.xpose.msra.mxu0 0.0
  %660 = vmatprep.subr.mxu0 0.0
  %661 = vmatpush2.xpose.msra.mxu0 0.0
  %662 = vmatprep.subr.mxu0 0.0
  %663 = vmatpush2.xpose.msra.mxu0 0.0
  %664 = vmatprep.subr.mxu0 0.0
  %665 = vmatpush2.xpose.msra.mxu0 0.0
  %666 = vmatprep.subr.mxu0 0.0
  %667 = vmatpush2.xpose.msra.mxu0 0.0
  %668 = vmatprep.subr.mxu0 0.0
  %669 = vmatpush2.xpose.msra.mxu0 0.0
  %670 = vmatprep.subr.mxu0 0.0
  %671 = vmatpush2.xpose.msra.mxu0 0.0
  %672 = vmatprep.subr.mxu0 0.0
  %673 = vmatpush2.xpose.msra.mxu0 0.0
  %674 = vmatprep.subr.mxu0 0.0
  %675 = vmatpush2.xpose.msra.mxu0 0.0
  %676 = vmatprep.subr.mxu0 0.0
  %677 = vmatpush2.xpose.msra.mxu0 0.0
  %678 = vmatprep.subr.mxu0 0.0
  %679 = vmatpush2.xpose.msra.mxu0 0.0
  %680 = vmatprep.subr.mxu0 0.0
  %681 = vmatpush2.xpose.msra.mxu0 0.0
  %682 = vmatprep.mubr.f32.mxu0 0.0
  %683 = vmatmul.mubr.f32.gmra.mxu0 %v614
  %v684 = vpop.f32.mrf.mxu0
  %v685 = vadd.f32 0.0, %v684
  %v686 = vpop.f32.mrf.mxu0
  %687 = vdwg.mxu0
  %688 = vrot.lane.b32.xlu0 %v154, 96
  %v689 = vpop.permute.xlu0 %688
  %v690 = vsel %vm157, %v154, 0
  %v692 = vsel %vm157, %v689, 0
  %694 = vmatprep.subr.mxu0 0.0
  %695 = vmatpush1.xpose.msra.mxu0 0.0
  %696 = vmatprep.subr.mxu0 0.0
  %697 = vmatpush1.xpose.msra.mxu0 0.0
  %698 = vmatprep.subr.mxu0 0.0
  %699 = vmatpush1.xpose.msra.mxu0 0.0
  %700 = vmatprep.subr.mxu0 0.0
  %701 = vmatpush1.xpose.msra.mxu0 0.0
  %702 = vmatprep.subr.mxu0 0.0
  %703 = vmatpush1.xpose.msra.mxu0 0.0
  %704 = vmatprep.subr.mxu0 0.0
  %705 = vmatpush1.xpose.msra.mxu0 0.0
  %706 = vmatprep.subr.mxu0 0.0
  %707 = vmatpush1.xpose.msra.mxu0 0.0
  %708 = vmatprep.subr.mxu0 0.0
  %709 = vmatpush1.xpose.msra.mxu0 0.0
  %710 = vmatprep.subr.mxu0 0.0
  %711 = vmatpush1.xpose.msra.mxu0 0.0
  %712 = vmatprep.subr.mxu0 0.0
  %713 = vmatpush1.xpose.msra.mxu0 0.0
  %714 = vmatprep.subr.mxu0 0.0
  %715 = vmatpush1.xpose.msra.mxu0 0.0
  %716 = vmatprep.subr.mxu0 0.0
  %717 = vmatpush1.xpose.msra.mxu0 0.0
  %718 = vmatprep.subr.mxu0 0.0
  %719 = vmatpush1.xpose.msra.mxu0 0.0
  %720 = vmatprep.subr.mxu0 0.0
  %721 = vmatpush1.xpose.msra.mxu0 0.0
  %722 = vmatprep.subr.mxu0 0.0
  %723 = vmatpush1.xpose.msra.mxu0 0.0
  %724 = vmatprep.subr.mxu0 0.0
  %725 = vmatpush1.xpose.msra.mxu0 %v692
  %726 = vmatprep.subr.mxu0 0.0
  %727 = vmatpush2.xpose.msra.mxu0 0.0
  %728 = vmatprep.subr.mxu0 0.0
  %729 = vmatpush2.xpose.msra.mxu0 0.0
  %730 = vmatprep.subr.mxu0 0.0
  %731 = vmatpush2.xpose.msra.mxu0 0.0
  %732 = vmatprep.subr.mxu0 0.0
  %733 = vmatpush2.xpose.msra.mxu0 0.0
  %734 = vmatprep.subr.mxu0 0.0
  %735 = vmatpush2.xpose.msra.mxu0 0.0
  %736 = vmatprep.subr.mxu0 0.0
  %737 = vmatpush2.xpose.msra.mxu0 0.0
  %738 = vmatprep.subr.mxu0 0.0
  %739 = vmatpush2.xpose.msra.mxu0 0.0
  %740 = vmatprep.subr.mxu0 0.0
  %741 = vmatpush2.xpose.msra.mxu0 0.0
  %742 = vmatprep.subr.mxu0 0.0
  %743 = vmatpush2.xpose.msra.mxu0 0.0
  %744 = vmatprep.subr.mxu0 0.0
  %745 = vmatpush2.xpose.msra.mxu0 0.0
  %746 = vmatprep.subr.mxu0 0.0
  %747 = vmatpush2.xpose.msra.mxu0 0.0
  %748 = vmatprep.subr.mxu0 0.0
  %749 = vmatpush2.xpose.msra.mxu0 0.0
  %750 = vmatprep.subr.mxu0 0.0
  %751 = vmatpush2.xpose.msra.mxu0 0.0
  %752 = vmatprep.subr.mxu0 0.0
  %753 = vmatpush2.xpose.msra.mxu0 0.0
  %754 = vmatprep.subr.mxu0 0.0
  %755 = vmatpush2.xpose.msra.mxu0 0.0
  %756 = vmatprep.subr.mxu0 0.0
  %757 = vmatpush2.xpose.msra.mxu0 0.0
  %758 = vmatprep.mubr.f32.mxu0 0.0
  %759 = vmatmul.mubr.f32.gmra.mxu0 %v690
  %v760 = vpop.f32.mrf.mxu0
  %v761 = vadd.f32 0.0, %v760
  %v762 = vpop.f32.mrf.mxu0
  %763 = vdwg.mxu0
  %v764 = vsel %vm157, %v229, -inf
  %765 = vmax.xlane.f32.xlu0 %v764
  %v766 = vpop.xlane.xlu0 %765
  %v767 = vsel %vm157, %v305, -inf
  %768 = vmax.xlane.f32.xlu0 %v767
  %v769 = vpop.xlane.xlu0 %768
  %v770 = vsel %vm157, %v381, -inf
  %771 = vmax.xlane.f32.xlu0 %v770
  %v772 = vpop.xlane.xlu0 %771
  %v773 = vsel %vm157, %v457, -inf
  %774 = vmax.xlane.f32.xlu0 %v773
  %v775 = vpop.xlane.xlu0 %774
  %v776 = vsel %vm157, %v533, -inf
  %777 = vmax.xlane.f32.xlu0 %v776
  %v778 = vpop.xlane.xlu0 %777
  %v779 = vsel %vm157, %v609, -inf
  %780 = vmax.xlane.f32.xlu0 %v779
  %v781 = vpop.xlane.xlu0 %780
  %v782 = vsel %vm157, %v685, -inf
  %783 = vmax.xlane.f32.xlu0 %v782
  %v784 = vpop.xlane.xlu0 %783
  %v785 = vsel %vm157, %v761, -inf
  %786 = vmax.xlane.f32.xlu0 %v785
  %v787 = vpop.xlane.xlu0 %786
  %v788 = vsub.f32 %v229, %v766
  %v789 = vsub.f32 %v305, %v769
  %v790 = vsub.f32 %v381, %v772
  %v791 = vsub.f32 %v457, %v775
  %v792 = vsub.f32 %v533, %v778
  %v793 = vsub.f32 %v609, %v781
  %v794 = vsub.f32 %v685, %v784
  %v795 = vsub.f32 %v761, %v787
  %v796 = vmul.f32 %v788, 1.442695
  %v797 = vpow.pop %v796
  %v798 = vmul.f32 %v789, 1.442695
  %v799 = vpow.pop %v798
  %v800 = vmul.f32 %v790, 1.442695
  %v801 = vpow.pop %v800
  %v802 = vmul.f32 %v791, 1.442695
  %v803 = vpow.pop %v802
  %v804 = vmul.f32 %v792, 1.442695
  %v805 = vpow.pop %v804
  %v806 = vmul.f32 %v793, 1.442695
  %v807 = vpow.pop %v806
  %v808 = vmul.f32 %v794, 1.442695
  %v809 = vpow.pop %v808
  %v810 = vmul.f32 %v795, 1.442695
  %v811 = vpow.pop %v810
  %v812 = vsel %vm157, %v797, 0.0
  %813 = vadd.xlane.f32.xlu0 %v812
  %v814 = vpop.xlane.xlu0 %813
  %v815 = vsel %vm157, %v799, 0.0
  %816 = vadd.xlane.f32.xlu0 %v815
  %v817 = vpop.xlane.xlu0 %816
  %v818 = vsel %vm157, %v801, 0.0
  %819 = vadd.xlane.f32.xlu0 %v818
  %v820 = vpop.xlane.xlu0 %819
  %v821 = vsel %vm157, %v803, 0.0
  %822 = vadd.xlane.f32.xlu0 %v821
  %v823 = vpop.xlane.xlu0 %822
  %v824 = vsel %vm157, %v805, 0.0
  %825 = vadd.xlane.f32.xlu0 %v824
  %v826 = vpop.xlane.xlu0 %825
  %v827 = vsel %vm157, %v807, 0.0
  %828 = vadd.xlane.f32.xlu0 %v827
  %v829 = vpop.xlane.xlu0 %828
  %v830 = vsel %vm157, %v809, 0.0
  %831 = vadd.xlane.f32.xlu0 %v830
  %v832 = vpop.xlane.xlu0 %831
  %v833 = vsel %vm157, %v811, 0.0
  %834 = vadd.xlane.f32.xlu0 %v833
  %v835 = vpop.xlane.xlu0 %834
  %v836 = vrcp.pop %v814
  %v837 = vrcp.pop %v817
  %v838 = vrcp.pop %v820
  %v839 = vrcp.pop %v823
  %v840 = vrcp.pop %v826
  %v841 = vrcp.pop %v829
  %v842 = vrcp.pop %v832
  %v843 = vrcp.pop %v835
  %v844 = vmul.f32 %v797, %v836
  %v845 = vmul.f32 %v799, %v837
  %v846 = vmul.f32 %v801, %v838
  %v847 = vmul.f32 %v803, %v839
  %v848 = vmul.f32 %v805, %v840
  %v849 = vmul.f32 %v807, %v841
  %v850 = vmul.f32 %v809, %v842
  %v851 = vmul.f32 %v811, %v843
  %v852 = vadd.f32 %v844, %v846
  %v853 = vadd.f32 %v845, %v847
  %v854 = vadd.f32 %v852, %v848
  %v855 = vadd.f32 %v853, %v849
  %v856 = vadd.f32 %v854, %v850
  %v857 = vadd.f32 %v855, %v851
  %v858 = vmul.f32 %v856, 0.25
  %v859 = vmul.f32 %v857, 0.25
  %v860 = vadd.f32 %v858, 0.0
  %v861 = vadd.f32 %v859, 0.0
  %862 = vrot.lane.b32.xlu0 %v133, 64
  %v863 = vpop.permute.xlu0 %862
  %v866 = vsel %vm157, %v844, 0
  %868 = vmatprep.subr.mxu0 0.0
  %869 = vmatpush1.msra.mxu0 0.0
  %870 = vmatprep.subr.mxu0 0.0
  %871 = vmatpush1.msra.mxu0 0.0
  %872 = vmatprep.subr.mxu0 0.0
  %873 = vmatpush1.msra.mxu0 0.0
  %874 = vmatprep.subr.mxu0 0.0
  %875 = vmatpush1.msra.mxu0 0.0
  %876 = vmatprep.subr.mxu0 0.0
  %877 = vmatpush1.msra.mxu0 0.0
  %878 = vmatprep.subr.mxu0 0.0
  %879 = vmatpush1.msra.mxu0 0.0
  %880 = vmatprep.subr.mxu0 0.0
  %881 = vmatpush1.msra.mxu0 0.0
  %882 = vmatprep.subr.mxu0 0.0
  %883 = vmatpush1.msra.mxu0 0.0
  %884 = vmatprep.subr.mxu0 0.0
  %885 = vmatpush1.msra.mxu0 0.0
  %886 = vmatprep.subr.mxu0 0.0
  %887 = vmatpush1.msra.mxu0 0.0
  %888 = vmatprep.subr.mxu0 0.0
  %889 = vmatpush1.msra.mxu0 0.0
  %890 = vmatprep.subr.mxu0 0.0
  %891 = vmatpush1.msra.mxu0 0.0
  %892 = vmatprep.subr.mxu0 0.0
  %893 = vmatpush1.msra.mxu0 0.0
  %894 = vmatprep.subr.mxu0 0.0
  %895 = vmatpush1.msra.mxu0 0.0
  %896 = vmatprep.subr.mxu0 0.0
  %897 = vmatpush1.msra.mxu0 0.0
  %898 = vmatprep.subr.mxu0 0.0
  %899 = vmatpush1.msra.mxu0 %v863
  %900 = vmatprep.subr.mxu0 0.0
  %901 = vmatpush2.msra.mxu0 0.0
  %902 = vmatprep.subr.mxu0 0.0
  %903 = vmatpush2.msra.mxu0 0.0
  %904 = vmatprep.subr.mxu0 0.0
  %905 = vmatpush2.msra.mxu0 0.0
  %906 = vmatprep.subr.mxu0 0.0
  %907 = vmatpush2.msra.mxu0 0.0
  %908 = vmatprep.subr.mxu0 0.0
  %909 = vmatpush2.msra.mxu0 0.0
  %910 = vmatprep.subr.mxu0 0.0
  %911 = vmatpush2.msra.mxu0 0.0
  %912 = vmatprep.subr.mxu0 0.0
  %913 = vmatpush2.msra.mxu0 0.0
  %914 = vmatprep.subr.mxu0 0.0
  %915 = vmatpush2.msra.mxu0 0.0
  %916 = vmatprep.subr.mxu0 0.0
  %917 = vmatpush2.msra.mxu0 0.0
  %918 = vmatprep.subr.mxu0 0.0
  %919 = vmatpush2.msra.mxu0 0.0
  %920 = vmatprep.subr.mxu0 0.0
  %921 = vmatpush2.msra.mxu0 0.0
  %922 = vmatprep.subr.mxu0 0.0
  %923 = vmatpush2.msra.mxu0 0.0
  %924 = vmatprep.subr.mxu0 0.0
  %925 = vmatpush2.msra.mxu0 0.0
  %926 = vmatprep.subr.mxu0 0.0
  %927 = vmatpush2.msra.mxu0 0.0
  %928 = vmatprep.subr.mxu0 0.0
  %929 = vmatpush2.msra.mxu0 0.0
  %930 = vmatprep.subr.mxu0 0.0
  %931 = vmatpush2.msra.mxu0 0.0
  %932 = vmatprep.mubr.f32.mxu0 0.0
  %933 = vmatmul.mubr.f32.gmra.mxu0 %v866
  %v934 = vpop.f32.mrf.mxu0
  %v935 = vadd.f32 0.0, %v934
  %v936 = vpop.f32.mrf.mxu0
  %937 = vdwg.mxu0
  %938 = vrot.lane.b32.xlu0 %v138, 64
  %v939 = vpop.permute.xlu0 %938
  %v942 = vsel %vm157, %v845, 0
  %944 = vmatprep.subr.mxu0 0.0
  %945 = vmatpush1.msra.mxu0 0.0
  %946 = vmatprep.subr.mxu0 0.0
  %947 = vmatpush1.msra.mxu0 0.0
  %948 = vmatprep.subr.mxu0 0.0
  %949 = vmatpush1.msra.mxu0 0.0
  %950 = vmatprep.subr.mxu0 0.0
  %951 = vmatpush1.msra.mxu0 0.0
  %952 = vmatprep.subr.mxu0 0.0
  %953 = vmatpush1.msra.mxu0 0.0
  %954 = vmatprep.subr.mxu0 0.0
  %955 = vmatpush1.msra.mxu0 0.0
  %956 = vmatprep.subr.mxu0 0.0
  %957 = vmatpush1.msra.mxu0 0.0
  %958 = vmatprep.subr.mxu0 0.0
  %959 = vmatpush1.msra.mxu0 0.0
  %960 = vmatprep.subr.mxu0 0.0
  %961 = vmatpush1.msra.mxu0 0.0
  %962 = vmatprep.subr.mxu0 0.0
  %963 = vmatpush1.msra.mxu0 0.0
  %964 = vmatprep.subr.mxu0 0.0
  %965 = vmatpush1.msra.mxu0 0.0
  %966 = vmatprep.subr.mxu0 0.0
  %967 = vmatpush1.msra.mxu0 0.0
  %968 = vmatprep.subr.mxu0 0.0
  %969 = vmatpush1.msra.mxu0 0.0
  %970 = vmatprep.subr.mxu0 0.0
  %971 = vmatpush1.msra.mxu0 0.0
  %972 = vmatprep.subr.mxu0 0.0
  %973 = vmatpush1.msra.mxu0 0.0
  %974 = vmatprep.subr.mxu0 0.0
  %975 = vmatpush1.msra.mxu0 %v939
  %976 = vmatprep.subr.mxu0 0.0
  %977 = vmatpush2.msra.mxu0 0.0
  %978 = vmatprep.subr.mxu0 0.0
  %979 = vmatpush2.msra.mxu0 0.0
  %980 = vmatprep.subr.mxu0 0.0
  %981 = vmatpush2.msra.mxu0 0.0
  %982 = vmatprep.subr.mxu0 0.0
  %983 = vmatpush2.msra.mxu0 0.0
  %984 = vmatprep.subr.mxu0 0.0
  %985 = vmatpush2.msra.mxu0 0.0
  %986 = vmatprep.subr.mxu0 0.0
  %987 = vmatpush2.msra.mxu0 0.0
  %988 = vmatprep.subr.mxu0 0.0
  %989 = vmatpush2.msra.mxu0 0.0
  %990 = vmatprep.subr.mxu0 0.0
  %991 = vmatpush2.msra.mxu0 0.0
  %992 = vmatprep.subr.mxu0 0.0
  %993 = vmatpush2.msra.mxu0 0.0
  %994 = vmatprep.subr.mxu0 0.0
  %995 = vmatpush2.msra.mxu0 0.0
  %996 = vmatprep.subr.mxu0 0.0
  %997 = vmatpush2.msra.mxu0 0.0
  %998 = vmatprep.subr.mxu0 0.0
  %999 = vmatpush2.msra.mxu0 0.0
  %1000 = vmatprep.subr.mxu0 0.0
  %1001 = vmatpush2.msra.mxu0 0.0
  %1002 = vmatprep.subr.mxu0 0.0
  %1003 = vmatpush2.msra.mxu0 0.0
  %1004 = vmatprep.subr.mxu0 0.0
  %1005 = vmatpush2.msra.mxu0 0.0
  %1006 = vmatprep.subr.mxu0 0.0
  %1007 = vmatpush2.msra.mxu0 0.0
  %1008 = vmatprep.mubr.f32.mxu0 0.0
  %1009 = vmatmul.mubr.f32.gmra.mxu0 %v942
  %v1010 = vpop.f32.mrf.mxu0
  %v1011 = vadd.f32 0.0, %v1010
  %v1012 = vpop.f32.mrf.mxu0
  %1013 = vdwg.mxu0
  %1014 = vrot.lane.b32.xlu0 %v144, 64
  %v1015 = vpop.permute.xlu0 %1014
  %v1018 = vsel %vm157, %v846, 0
  %1020 = vmatprep.subr.mxu0 0.0
  %1021 = vmatpush1.msra.mxu0 0.0
  %1022 = vmatprep.subr.mxu0 0.0
  %1023 = vmatpush1.msra.mxu0 0.0
  %1024 = vmatprep.subr.mxu0 0.0
  %1025 = vmatpush1.msra.mxu0 0.0
  %1026 = vmatprep.subr.mxu0 0.0
  %1027 = vmatpush1.msra.mxu0 0.0
  %1028 = vmatprep.subr.mxu0 0.0
  %1029 = vmatpush1.msra.mxu0 0.0
  %1030 = vmatprep.subr.mxu0 0.0
  %1031 = vmatpush1.msra.mxu0 0.0
  %1032 = vmatprep.subr.mxu0 0.0
  %1033 = vmatpush1.msra.mxu0 0.0
  %1034 = vmatprep.subr.mxu0 0.0
  %1035 = vmatpush1.msra.mxu0 0.0
  %1036 = vmatprep.subr.mxu0 0.0
  %1037 = vmatpush1.msra.mxu0 0.0
  %1038 = vmatprep.subr.mxu0 0.0
  %1039 = vmatpush1.msra.mxu0 0.0
  %1040 = vmatprep.subr.mxu0 0.0
  %1041 = vmatpush1.msra.mxu0 0.0
  %1042 = vmatprep.subr.mxu0 0.0
  %1043 = vmatpush1.msra.mxu0 0.0
  %1044 = vmatprep.subr.mxu0 0.0
  %1045 = vmatpush1.msra.mxu0 0.0
  %1046 = vmatprep.subr.mxu0 0.0
  %1047 = vmatpush1.msra.mxu0 0.0
  %1048 = vmatprep.subr.mxu0 0.0
  %1049 = vmatpush1.msra.mxu0 0.0
  %1050 = vmatprep.subr.mxu0 0.0
  %1051 = vmatpush1.msra.mxu0 %v1015
  %1052 = vmatprep.subr.mxu0 0.0
  %1053 = vmatpush2.msra.mxu0 0.0
  %1054 = vmatprep.subr.mxu0 0.0
  %1055 = vmatpush2.msra.mxu0 0.0
  %1056 = vmatprep.subr.mxu0 0.0
  %1057 = vmatpush2.msra.mxu0 0.0
  %1058 = vmatprep.subr.mxu0 0.0
  %1059 = vmatpush2.msra.mxu0 0.0
  %1060 = vmatprep.subr.mxu0 0.0
  %1061 = vmatpush2.msra.mxu0 0.0
  %1062 = vmatprep.subr.mxu0 0.0
  %1063 = vmatpush2.msra.mxu0 0.0
  %1064 = vmatprep.subr.mxu0 0.0
  %1065 = vmatpush2.msra.mxu0 0.0
  %1066 = vmatprep.subr.mxu0 0.0
  %1067 = vmatpush2.msra.mxu0 0.0
  %1068 = vmatprep.subr.mxu0 0.0
  %1069 = vmatpush2.msra.mxu0 0.0
  %1070 = vmatprep.subr.mxu0 0.0
  %1071 = vmatpush2.msra.mxu0 0.0
  %1072 = vmatprep.subr.mxu0 0.0
  %1073 = vmatpush2.msra.mxu0 0.0
  %1074 = vmatprep.subr.mxu0 0.0
  %1075 = vmatpush2.msra.mxu0 0.0
  %1076 = vmatprep.subr.mxu0 0.0
  %1077 = vmatpush2.msra.mxu0 0.0
  %1078 = vmatprep.subr.mxu0 0.0
  %1079 = vmatpush2.msra.mxu0 0.0
  %1080 = vmatprep.subr.mxu0 0.0
  %1081 = vmatpush2.msra.mxu0 0.0
  %1082 = vmatprep.subr.mxu0 0.0
  %1083 = vmatpush2.msra.mxu0 0.0
  %1084 = vmatprep.mubr.f32.mxu0 0.0
  %1085 = vmatmul.mubr.f32.gmra.mxu0 %v1018
  %v1086 = vpop.f32.mrf.mxu0
  %v1087 = vadd.f32 0.0, %v1086
  %v1088 = vpop.f32.mrf.mxu0
  %1089 = vdwg.mxu0
  %1090 = vrot.lane.b32.xlu0 %v146, 64
  %v1091 = vpop.permute.xlu0 %1090
  %v1094 = vsel %vm157, %v847, 0
  %1096 = vmatprep.subr.mxu0 0.0
  %1097 = vmatpush1.msra.mxu0 0.0
  %1098 = vmatprep.subr.mxu0 0.0
  %1099 = vmatpush1.msra.mxu0 0.0
  %1100 = vmatprep.subr.mxu0 0.0
  %1101 = vmatpush1.msra.mxu0 0.0
  %1102 = vmatprep.subr.mxu0 0.0
  %1103 = vmatpush1.msra.mxu0 0.0
  %1104 = vmatprep.subr.mxu0 0.0
  %1105 = vmatpush1.msra.mxu0 0.0
  %1106 = vmatprep.subr.mxu0 0.0
  %1107 = vmatpush1.msra.mxu0 0.0
  %1108 = vmatprep.subr.mxu0 0.0
  %1109 = vmatpush1.msra.mxu0 0.0
  %1110 = vmatprep.subr.mxu0 0.0
  %1111 = vmatpush1.msra.mxu0 0.0
  %1112 = vmatprep.subr.mxu0 0.0
  %1113 = vmatpush1.msra.mxu0 0.0
  %1114 = vmatprep.subr.mxu0 0.0
  %1115 = vmatpush1.msra.mxu0 0.0
  %1116 = vmatprep.subr.mxu0 0.0
  %1117 = vmatpush1.msra.mxu0 0.0
  %1118 = vmatprep.subr.mxu0 0.0
  %1119 = vmatpush1.msra.mxu0 0.0
  %1120 = vmatprep.subr.mxu0 0.0
  %1121 = vmatpush1.msra.mxu0 0.0
  %1122 = vmatprep.subr.mxu0 0.0
  %1123 = vmatpush1.msra.mxu0 0.0
  %1124 = vmatprep.subr.mxu0 0.0
  %1125 = vmatpush1.msra.mxu0 0.0
  %1126 = vmatprep.subr.mxu0 0.0
  %1127 = vmatpush1.msra.mxu0 %v1091
  %1128 = vmatprep.subr.mxu0 0.0
  %1129 = vmatpush2.msra.mxu0 0.0
  %1130 = vmatprep.subr.mxu0 0.0
  %1131 = vmatpush2.msra.mxu0 0.0
  %1132 = vmatprep.subr.mxu0 0.0
  %1133 = vmatpush2.msra.mxu0 0.0
  %1134 = vmatprep.subr.mxu0 0.0
  %1135 = vmatpush2.msra.mxu0 0.0
  %1136 = vmatprep.subr.mxu0 0.0
  %1137 = vmatpush2.msra.mxu0 0.0
  %1138 = vmatprep.subr.mxu0 0.0
  %1139 = vmatpush2.msra.mxu0 0.0
  %1140 = vmatprep.subr.mxu0 0.0
  %1141 = vmatpush2.msra.mxu0 0.0
  %1142 = vmatprep.subr.mxu0 0.0
  %1143 = vmatpush2.msra.mxu0 0.0
  %1144 = vmatprep.subr.mxu0 0.0
  %1145 = vmatpush2.msra.mxu0 0.0
  %1146 = vmatprep.subr.mxu0 0.0
  %1147 = vmatpush2.msra.mxu0 0.0
  %1148 = vmatprep.subr.mxu0 0.0
  %1149 = vmatpush2.msra.mxu0 0.0
  %1150 = vmatprep.subr.mxu0 0.0
  %1151 = vmatpush2.msra.mxu0 0.0
  %1152 = vmatprep.subr.mxu0 0.0
  %1153 = vmatpush2.msra.mxu0 0.0
  %1154 = vmatprep.subr.mxu0 0.0
  %1155 = vmatpush2.msra.mxu0 0.0
  %1156 = vmatprep.subr.mxu0 0.0
  %1157 = vmatpush2.msra.mxu0 0.0
  %1158 = vmatprep.subr.mxu0 0.0
  %1159 = vmatpush2.msra.mxu0 0.0
  %1160 = vmatprep.mubr.f32.mxu0 0.0
  %1161 = vmatmul.mubr.f32.gmra.mxu0 %v1094
  %v1162 = vpop.f32.mrf.mxu0
  %v1163 = vadd.f32 0.0, %v1162
  %v1164 = vpop.f32.mrf.mxu0
  %1165 = vdwg.mxu0
  %1166 = vrot.lane.b32.xlu0 %v148, 64
  %v1167 = vpop.permute.xlu0 %1166
  %v1170 = vsel %vm157, %v848, 0
  %1172 = vmatprep.subr.mxu0 0.0
  %1173 = vmatpush1.msra.mxu0 0.0
  %1174 = vmatprep.subr.mxu0 0.0
  %1175 = vmatpush1.msra.mxu0 0.0
  %1176 = vmatprep.subr.mxu0 0.0
  %1177 = vmatpush1.msra.mxu0 0.0
  %1178 = vmatprep.subr.mxu0 0.0
  %1179 = vmatpush1.msra.mxu0 0.0
  %1180 = vmatprep.subr.mxu0 0.0
  %1181 = vmatpush1.msra.mxu0 0.0
  %1182 = vmatprep.subr.mxu0 0.0
  %1183 = vmatpush1.msra.mxu0 0.0
  %1184 = vmatprep.subr.mxu0 0.0
  %1185 = vmatpush1.msra.mxu0 0.0
  %1186 = vmatprep.subr.mxu0 0.0
  %1187 = vmatpush1.msra.mxu0 0.0
  %1188 = vmatprep.subr.mxu0 0.0
  %1189 = vmatpush1.msra.mxu0 0.0
  %1190 = vmatprep.subr.mxu0 0.0
  %1191 = vmatpush1.msra.mxu0 0.0
  %1192 = vmatprep.subr.mxu0 0.0
  %1193 = vmatpush1.msra.mxu0 0.0
  %1194 = vmatprep.subr.mxu0 0.0
  %1195 = vmatpush1.msra.mxu0 0.0
  %1196 = vmatprep.subr.mxu0 0.0
  %1197 = vmatpush1.msra.mxu0 0.0
  %1198 = vmatprep.subr.mxu0 0.0
  %1199 = vmatpush1.msra.mxu0 0.0
  %1200 = vmatprep.subr.mxu0 0.0
  %1201 = vmatpush1.msra.mxu0 0.0
  %1202 = vmatprep.subr.mxu0 0.0
  %1203 = vmatpush1.msra.mxu0 %v1167
  %1204 = vmatprep.subr.mxu0 0.0
  %1205 = vmatpush2.msra.mxu0 0.0
  %1206 = vmatprep.subr.mxu0 0.0
  %1207 = vmatpush2.msra.mxu0 0.0
  %1208 = vmatprep.subr.mxu0 0.0
  %1209 = vmatpush2.msra.mxu0 0.0
  %1210 = vmatprep.subr.mxu0 0.0
  %1211 = vmatpush2.msra.mxu0 0.0
  %1212 = vmatprep.subr.mxu0 0.0
  %1213 = vmatpush2.msra.mxu0 0.0
  %1214 = vmatprep.subr.mxu0 0.0
  %1215 = vmatpush2.msra.mxu0 0.0
  %1216 = vmatprep.subr.mxu0 0.0
  %1217 = vmatpush2.msra.mxu0 0.0
  %1218 = vmatprep.subr.mxu0 0.0
  %1219 = vmatpush2.msra.mxu0 0.0
  %1220 = vmatprep.subr.mxu0 0.0
  %1221 = vmatpush2.msra.mxu0 0.0
  %1222 = vmatprep.subr.mxu0 0.0
  %1223 = vmatpush2.msra.mxu0 0.0
  %1224 = vmatprep.subr.mxu0 0.0
  %1225 = vmatpush2.msra.mxu0 0.0
  %1226 = vmatprep.subr.mxu0 0.0
  %1227 = vmatpush2.msra.mxu0 0.0
  %1228 = vmatprep.subr.mxu0 0.0
  %1229 = vmatpush2.msra.mxu0 0.0
  %1230 = vmatprep.subr.mxu0 0.0
  %1231 = vmatpush2.msra.mxu0 0.0
  %1232 = vmatprep.subr.mxu0 0.0
  %1233 = vmatpush2.msra.mxu0 0.0
  %1234 = vmatprep.subr.mxu0 0.0
  %1235 = vmatpush2.msra.mxu0 0.0
  %1236 = vmatprep.mubr.f32.mxu0 0.0
  %1237 = vmatmul.mubr.f32.gmra.mxu0 %v1170
  %v1238 = vpop.f32.mrf.mxu0
  %v1239 = vadd.f32 0.0, %v1238
  %v1240 = vpop.f32.mrf.mxu0
  %1241 = vdwg.mxu0
  %1242 = vrot.lane.b32.xlu0 %v150, 64
  %v1243 = vpop.permute.xlu0 %1242
  %v1246 = vsel %vm157, %v849, 0
  %1248 = vmatprep.subr.mxu0 0.0
  %1249 = vmatpush1.msra.mxu0 0.0
  %1250 = vmatprep.subr.mxu0 0.0
  %1251 = vmatpush1.msra.mxu0 0.0
  %1252 = vmatprep.subr.mxu0 0.0
  %1253 = vmatpush1.msra.mxu0 0.0
  %1254 = vmatprep.subr.mxu0 0.0
  %1255 = vmatpush1.msra.mxu0 0.0
  %1256 = vmatprep.subr.mxu0 0.0
  %1257 = vmatpush1.msra.mxu0 0.0
  %1258 = vmatprep.subr.mxu0 0.0
  %1259 = vmatpush1.msra.mxu0 0.0
  %1260 = vmatprep.subr.mxu0 0.0
  %1261 = vmatpush1.msra.mxu0 0.0
  %1262 = vmatprep.subr.mxu0 0.0
  %1263 = vmatpush1.msra.mxu0 0.0
  %1264 = vmatprep.subr.mxu0 0.0
  %1265 = vmatpush1.msra.mxu0 0.0
  %1266 = vmatprep.subr.mxu0 0.0
  %1267 = vmatpush1.msra.mxu0 0.0
  %1268 = vmatprep.subr.mxu0 0.0
  %1269 = vmatpush1.msra.mxu0 0.0
  %1270 = vmatprep.subr.mxu0 0.0
  %1271 = vmatpush1.msra.mxu0 0.0
  %1272 = vmatprep.subr.mxu0 0.0
  %1273 = vmatpush1.msra.mxu0 0.0
  %1274 = vmatprep.subr.mxu0 0.0
  %1275 = vmatpush1.msra.mxu0 0.0
  %1276 = vmatprep.subr.mxu0 0.0
  %1277 = vmatpush1.msra.mxu0 0.0
  %1278 = vmatprep.subr.mxu0 0.0
  %1279 = vmatpush1.msra.mxu0 %v1243
  %1280 = vmatprep.subr.mxu0 0.0
  %1281 = vmatpush2.msra.mxu0 0.0
  %1282 = vmatprep.subr.mxu0 0.0
  %1283 = vmatpush2.msra.mxu0 0.0
  %1284 = vmatprep.subr.mxu0 0.0
  %1285 = vmatpush2.msra.mxu0 0.0
  %1286 = vmatprep.subr.mxu0 0.0
  %1287 = vmatpush2.msra.mxu0 0.0
  %1288 = vmatprep.subr.mxu0 0.0
  %1289 = vmatpush2.msra.mxu0 0.0
  %1290 = vmatprep.subr.mxu0 0.0
  %1291 = vmatpush2.msra.mxu0 0.0
  %1292 = vmatprep.subr.mxu0 0.0
  %1293 = vmatpush2.msra.mxu0 0.0
  %1294 = vmatprep.subr.mxu0 0.0
  %1295 = vmatpush2.msra.mxu0 0.0
  %1296 = vmatprep.subr.mxu0 0.0
  %1297 = vmatpush2.msra.mxu0 0.0
  %1298 = vmatprep.subr.mxu0 0.0
  %1299 = vmatpush2.msra.mxu0 0.0
  %1300 = vmatprep.subr.mxu0 0.0
  %1301 = vmatpush2.msra.mxu0 0.0
  %1302 = vmatprep.subr.mxu0 0.0
  %1303 = vmatpush2.msra.mxu0 0.0
  %1304 = vmatprep.subr.mxu0 0.0
  %1305 = vmatpush2.msra.mxu0 0.0
  %1306 = vmatprep.subr.mxu0 0.0
  %1307 = vmatpush2.msra.mxu0 0.0
  %1308 = vmatprep.subr.mxu0 0.0
  %1309 = vmatpush2.msra.mxu0 0.0
  %1310 = vmatprep.subr.mxu0 0.0
  %1311 = vmatpush2.msra.mxu0 0.0
  %1312 = vmatprep.mubr.f32.mxu0 0.0
  %1313 = vmatmul.mubr.f32.gmra.mxu0 %v1246
  %v1314 = vpop.f32.mrf.mxu0
  %v1315 = vadd.f32 0.0, %v1314
  %v1316 = vpop.f32.mrf.mxu0
  %1317 = vdwg.mxu0
  %1318 = vrot.lane.b32.xlu0 %v152, 64
  %v1319 = vpop.permute.xlu0 %1318
  %v1322 = vsel %vm157, %v850, 0
  %1324 = vmatprep.subr.mxu0 0.0
  %1325 = vmatpush1.msra.mxu0 0.0
  %1326 = vmatprep.subr.mxu0 0.0
  %1327 = vmatpush1.msra.mxu0 0.0
  %1328 = vmatprep.subr.mxu0 0.0
  %1329 = vmatpush1.msra.mxu0 0.0
  %1330 = vmatprep.subr.mxu0 0.0
  %1331 = vmatpush1.msra.mxu0 0.0
  %1332 = vmatprep.subr.mxu0 0.0
  %1333 = vmatpush1.msra.mxu0 0.0
  %1334 = vmatprep.subr.mxu0 0.0
  %1335 = vmatpush1.msra.mxu0 0.0
  %1336 = vmatprep.subr.mxu0 0.0
  %1337 = vmatpush1.msra.mxu0 0.0
  %1338 = vmatprep.subr.mxu0 0.0
  %1339 = vmatpush1.msra.mxu0 0.0
  %1340 = vmatprep.subr.mxu0 0.0
  %1341 = vmatpush1.msra.mxu0 0.0
  %1342 = vmatprep.subr.mxu0 0.0
  %1343 = vmatpush1.msra.mxu0 0.0
  %1344 = vmatprep.subr.mxu0 0.0
  %1345 = vmatpush1.msra.mxu0 0.0
  %1346 = vmatprep.subr.mxu0 0.0
  %1347 = vmatpush1.msra.mxu0 0.0
  %1348 = vmatprep.subr.mxu0 0.0
  %1349 = vmatpush1.msra.mxu0 0.0
  %1350 = vmatprep.subr.mxu0 0.0
  %1351 = vmatpush1.msra.mxu0 0.0
  %1352 = vmatprep.subr.mxu0 0.0
  %1353 = vmatpush1.msra.mxu0 0.0
  %1354 = vmatprep.subr.mxu0 0.0
  %1355 = vmatpush1.msra.mxu0 %v1319
  %1356 = vmatprep.subr.mxu0 0.0
  %1357 = vmatpush2.msra.mxu0 0.0
  %1358 = vmatprep.subr.mxu0 0.0
  %1359 = vmatpush2.msra.mxu0 0.0
  %1360 = vmatprep.subr.mxu0 0.0
  %1361 = vmatpush2.msra.mxu0 0.0
  %1362 = vmatprep.subr.mxu0 0.0
  %1363 = vmatpush2.msra.mxu0 0.0
  %1364 = vmatprep.subr.mxu0 0.0
  %1365 = vmatpush2.msra.mxu0 0.0
  %1366 = vmatprep.subr.mxu0 0.0
  %1367 = vmatpush2.msra.mxu0 0.0
  %1368 = vmatprep.subr.mxu0 0.0
  %1369 = vmatpush2.msra.mxu0 0.0
  %1370 = vmatprep.subr.mxu0 0.0
  %1371 = vmatpush2.msra.mxu0 0.0
  %1372 = vmatprep.subr.mxu0 0.0
  %1373 = vmatpush2.msra.mxu0 0.0
  %1374 = vmatprep.subr.mxu0 0.0
  %1375 = vmatpush2.msra.mxu0 0.0
  %1376 = vmatprep.subr.mxu0 0.0
  %1377 = vmatpush2.msra.mxu0 0.0
  %1378 = vmatprep.subr.mxu0 0.0
  %1379 = vmatpush2.msra.mxu0 0.0
  %1380 = vmatprep.subr.mxu0 0.0
  %1381 = vmatpush2.msra.mxu0 0.0
  %1382 = vmatprep.subr.mxu0 0.0
  %1383 = vmatpush2.msra.mxu0 0.0
  %1384 = vmatprep.subr.mxu0 0.0
  %1385 = vmatpush2.msra.mxu0 0.0
  %1386 = vmatprep.subr.mxu0 0.0
  %1387 = vmatpush2.msra.mxu0 0.0
  %1388 = vmatprep.mubr.f32.mxu0 0.0
  %1389 = vmatmul.mubr.f32.gmra.mxu0 %v1322
  %v1390 = vpop.f32.mrf.mxu0
  %v1391 = vadd.f32 0.0, %v1390
  %v1392 = vpop.f32.mrf.mxu0
  %1393 = vdwg.mxu0
  %1394 = vrot.lane.b32.xlu0 %v154, 64
  %v1395 = vpop.permute.xlu0 %1394
  %v1398 = vsel %vm157, %v851, 0
  %1400 = vmatprep.subr.mxu0 0.0
  %1401 = vmatpush1.msra.mxu0 0.0
  %1402 = vmatprep.subr.mxu0 0.0
  %1403 = vmatpush1.msra.mxu0 0.0
  %1404 = vmatprep.subr.mxu0 0.0
  %1405 = vmatpush1.msra.mxu0 0.0
  %1406 = vmatprep.subr.mxu0 0.0
  %1407 = vmatpush1.msra.mxu0 0.0
  %1408 = vmatprep.subr.mxu0 0.0
  %1409 = vmatpush1.msra.mxu0 0.0
  %1410 = vmatprep.subr.mxu0 0.0
  %1411 = vmatpush1.msra.mxu0 0.0
  %1412 = vmatprep.subr.mxu0 0.0
  %1413 = vmatpush1.msra.mxu0 0.0
  %1414 = vmatprep.subr.mxu0 0.0
  %1415 = vmatpush1.msra.mxu0 0.0
  %1416 = vmatprep.subr.mxu0 0.0
  %1417 = vmatpush1.msra.mxu0 0.0
  %1418 = vmatprep.subr.mxu0 0.0
  %1419 = vmatpush1.msra.mxu0 0.0
  %1420 = vmatprep.subr.mxu0 0.0
  %1421 = vmatpush1.msra.mxu0 0.0
  %1422 = vmatprep.subr.mxu0 0.0
  %1423 = vmatpush1.msra.mxu0 0.0
  %1424 = vmatprep.subr.mxu0 0.0
  %1425 = vmatpush1.msra.mxu0 0.0
  %1426 = vmatprep.subr.mxu0 0.0
  %1427 = vmatpush1.msra.mxu0 0.0
  %1428 = vmatprep.subr.mxu0 0.0
  %1429 = vmatpush1.msra.mxu0 0.0
  %1430 = vmatprep.subr.mxu0 0.0
  %1431 = vmatpush1.msra.mxu0 %v1395
  %1432 = vmatprep.subr.mxu0 0.0
  %1433 = vmatpush2.msra.mxu0 0.0
  %1434 = vmatprep.subr.mxu0 0.0
  %1435 = vmatpush2.msra.mxu0 0.0
  %1436 = vmatprep.subr.mxu0 0.0
  %1437 = vmatpush2.msra.mxu0 0.0
  %1438 = vmatprep.subr.mxu0 0.0
  %1439 = vmatpush2.msra.mxu0 0.0
  %1440 = vmatprep.subr.mxu0 0.0
  %1441 = vmatpush2.msra.mxu0 0.0
  %1442 = vmatprep.subr.mxu0 0.0
  %1443 = vmatpush2.msra.mxu0 0.0
  %1444 = vmatprep.subr.mxu0 0.0
  %1445 = vmatpush2.msra.mxu0 0.0
  %1446 = vmatprep.subr.mxu0 0.0
  %1447 = vmatpush2.msra.mxu0 0.0
  %1448 = vmatprep.subr.mxu0 0.0
  %1449 = vmatpush2.msra.mxu0 0.0
  %1450 = vmatprep.subr.mxu0 0.0
  %1451 = vmatpush2.msra.mxu0 0.0
  %1452 = vmatprep.subr.mxu0 0.0
  %1453 = vmatpush2.msra.mxu0 0.0
  %1454 = vmatprep.subr.mxu0 0.0
  %1455 = vmatpush2.msra.mxu0 0.0
  %1456 = vmatprep.subr.mxu0 0.0
  %1457 = vmatpush2.msra.mxu0 0.0
  %1458 = vmatprep.subr.mxu0 0.0
  %1459 = vmatpush2.msra.mxu0 0.0
  %1460 = vmatprep.subr.mxu0 0.0
  %1461 = vmatpush2.msra.mxu0 0.0
  %1462 = vmatprep.subr.mxu0 0.0
  %1463 = vmatpush2.msra.mxu0 0.0
  %1464 = vmatprep.mubr.f32.mxu0 0.0
  %1465 = vmatmul.mubr.f32.gmra.mxu0 %v1398
  %v1466 = vpop.f32.mrf.mxu0
  %v1467 = vadd.f32 0.0, %v1466
  %v1468 = vpop.f32.mrf.mxu0
  %1469 = vdwg.mxu0
  %1472 = vrot.lane.b32.xlu0 %v1087, 8
  %v1473 = vpop.permute.xlu0 %1472
  %1474 = vrot.lane.b32.xlu0 %v1163, 8
  %v1475 = vpop.permute.xlu0 %1474
  %1480 = vrot.lane.b32.xlu0 %v1239, 16
  %v1481 = vpop.permute.xlu0 %1480
  %1482 = vrot.lane.b32.xlu0 %v1315, 16
  %v1483 = vpop.permute.xlu0 %1482
  %1488 = vrot.lane.b32.xlu0 %v1391, 24
  %v1489 = vpop.permute.xlu0 %1488
  %1490 = vrot.lane.b32.xlu0 %v1467, 24
  %v1491 = vpop.permute.xlu0 %1490
  %v1494 = vsel %vm157, %v935, %v1473
  %v1495 = vsel %vm157, %v1011, %v1475
  %vm1496 = vcmask 130048
  %v1497 = vsel %vm1496, %v1494, %v1481
  %v1498 = vsel %vm1496, %v1495, %v1483
  %vm1499 = vcmask 195584
  %v1500 = vsel %vm1499, %v1497, %v1489
  %v1501 = vsel %vm1499, %v1498, %v1491
  %v1502 = vld [vmem:[%s3] sm:$0xff]
  %v1503 = vld [vmem:[%s3 + $0x8] sm:$0xff]
  %v1504 = vld [vmem:[%s3 + $0x10] sm:$0xff]
  %v1505 = vld [vmem:[%s3 + $0x18] sm:$0xff]
  %v1506 = vld [vmem:[%s4] sm:$0x1]
  %v1508 = vlaneseq
  %v1509 = vshrl.u32 %v1508, 7
  %v1510 = vsub.s32 0, %v1509
  %v1511 = vrot.slane %v1506, %v1510
  %v1514 = vsel %vm59, %v1500, 0
  %v1517 = vsel %vm59, %v1501, 0
  %1519 = vmatprep.subr.mxu0 0.0
  %1520 = vmatpush1.msra.mxu0 0.0
  %1521 = vmatprep.subr.mxu0 0.0
  %1522 = vmatpush1.msra.mxu0 0.0
  %1523 = vmatprep.subr.mxu0 0.0
  %1524 = vmatpush1.msra.mxu0 0.0
  %1525 = vmatprep.subr.mxu0 0.0
  %1526 = vmatpush1.msra.mxu0 0.0
  %1527 = vmatprep.subr.mxu0 0.0
  %1528 = vmatpush1.msra.mxu0 0.0
  %1529 = vmatprep.subr.mxu0 0.0
  %1530 = vmatpush1.msra.mxu0 0.0
  %1531 = vmatprep.subr.mxu0 0.0
  %1532 = vmatpush1.msra.mxu0 0.0
  %1533 = vmatprep.subr.mxu0 0.0
  %1534 = vmatpush1.msra.mxu0 0.0
  %1535 = vmatprep.subr.mxu0 0.0
  %1536 = vmatpush1.msra.mxu0 0.0
  %1537 = vmatprep.subr.mxu0 0.0
  %1538 = vmatpush1.msra.mxu0 0.0
  %1539 = vmatprep.subr.mxu0 0.0
  %1540 = vmatpush1.msra.mxu0 0.0
  %1541 = vmatprep.subr.mxu0 0.0
  %1542 = vmatpush1.msra.mxu0 0.0
  %1543 = vmatprep.subr.mxu0 0.0
  %1544 = vmatpush1.msra.mxu0 %v1505
  %1545 = vmatprep.subr.mxu0 0.0
  %1546 = vmatpush1.msra.mxu0 %v1504
  %1547 = vmatprep.subr.mxu0 0.0
  %1548 = vmatpush1.msra.mxu0 %v1503
  %1549 = vmatprep.subr.mxu0 0.0
  %1550 = vmatpush1.msra.mxu0 %v1502
  %1551 = vmatprep.subr.mxu0 0.0
  %1552 = vmatpush2.msra.mxu0 0.0
  %1553 = vmatprep.subr.mxu0 0.0
  %1554 = vmatpush2.msra.mxu0 0.0
  %1555 = vmatprep.subr.mxu0 0.0
  %1556 = vmatpush2.msra.mxu0 0.0
  %1557 = vmatprep.subr.mxu0 0.0
  %1558 = vmatpush2.msra.mxu0 0.0
  %1559 = vmatprep.subr.mxu0 0.0
  %1560 = vmatpush2.msra.mxu0 0.0
  %1561 = vmatprep.subr.mxu0 0.0
  %1562 = vmatpush2.msra.mxu0 0.0
  %1563 = vmatprep.subr.mxu0 0.0
  %1564 = vmatpush2.msra.mxu0 0.0
  %1565 = vmatprep.subr.mxu0 0.0
  %1566 = vmatpush2.msra.mxu0 0.0
  %1567 = vmatprep.subr.mxu0 0.0
  %1568 = vmatpush2.msra.mxu0 0.0
  %1569 = vmatprep.subr.mxu0 0.0
  %1570 = vmatpush2.msra.mxu0 0.0
  %1571 = vmatprep.subr.mxu0 0.0
  %1572 = vmatpush2.msra.mxu0 0.0
  %1573 = vmatprep.subr.mxu0 0.0
  %1574 = vmatpush2.msra.mxu0 0.0
  %1575 = vmatprep.subr.mxu0 0.0
  %1576 = vmatpush2.msra.mxu0 0.0
  %1577 = vmatprep.subr.mxu0 0.0
  %1578 = vmatpush2.msra.mxu0 0.0
  %1579 = vmatprep.subr.mxu0 0.0
  %1580 = vmatpush2.msra.mxu0 0.0
  %1581 = vmatprep.subr.mxu0 0.0
  %1582 = vmatpush2.msra.mxu0 0.0
  %1583 = vmatprep.mubr.f32.mxu0 0.0
  %1584 = vmatmul.mubr.f32.gmra.mxu0 %v1514
  %v1585 = vpop.f32.mrf.mxu0
  %v1586 = vadd.f32 %v1511, %v1585
  %v1587 = vpop.f32.mrf.mxu0
  %1588 = vmatprep.mubr.f32.mxu0 0.0
  %1589 = vmatmul.mubr.f32.gmra.mxu0 %v1517
  %v1590 = vpop.f32.mrf.mxu0
  %v1591 = vadd.f32 %v1511, %v1590
  %v1592 = vpop.f32.mrf.mxu0
  %1593 = vdwg.mxu0
  %v1594 = vadd.f32 %v46, %v1586
  %v1595 = vadd.f32 %v47, %v1591
  %v1596 = vld [vmem:[%s9] sm:$0x1]
  %v1597 = vld [vmem:[%s10] sm:$0x1]
  %v1598 = vsel %vm59, %v1594, 0.0
  %1599 = vadd.xlane.f32.xlu0 %v1598
  %v1600 = vpop.xlane.xlu0 %1599
  %v1601 = vsel %vm59, %v1595, 0.0
  %1602 = vadd.xlane.f32.xlu0 %v1601
  %v1603 = vpop.xlane.xlu0 %1602
  %v1604 = vrcp.pop 32.0
  %v1605 = vmul.f32 %v1600, %v1604
  %v1606 = vmul.f32 %v1603, %v1604
  %v1607 = vsub.f32 %v1594, %v1605
  %v1608 = vsub.f32 %v1595, %v1606
  %v1609 = vmul.f32 %v1607, %v1607
  %v1610 = vmul.f32 %v1608, %v1608
  %v1611 = vsel %vm59, %v1609, 0.0
  %1612 = vadd.xlane.f32.xlu0 %v1611
  %v1613 = vpop.xlane.xlu0 %1612
  %v1614 = vsel %vm59, %v1610, 0.0
  %1615 = vadd.xlane.f32.xlu0 %v1614
  %v1616 = vpop.xlane.xlu0 %1615
  %v1617 = vmul.f32 %v1613, %v1604
  %v1618 = vmul.f32 %v1616, %v1604
  %v1619 = vadd.f32 %v1617, 1e-05
  %v1620 = vadd.f32 %v1618, 1e-05
  %v1621 = vrsqrt.pop %v1619
  %v1622 = vrsqrt.pop %v1620
  %v1623 = vmul.f32 %v1607, %v1621
  %v1624 = vmul.f32 %v1608, %v1622
  %v1626 = vlaneseq
  %v1627 = vshrl.u32 %v1626, 7
  %v1628 = vsub.s32 0, %v1627
  %v1629 = vrot.slane %v1596, %v1628
  %v1631 = vmul.f32 %v1623, %v1629
  %v1632 = vmul.f32 %v1624, %v1629
  %v1634 = vlaneseq
  %v1635 = vshrl.u32 %v1634, 7
  %v1636 = vsub.s32 0, %v1635
  %v1637 = vrot.slane %v1597, %v1636
  %v1639 = vadd.f32 %v1631, %v1637
  %v1640 = vadd.f32 %v1632, %v1637
  %v1641 = vld [vmem:[%s5] sm:$0xff]
  %v1642 = vld [vmem:[%s5 + $0x8] sm:$0xff]
  %v1643 = vld [vmem:[%s5 + $0x10] sm:$0xff]
  %v1644 = vld [vmem:[%s5 + $0x18] sm:$0xff]
  %v1645 = vld [vmem:[%s6] sm:$0x1]
  %v1647 = vlaneseq
  %v1648 = vshrl.u32 %v1647, 7
  %v1649 = vsub.s32 0, %v1648
  %v1650 = vrot.slane %v1645, %v1649
  %v1653 = vsel %vm59, %v1639, 0
  %v1656 = vsel %vm59, %v1640, 0
  %1658 = vmatprep.subr.mxu0 0.0
  %1659 = vmatpush1.msra.mxu0 0.0
  %1660 = vmatprep.subr.mxu0 0.0
  %1661 = vmatpush1.msra.mxu0 0.0
  %1662 = vmatprep.subr.mxu0 0.0
  %1663 = vmatpush1.msra.mxu0 0.0
  %1664 = vmatprep.subr.mxu0 0.0
  %1665 = vmatpush1.msra.mxu0 0.0
  %1666 = vmatprep.subr.mxu0 0.0
  %1667 = vmatpush1.msra.mxu0 0.0
  %1668 = vmatprep.subr.mxu0 0.0
  %1669 = vmatpush1.msra.mxu0 0.0
  %1670 = vmatprep.subr.mxu0 0.0
  %1671 = vmatpush1.msra.mxu0 0.0
  %1672 = vmatprep.subr.mxu0 0.0
  %1673 = vmatpush1.msra.mxu0 0.0
  %1674 = vmatprep.subr.mxu0 0.0
  %1675 = vmatpush1.msra.mxu0 0.0
  %1676 = vmatprep.subr.mxu0 0.0
  %1677 = vmatpush1.msra.mxu0 0.0
  %1678 = vmatprep.subr.mxu0 0.0
  %1679 = vmatpush1.msra.mxu0 0.0
  %1680 = vmatprep.subr.mxu0 0.0
  %1681 = vmatpush1.msra.mxu0 0.0
  %1682 = vmatprep.subr.mxu0 0.0
  %1683 = vmatpush1.msra.mxu0 %v1644
  %1684 = vmatprep.subr.mxu0 0.0
  %1685 = vmatpush1.msra.mxu0 %v1643
  %1686 = vmatprep.subr.mxu0 0.0
  %1687 = vmatpush1.msra.mxu0 %v1642
  %1688 = vmatprep.subr.mxu0 0.0
  %1689 = vmatpush1.msra.mxu0 %v1641
  %1690 = vmatprep.subr.mxu0 0.0
  %1691 = vmatpush2.msra.mxu0 0.0
  %1692 = vmatprep.subr.mxu0 0.0
  %1693 = vmatpush2.msra.mxu0 0.0
  %1694 = vmatprep.subr.mxu0 0.0
  %1695 = vmatpush2.msra.mxu0 0.0
  %1696 = vmatprep.subr.mxu0 0.0
  %1697 = vmatpush2.msra.mxu0 0.0
  %1698 = vmatprep.subr.mxu0 0.0
  %1699 = vmatpush2.msra.mxu0 0.0
  %1700 = vmatprep.subr.mxu0 0.0
  %1701 = vmatpush2.msra.mxu0 0.0
  %1702 = vmatprep.subr.mxu0 0.0
  %1703 = vmatpush2.msra.mxu0 0.0
  %1704 = vmatprep.subr.mxu0 0.0
  %1705 = vmatpush2.msra.mxu0 0.0
  %1706 = vmatprep.subr.mxu0 0.0
  %1707 = vmatpush2.msra.mxu0 0.0
  %1708 = vmatprep.subr.mxu0 0.0
  %1709 = vmatpush2.msra.mxu0 0.0
  %1710 = vmatprep.subr.mxu0 0.0
  %1711 = vmatpush2.msra.mxu0 0.0
  %1712 = vmatprep.subr.mxu0 0.0
  %1713 = vmatpush2.msra.mxu0 0.0
  %1714 = vmatprep.subr.mxu0 0.0
  %1715 = vmatpush2.msra.mxu0 0.0
  %1716 = vmatprep.subr.mxu0 0.0
  %1717 = vmatpush2.msra.mxu0 0.0
  %1718 = vmatprep.subr.mxu0 0.0
  %1719 = vmatpush2.msra.mxu0 0.0
  %1720 = vmatprep.subr.mxu0 0.0
  %1721 = vmatpush2.msra.mxu0 0.0
  %1722 = vmatprep.mubr.f32.mxu0 0.0
  %1723 = vmatmul.mubr.f32.gmra.mxu0 %v1653
  %v1724 = vpop.f32.mrf.mxu0
  %v1725 = vadd.f32 %v1650, %v1724
  %v1726 = vpop.f32.mrf.mxu0
  %1727 = vmatprep.mubr.f32.mxu0 0.0
  %1728 = vmatmul.mubr.f32.gmra.mxu0 %v1656
  %v1729 = vpop.f32.mrf.mxu0
  %v1730 = vadd.f32 %v1650, %v1729
  %v1731 = vpop.f32.mrf.mxu0
  %1732 = vdwg.mxu0
  %v1733 = vmax.f32 %v1725, 0.0
  %v1734 = vmax.f32 %v1730, 0.0
  %v1735 = vld [vmem:[%s7] sm:$0xff]
  %v1736 = vld [vmem:[%s7 + $0x8] sm:$0xff]
  %v1737 = vld [vmem:[%s7 + $0x10] sm:$0xff]
  %v1738 = vld [vmem:[%s7 + $0x18] sm:$0xff]
  %v1739 = vld [vmem:[%s7 + $0x20] sm:$0xff]
  %v1740 = vld [vmem:[%s7 + $0x28] sm:$0xff]
  %v1741 = vld [vmem:[%s7 + $0x30] sm:$0xff]
  %v1742 = vld [vmem:[%s7 + $0x38] sm:$0xff]
  %v1743 = vld [vmem:[%s8] sm:$0x1]
  %v1745 = vlaneseq
  %v1746 = vshrl.u32 %v1745, 7
  %v1747 = vsub.s32 0, %v1746
  %v1748 = vrot.slane %v1743, %v1747
  %vm1750 = vcmask 523264
  %v1752 = vsel %vm1750, %v1733, 0
  %v1755 = vsel %vm1750, %v1734, 0
  %1757 = vmatprep.subr.mxu0 0.0
  %1758 = vmatpush1.msra.mxu0 0.0
  %1759 = vmatprep.subr.mxu0 0.0
  %1760 = vmatpush1.msra.mxu0 0.0
  %1761 = vmatprep.subr.mxu0 0.0
  %1762 = vmatpush1.msra.mxu0 0.0
  %1763 = vmatprep.subr.mxu0 0.0
  %1764 = vmatpush1.msra.mxu0 0.0
  %1765 = vmatprep.subr.mxu0 0.0
  %1766 = vmatpush1.msra.mxu0 0.0
  %1767 = vmatprep.subr.mxu0 0.0
  %1768 = vmatpush1.msra.mxu0 0.0
  %1769 = vmatprep.subr.mxu0 0.0
  %1770 = vmatpush1.msra.mxu0 0.0
  %1771 = vmatprep.subr.mxu0 0.0
  %1772 = vmatpush1.msra.mxu0 0.0
  %1773 = vmatprep.subr.mxu0 0.0
  %1774 = vmatpush1.msra.mxu0 %v1742
  %1775 = vmatprep.subr.mxu0 0.0
  %1776 = vmatpush1.msra.mxu0 %v1741
  %1777 = vmatprep.subr.mxu0 0.0
  %1778 = vmatpush1.msra.mxu0 %v1740
  %1779 = vmatprep.subr.mxu0 0.0
  %1780 = vmatpush1.msra.mxu0 %v1739
  %1781 = vmatprep.subr.mxu0 0.0
  %1782 = vmatpush1.msra.mxu0 %v1738
  %1783 = vmatprep.subr.mxu0 0.0
  %1784 = vmatpush1.msra.mxu0 %v1737
  %1785 = vmatprep.subr.mxu0 0.0
  %1786 = vmatpush1.msra.mxu0 %v1736
  %1787 = vmatprep.subr.mxu0 0.0
  %1788 = vmatpush1.msra.mxu0 %v1735
  %1789 = vmatprep.subr.mxu0 0.0
  %1790 = vmatpush2.msra.mxu0 0.0
  %1791 = vmatprep.subr.mxu0 0.0
  %1792 = vmatpush2.msra.mxu0 0.0
  %1793 = vmatprep.subr.mxu0 0.0
  %1794 = vmatpush2.msra.mxu0 0.0
  %1795 = vmatprep.subr.mxu0 0.0
  %1796 = vmatpush2.msra.mxu0 0.0
  %1797 = vmatprep.subr.mxu0 0.0
  %1798 = vmatpush2.msra.mxu0 0.0
  %1799 = vmatprep.subr.mxu0 0.0
  %1800 = vmatpush2.msra.mxu0 0.0
  %1801 = vmatprep.subr.mxu0 0.0
  %1802 = vmatpush2.msra.mxu0 0.0
  %1803 = vmatprep.subr.mxu0 0.0
  %1804 = vmatpush2.msra.mxu0 0.0
  %1805 = vmatprep.subr.mxu0 0.0
  %1806 = vmatpush2.msra.mxu0 0.0
  %1807 = vmatprep.subr.mxu0 0.0
  %1808 = vmatpush2.msra.mxu0 0.0
  %1809 = vmatprep.subr.mxu0 0.0
  %1810 = vmatpush2.msra.mxu0 0.0
  %1811 = vmatprep.subr.mxu0 0.0
  %1812 = vmatpush2.msra.mxu0 0.0
  %1813 = vmatprep.subr.mxu0 0.0
  %1814 = vmatpush2.msra.mxu0 0.0
  %1815 = vmatprep.subr.mxu0 0.0
  %1816 = vmatpush2.msra.mxu0 0.0
  %1817 = vmatprep.subr.mxu0 0.0
  %1818 = vmatpush2.msra.mxu0 0.0
  %1819 = vmatprep.subr.mxu0 0.0
  %1820 = vmatpush2.msra.mxu0 0.0
  %1821 = vmatprep.mubr.f32.mxu0 0.0
  %1822 = vmatmul.mubr.f32.gmra.mxu0 %v1752
  %v1823 = vpop.f32.mrf.mxu0
  %v1824 = vadd.f32 %v1748, %v1823
  %v1825 = vpop.f32.mrf.mxu0
  %1826 = vmatprep.mubr.f32.mxu0 0.0
  %1827 = vmatmul.mubr.f32.gmra.mxu0 %v1755
  %v1828 = vpop.f32.mrf.mxu0
  %v1829 = vadd.f32 %v1748, %v1828
  %v1830 = vpop.f32.mrf.mxu0
  %1831 = vdwg.mxu0
  %v1832 = vadd.f32 %v1639, %v1824
  %v1833 = vadd.f32 %v1640, %v1829
  %v1834 = vld [vmem:[%s11] sm:$0x1]
  %v1835 = vld [vmem:[%s12] sm:$0x1]
  %v1836 = vsel %vm59, %v1832, 0.0
  %1837 = vadd.xlane.f32.xlu0 %v1836
  %v1838 = vpop.xlane.xlu0 %1837
  %v1839 = vsel %vm59, %v1833, 0.0
  %1840 = vadd.xlane.f32.xlu0 %v1839
  %v1841 = vpop.xlane.xlu0 %1840
  %v1842 = vmul.f32 %v1838, %v1604
  %v1843 = vmul.f32 %v1841, %v1604
  %v1844 = vsub.f32 %v1832, %v1842
  %v1845 = vsub.f32 %v1833, %v1843
  %v1846 = vmul.f32 %v1844, %v1844
  %v1847 = vmul.f32 %v1845, %v1845
  %v1848 = vsel %vm59, %v1846, 0.0
  %1849 = vadd.xlane.f32.xlu0 %v1848
  %v1850 = vpop.xlane.xlu0 %1849
  %v1851 = vsel %vm59, %v1847, 0.0
  %1852 = vadd.xlane.f32.xlu0 %v1851
  %v1853 = vpop.xlane.xlu0 %1852
  %v1854 = vmul.f32 %v1850, %v1604
  %v1855 = vmul.f32 %v1853, %v1604
  %v1856 = vadd.f32 %v1854, 1e-05
  %v1857 = vadd.f32 %v1855, 1e-05
  %v1858 = vrsqrt.pop %v1856
  %v1859 = vrsqrt.pop %v1857
  %v1860 = vmul.f32 %v1844, %v1858
  %v1861 = vmul.f32 %v1845, %v1859
  %v1863 = vlaneseq
  %v1864 = vshrl.u32 %v1863, 7
  %v1865 = vsub.s32 0, %v1864
  %v1866 = vrot.slane %v1834, %v1865
  %v1868 = vmul.f32 %v1860, %v1866
  %v1869 = vmul.f32 %v1861, %v1866
  %v1871 = vlaneseq
  %v1872 = vshrl.u32 %v1871, 7
  %v1873 = vsub.s32 0, %v1872
  %v1874 = vrot.slane %v1835, %v1873
  %v1876 = vadd.f32 %v1868, %v1874
  %v1877 = vadd.f32 %v1869, %v1874
  %s1878 = scalar_lea.vmem %s1, 32
  %v1879 = vld [vmem:[%s1878] sm:$0xff]
  %v1880 = vld [vmem:[%s1878 + $0x8] sm:$0xff]
  %v1881 = vld [vmem:[%s1878 + $0x10] sm:$0xff]
  %v1882 = vld [vmem:[%s1878 + $0x18] sm:$0xff]
  %s1883 = scalar_lea.vmem %s2, 1
  %v1884 = vld [vmem:[%s1883] sm:$0x1]
  %v1886 = vlaneseq
  %v1887 = vshrl.u32 %v1886, 7
  %v1888 = vsub.s32 0, %v1887
  %v1889 = vrot.slane %v1884, %v1888
  %v1892 = vsel %vm59, %v1876, 0
  %v1895 = vsel %vm59, %v1877, 0
  %1897 = vmatprep.subr.mxu0 0.0
  %1898 = vmatpush1.msra.mxu0 0.0
  %1899 = vmatprep.subr.mxu0 0.0
  %1900 = vmatpush1.msra.mxu0 0.0
  %1901 = vmatprep.subr.mxu0 0.0
  %1902 = vmatpush1.msra.mxu0 0.0
  %1903 = vmatprep.subr.mxu0 0.0
  %1904 = vmatpush1.msra.mxu0 0.0
  %1905 = vmatprep.subr.mxu0 0.0
  %1906 = vmatpush1.msra.mxu0 0.0
  %1907 = vmatprep.subr.mxu0 0.0
  %1908 = vmatpush1.msra.mxu0 0.0
  %1909 = vmatprep.subr.mxu0 0.0
  %1910 = vmatpush1.msra.mxu0 0.0
  %1911 = vmatprep.subr.mxu0 0.0
  %1912 = vmatpush1.msra.mxu0 0.0
  %1913 = vmatprep.subr.mxu0 0.0
  %1914 = vmatpush1.msra.mxu0 0.0
  %1915 = vmatprep.subr.mxu0 0.0
  %1916 = vmatpush1.msra.mxu0 0.0
  %1917 = vmatprep.subr.mxu0 0.0
  %1918 = vmatpush1.msra.mxu0 0.0
  %1919 = vmatprep.subr.mxu0 0.0
  %1920 = vmatpush1.msra.mxu0 0.0
  %1921 = vmatprep.subr.mxu0 0.0
  %1922 = vmatpush1.msra.mxu0 %v1882
  %1923 = vmatprep.subr.mxu0 0.0
  %1924 = vmatpush1.msra.mxu0 %v1881
  %1925 = vmatprep.subr.mxu0 0.0
  %1926 = vmatpush1.msra.mxu0 %v1880
  %1927 = vmatprep.subr.mxu0 0.0
  %1928 = vmatpush1.msra.mxu0 %v1879
  %1929 = vmatprep.subr.mxu0 0.0
  %1930 = vmatpush2.msra.mxu0 0.0
  %1931 = vmatprep.subr.mxu0 0.0
  %1932 = vmatpush2.msra.mxu0 0.0
  %1933 = vmatprep.subr.mxu0 0.0
  %1934 = vmatpush2.msra.mxu0 0.0
  %1935 = vmatprep.subr.mxu0 0.0
  %1936 = vmatpush2.msra.mxu0 0.0
  %1937 = vmatprep.subr.mxu0 0.0
  %1938 = vmatpush2.msra.mxu0 0.0
  %1939 = vmatprep.subr.mxu0 0.0
  %1940 = vmatpush2.msra.mxu0 0.0
  %1941 = vmatprep.subr.mxu0 0.0
  %1942 = vmatpush2.msra.mxu0 0.0
  %1943 = vmatprep.subr.mxu0 0.0
  %1944 = vmatpush2.msra.mxu0 0.0
  %1945 = vmatprep.subr.mxu0 0.0
  %1946 = vmatpush2.msra.mxu0 0.0
  %1947 = vmatprep.subr.mxu0 0.0
  %1948 = vmatpush2.msra.mxu0 0.0
  %1949 = vmatprep.subr.mxu0 0.0
  %1950 = vmatpush2.msra.mxu0 0.0
  %1951 = vmatprep.subr.mxu0 0.0
  %1952 = vmatpush2.msra.mxu0 0.0
  %1953 = vmatprep.subr.mxu0 0.0
  %1954 = vmatpush2.msra.mxu0 0.0
  %1955 = vmatprep.subr.mxu0 0.0
  %1956 = vmatpush2.msra.mxu0 0.0
  %1957 = vmatprep.subr.mxu0 0.0
  %1958 = vmatpush2.msra.mxu0 0.0
  %1959 = vmatprep.subr.mxu0 0.0
  %1960 = vmatpush2.msra.mxu0 0.0
  %1961 = vmatprep.mubr.f32.mxu0 0.0
  %1962 = vmatmul.mubr.f32.gmra.mxu0 %v1892
  %v1963 = vpop.f32.mrf.mxu0
  %v1964 = vadd.f32 %v1889, %v1963
  %v1965 = vpop.f32.mrf.mxu0
  %1966 = vmatprep.mubr.f32.mxu0 0.0
  %1967 = vmatmul.mubr.f32.gmra.mxu0 %v1895
  %v1968 = vpop.f32.mrf.mxu0
  %v1969 = vadd.f32 %v1889, %v1968
  %v1970 = vpop.f32.mrf.mxu0
  %1971 = vdwg.mxu0
  %1974 = vrot.lane.b32.xlu0 %v1964, 120
  %v1975 = vpop.permute.xlu0 %1974
  %1976 = vrot.lane.b32.xlu0 %v1969, 120
  %v1977 = vpop.permute.xlu0 %1976
  %1978 = vrot.lane.b32.xlu0 %v1964, 112
  %v1979 = vpop.permute.xlu0 %1978
  %1980 = vrot.lane.b32.xlu0 %v1969, 112
  %v1981 = vpop.permute.xlu0 %1980
  %1982 = vrot.lane.b32.xlu0 %v1964, 104
  %v1983 = vpop.permute.xlu0 %1982
  %1984 = vrot.lane.b32.xlu0 %v1969, 104
  %v1985 = vpop.permute.xlu0 %1984
  %1986 = vrot.lane.b32.xlu0 %v1964, 96
  %v1987 = vpop.permute.xlu0 %1986
  %v1988 = vsel %vm157, %v1964, 0
  %v1990 = vsel %vm157, %v1987, 0
  %1992 = vmatprep.subr.mxu0 0.0
  %1993 = vmatpush1.xpose.msra.mxu0 0.0
  %1994 = vmatprep.subr.mxu0 0.0
  %1995 = vmatpush1.xpose.msra.mxu0 0.0
  %1996 = vmatprep.subr.mxu0 0.0
  %1997 = vmatpush1.xpose.msra.mxu0 0.0
  %1998 = vmatprep.subr.mxu0 0.0
  %1999 = vmatpush1.xpose.msra.mxu0 0.0
  %2000 = vmatprep.subr.mxu0 0.0
  %2001 = vmatpush1.xpose.msra.mxu0 0.0
  %2002 = vmatprep.subr.mxu0 0.0
  %2003 = vmatpush1.xpose.msra.mxu0 0.0
  %2004 = vmatprep.subr.mxu0 0.0
  %2005 = vmatpush1.xpose.msra.mxu0 0.0
  %2006 = vmatprep.subr.mxu0 0.0
  %2007 = vmatpush1.xpose.msra.mxu0 0.0
  %2008 = vmatprep.subr.mxu0 0.0
  %2009 = vmatpush1.xpose.msra.mxu0 0.0
  %2010 = vmatprep.subr.mxu0 0.0
  %2011 = vmatpush1.xpose.msra.mxu0 0.0
  %2012 = vmatprep.subr.mxu0 0.0
  %2013 = vmatpush1.xpose.msra.mxu0 0.0
  %2014 = vmatprep.subr.mxu0 0.0
  %2015 = vmatpush1.xpose.msra.mxu0 0.0
  %2016 = vmatprep.subr.mxu0 0.0
  %2017 = vmatpush1.xpose.msra.mxu0 0.0
  %2018 = vmatprep.subr.mxu0 0.0
  %2019 = vmatpush1.xpose.msra.mxu0 0.0
  %2020 = vmatprep.subr.mxu0 0.0
  %2021 = vmatpush1.xpose.msra.mxu0 0.0
  %2022 = vmatprep.subr.mxu0 0.0
  %2023 = vmatpush1.xpose.msra.mxu0 %v1990
  %2024 = vmatprep.subr.mxu0 0.0
  %2025 = vmatpush2.xpose.msra.mxu0 0.0
  %2026 = vmatprep.subr.mxu0 0.0
  %2027 = vmatpush2.xpose.msra.mxu0 0.0
  %2028 = vmatprep.subr.mxu0 0.0
  %2029 = vmatpush2.xpose.msra.mxu0 0.0
  %2030 = vmatprep.subr.mxu0 0.0
  %2031 = vmatpush2.xpose.msra.mxu0 0.0
  %2032 = vmatprep.subr.mxu0 0.0
  %2033 = vmatpush2.xpose.msra.mxu0 0.0
  %2034 = vmatprep.subr.mxu0 0.0
  %2035 = vmatpush2.xpose.msra.mxu0 0.0
  %2036 = vmatprep.subr.mxu0 0.0
  %2037 = vmatpush2.xpose.msra.mxu0 0.0
  %2038 = vmatprep.subr.mxu0 0.0
  %2039 = vmatpush2.xpose.msra.mxu0 0.0
  %2040 = vmatprep.subr.mxu0 0.0
  %2041 = vmatpush2.xpose.msra.mxu0 0.0
  %2042 = vmatprep.subr.mxu0 0.0
  %2043 = vmatpush2.xpose.msra.mxu0 0.0
  %2044 = vmatprep.subr.mxu0 0.0
  %2045 = vmatpush2.xpose.msra.mxu0 0.0
  %2046 = vmatprep.subr.mxu0 0.0
  %2047 = vmatpush2.xpose.msra.mxu0 0.0
  %2048 = vmatprep.subr.mxu0 0.0
  %2049 = vmatpush2.xpose.msra.mxu0 0.0
  %2050 = vmatprep.subr.mxu0 0.0
  %2051 = vmatpush2.xpose.msra.mxu0 0.0
  %2052 = vmatprep.subr.mxu0 0.0
  %2053 = vmatpush2.xpose.msra.mxu0 0.0
  %2054 = vmatprep.subr.mxu0 0.0
  %2055 = vmatpush2.xpose.msra.mxu0 0.0
  %2056 = vmatprep.mubr.f32.mxu0 0.0
  %2057 = vmatmul.mubr.f32.gmra.mxu0 %v1988
  %v2058 = vpop.f32.mrf.mxu0
  %v2059 = vadd.f32 0.0, %v2058
  %v2060 = vpop.f32.mrf.mxu0
  %2061 = vdwg.mxu0
  %2062 = vrot.lane.b32.xlu0 %v1969, 96
  %v2063 = vpop.permute.xlu0 %2062
  %v2064 = vsel %vm157, %v1969, 0
  %v2066 = vsel %vm157, %v2063, 0
  %2068 = vmatprep.subr.mxu0 0.0
  %2069 = vmatpush1.xpose.msra.mxu0 0.0
  %2070 = vmatprep.subr.mxu0 0.0
  %2071 = vmatpush1.xpose.msra.mxu0 0.0
  %2072 = vmatprep.subr.mxu0 0.0
  %2073 = vmatpush1.xpose.msra.mxu0 0.0
  %2074 = vmatprep.subr.mxu0 0.0
  %2075 = vmatpush1.xpose.msra.mxu0 0.0
  %2076 = vmatprep.subr.mxu0 0.0
  %2077 = vmatpush1.xpose.msra.mxu0 0.0
  %2078 = vmatprep.subr.mxu0 0.0
  %2079 = vmatpush1.xpose.msra.mxu0 0.0
  %2080 = vmatprep.subr.mxu0 0.0
  %2081 = vmatpush1.xpose.msra.mxu0 0.0
  %2082 = vmatprep.subr.mxu0 0.0
  %2083 = vmatpush1.xpose.msra.mxu0 0.0
  %2084 = vmatprep.subr.mxu0 0.0
  %2085 = vmatpush1.xpose.msra.mxu0 0.0
  %2086 = vmatprep.subr.mxu0 0.0
  %2087 = vmatpush1.xpose.msra.mxu0 0.0
  %2088 = vmatprep.subr.mxu0 0.0
  %2089 = vmatpush1.xpose.msra.mxu0 0.0
  %2090 = vmatprep.subr.mxu0 0.0
  %2091 = vmatpush1.xpose.msra.mxu0 0.0
  %2092 = vmatprep.subr.mxu0 0.0
  %2093 = vmatpush1.xpose.msra.mxu0 0.0
  %2094 = vmatprep.subr.mxu0 0.0
  %2095 = vmatpush1.xpose.msra.mxu0 0.0
  %2096 = vmatprep.subr.mxu0 0.0
  %2097 = vmatpush1.xpose.msra.mxu0 0.0
  %2098 = vmatprep.subr.mxu0 0.0
  %2099 = vmatpush1.xpose.msra.mxu0 %v2066
  %2100 = vmatprep.subr.mxu0 0.0
  %2101 = vmatpush2.xpose.msra.mxu0 0.0
  %2102 = vmatprep.subr.mxu0 0.0
  %2103 = vmatpush2.xpose.msra.mxu0 0.0
  %2104 = vmatprep.subr.mxu0 0.0
  %2105 = vmatpush2.xpose.msra.mxu0 0.0
  %2106 = vmatprep.subr.mxu0 0.0
  %2107 = vmatpush2.xpose.msra.mxu0 0.0
  %2108 = vmatprep.subr.mxu0 0.0
  %2109 = vmatpush2.xpose.msra.mxu0 0.0
  %2110 = vmatprep.subr.mxu0 0.0
  %2111 = vmatpush2.xpose.msra.mxu0 0.0
  %2112 = vmatprep.subr.mxu0 0.0
  %2113 = vmatpush2.xpose.msra.mxu0 0.0
  %2114 = vmatprep.subr.mxu0 0.0
  %2115 = vmatpush2.xpose.msra.mxu0 0.0
  %2116 = vmatprep.subr.mxu0 0.0
  %2117 = vmatpush2.xpose.msra.mxu0 0.0
  %2118 = vmatprep.subr.mxu0 0.0
  %2119 = vmatpush2.xpose.msra.mxu0 0.0
  %2120 = vmatprep.subr.mxu0 0.0
  %2121 = vmatpush2.xpose.msra.mxu0 0.0
  %2122 = vmatprep.subr.mxu0 0.0
  %2123 = vmatpush2.xpose.msra.mxu0 0.0
  %2124 = vmatprep.subr.mxu0 0.0
  %2125 = vmatpush2.xpose.msra.mxu0 0.0
  %2126 = vmatprep.subr.mxu0 0.0
  %2127 = vmatpush2.xpose.msra.mxu0 0.0
  %2128 = vmatprep.subr.mxu0 0.0
  %2129 = vmatpush2.xpose.msra.mxu0 0.0
  %2130 = vmatprep.subr.mxu0 0.0
  %2131 = vmatpush2.xpose.msra.mxu0 0.0
  %2132 = vmatprep.mubr.f32.mxu0 0.0
  %2133 = vmatmul.mubr.f32.gmra.mxu0 %v2064
  %v2134 = vpop.f32.mrf.mxu0
  %v2135 = vadd.f32 0.0, %v2134
  %v2136 = vpop.f32.mrf.mxu0
  %2137 = vdwg.mxu0
  %2138 = vrot.lane.b32.xlu0 %v1975, 96
  %v2139 = vpop.permute.xlu0 %2138
  %v2140 = vsel %vm157, %v1975, 0
  %v2142 = vsel %vm157, %v2139, 0
  %2144 = vmatprep.subr.mxu0 0.0
  %2145 = vmatpush1.xpose.msra.mxu0 0.0
  %2146 = vmatprep.subr.mxu0 0.0
  %2147 = vmatpush1.xpose.msra.mxu0 0.0
  %2148 = vmatprep.subr.mxu0 0.0
  %2149 = vmatpush1.xpose.msra.mxu0 0.0
  %2150 = vmatprep.subr.mxu0 0.0
  %2151 = vmatpush1.xpose.msra.mxu0 0.0
  %2152 = vmatprep.subr.mxu0 0.0
  %2153 = vmatpush1.xpose.msra.mxu0 0.0
  %2154 = vmatprep.subr.mxu0 0.0
  %2155 = vmatpush1.xpose.msra.mxu0 0.0
  %2156 = vmatprep.subr.mxu0 0.0
  %2157 = vmatpush1.xpose.msra.mxu0 0.0
  %2158 = vmatprep.subr.mxu0 0.0
  %2159 = vmatpush1.xpose.msra.mxu0 0.0
  %2160 = vmatprep.subr.mxu0 0.0
  %2161 = vmatpush1.xpose.msra.mxu0 0.0
  %2162 = vmatprep.subr.mxu0 0.0
  %2163 = vmatpush1.xpose.msra.mxu0 0.0
  %2164 = vmatprep.subr.mxu0 0.0
  %2165 = vmatpush1.xpose.msra.mxu0 0.0
  %2166 = vmatprep.subr.mxu0 0.0
  %2167 = vmatpush1.xpose.msra.mxu0 0.0
  %2168 = vmatprep.subr.mxu0 0.0
  %2169 = vmatpush1.xpose.msra.mxu0 0.0
  %2170 = vmatprep.subr.mxu0 0.0
  %2171 = vmatpush1.xpose.msra.mxu0 0.0
  %2172 = vmatprep.subr.mxu0 0.0
  %2173 = vmatpush1.xpose.msra.mxu0 0.0
  %2174 = vmatprep.subr.mxu0 0.0
  %2175 = vmatpush1.xpose.msra.mxu0 %v2142
  %2176 = vmatprep.subr.mxu0 0.0
  %2177 = vmatpush2.xpose.msra.mxu0 0.0
  %2178 = vmatprep.subr.mxu0 0.0
  %2179 = vmatpush2.xpose.msra.mxu0 0.0
  %2180 = vmatprep.subr.mxu0 0.0
  %2181 = vmatpush2.xpose.msra.mxu0 0.0
  %2182 = vmatprep.subr.mxu0 0.0
  %2183 = vmatpush2.xpose.msra.mxu0 0.0
  %2184 = vmatprep.subr.mxu0 0.0
  %2185 = vmatpush2.xpose.msra.mxu0 0.0
  %2186 = vmatprep.subr.mxu0 0.0
  %2187 = vmatpush2.xpose.msra.mxu0 0.0
  %2188 = vmatprep.subr.mxu0 0.0
  %2189 = vmatpush2.xpose.msra.mxu0 0.0
  %2190 = vmatprep.subr.mxu0 0.0
  %2191 = vmatpush2.xpose.msra.mxu0 0.0
  %2192 = vmatprep.subr.mxu0 0.0
  %2193 = vmatpush2.xpose.msra.mxu0 0.0
  %2194 = vmatprep.subr.mxu0 0.0
  %2195 = vmatpush2.xpose.msra.mxu0 0.0
  %2196 = vmatprep.subr.mxu0 0.0
  %2197 = vmatpush2.xpose.msra.mxu0 0.0
  %2198 = vmatprep.subr.mxu0 0.0
  %2199 = vmatpush2.xpose.msra.mxu0 0.0
  %2200 = vmatprep.subr.mxu0 0.0
  %2201 = vmatpush2.xpose.msra.mxu0 0.0
  %2202 = vmatprep.subr.mxu0 0.0
  %2203 = vmatpush2.xpose.msra.mxu0 0.0
  %2204 = vmatprep.subr.mxu0 0.0
  %2205 = vmatpush2.xpose.msra.mxu0 0.0
  %2206 = vmatprep.subr.mxu0 0.0
  %2207 = vmatpush2.xpose.msra.mxu0 0.0
  %2208 = vmatprep.mubr.f32.mxu0 0.0
  %2209 = vmatmul.mubr.f32.gmra.mxu0 %v2140
  %v2210 = vpop.f32.mrf.mxu0
  %v2211 = vadd.f32 0.0, %v2210
  %v2212 = vpop.f32.mrf.mxu0
  %2213 = vdwg.mxu0
  %2214 = vrot.lane.b32.xlu0 %v1977, 96
  %v2215 = vpop.permute.xlu0 %2214
  %v2216 = vsel %vm157, %v1977, 0
  %v2218 = vsel %vm157, %v2215, 0
  %2220 = vmatprep.subr.mxu0 0.0
  %2221 = vmatpush1.xpose.msra.mxu0 0.0
  %2222 = vmatprep.subr.mxu0 0.0
  %2223 = vmatpush1.xpose.msra.mxu0 0.0
  %2224 = vmatprep.subr.mxu0 0.0
  %2225 = vmatpush1.xpose.msra.mxu0 0.0
  %2226 = vmatprep.subr.mxu0 0.0
  %2227 = vmatpush1.xpose.msra.mxu0 0.0
  %2228 = vmatprep.subr.mxu0 0.0
  %2229 = vmatpush1.xpose.msra.mxu0 0.0
  %2230 = vmatprep.subr.mxu0 0.0
  %2231 = vmatpush1.xpose.msra.mxu0 0.0
  %2232 = vmatprep.subr.mxu0 0.0
  %2233 = vmatpush1.xpose.msra.mxu0 0.0
  %2234 = vmatprep.subr.mxu0 0.0
  %2235 = vmatpush1.xpose.msra.mxu0 0.0
  %2236 = vmatprep.subr.mxu0 0.0
  %2237 = vmatpush1.xpose.msra.mxu0 0.0
  %2238 = vmatprep.subr.mxu0 0.0
  %2239 = vmatpush1.xpose.msra.mxu0 0.0
  %2240 = vmatprep.subr.mxu0 0.0
  %2241 = vmatpush1.xpose.msra.mxu0 0.0
  %2242 = vmatprep.subr.mxu0 0.0
  %2243 = vmatpush1.xpose.msra.mxu0 0.0
  %2244 = vmatprep.subr.mxu0 0.0
  %2245 = vmatpush1.xpose.msra.mxu0 0.0
  %2246 = vmatprep.subr.mxu0 0.0
  %2247 = vmatpush1.xpose.msra.mxu0 0.0
  %2248 = vmatprep.subr.mxu0 0.0
  %2249 = vmatpush1.xpose.msra.mxu0 0.0
  %2250 = vmatprep.subr.mxu0 0.0
  %2251 = vmatpush1.xpose.msra.mxu0 %v2218
  %2252 = vmatprep.subr.mxu0 0.0
  %2253 = vmatpush2.xpose.msra.mxu0 0.0
  %2254 = vmatprep.subr.mxu0 0.0
  %2255 = vmatpush2.xpose.msra.mxu0 0.0
  %2256 = vmatprep.subr.mxu0 0.0
  %2257 = vmatpush2.xpose.msra.mxu0 0.0
  %2258 = vmatprep.subr.mxu0 0.0
  %2259 = vmatpush2.xpose.msra.mxu0 0.0
  %2260 = vmatprep.subr.mxu0 0.0
  %2261 = vmatpush2.xpose.msra.mxu0 0.0
  %2262 = vmatprep.subr.mxu0 0.0
  %2263 = vmatpush2.xpose.msra.mxu0 0.0
  %2264 = vmatprep.subr.mxu0 0.0
  %2265 = vmatpush2.xpose.msra.mxu0 0.0
  %2266 = vmatprep.subr.mxu0 0.0
  %2267 = vmatpush2.xpose.msra.mxu0 0.0
  %2268 = vmatprep.subr.mxu0 0.0
  %2269 = vmatpush2.xpose.msra.mxu0 0.0
  %2270 = vmatprep.subr.mxu0 0.0
  %2271 = vmatpush2.xpose.msra.mxu0 0.0
  %2272 = vmatprep.subr.mxu0 0.0
  %2273 = vmatpush2.xpose.msra.mxu0 0.0
  %2274 = vmatprep.subr.mxu0 0.0
  %2275 = vmatpush2.xpose.msra.mxu0 0.0
  %2276 = vmatprep.subr.mxu0 0.0
  %2277 = vmatpush2.xpose.msra.mxu0 0.0
  %2278 = vmatprep.subr.mxu0 0.0
  %2279 = vmatpush2.xpose.msra.mxu0 0.0
  %2280 = vmatprep.subr.mxu0 0.0
  %2281 = vmatpush2.xpose.msra.mxu0 0.0
  %2282 = vmatprep.subr.mxu0 0.0
  %2283 = vmatpush2.xpose.msra.mxu0 0.0
  %2284 = vmatprep.mubr.f32.mxu0 0.0
  %2285 = vmatmul.mubr.f32.gmra.mxu0 %v2216
  %v2286 = vpop.f32.mrf.mxu0
  %v2287 = vadd.f32 0.0, %v2286
  %v2288 = vpop.f32.mrf.mxu0
  %2289 = vdwg.mxu0
  %2290 = vrot.lane.b32.xlu0 %v1979, 96
  %v2291 = vpop.permute.xlu0 %2290
  %v2292 = vsel %vm157, %v1979, 0
  %v2294 = vsel %vm157, %v2291, 0
  %2296 = vmatprep.subr.mxu0 0.0
  %2297 = vmatpush1.xpose.msra.mxu0 0.0
  %2298 = vmatprep.subr.mxu0 0.0
  %2299 = vmatpush1.xpose.msra.mxu0 0.0
  %2300 = vmatprep.subr.mxu0 0.0
  %2301 = vmatpush1.xpose.msra.mxu0 0.0
  %2302 = vmatprep.subr.mxu0 0.0
  %2303 = vmatpush1.xpose.msra.mxu0 0.0
  %2304 = vmatprep.subr.mxu0 0.0
  %2305 = vmatpush1.xpose.msra.mxu0 0.0
  %2306 = vmatprep.subr.mxu0 0.0
  %2307 = vmatpush1.xpose.msra.mxu0 0.0
  %2308 = vmatprep.subr.mxu0 0.0
  %2309 = vmatpush1.xpose.msra.mxu0 0.0
  %2310 = vmatprep.subr.mxu0 0.0
  %2311 = vmatpush1.xpose.msra.mxu0 0.0
  %2312 = vmatprep.subr.mxu0 0.0
  %2313 = vmatpush1.xpose.msra.mxu0 0.0
  %2314 = vmatprep.subr.mxu0 0.0
  %2315 = vmatpush1.xpose.msra.mxu0 0.0
  %2316 = vmatprep.subr.mxu0 0.0
  %2317 = vmatpush1.xpose.msra.mxu0 0.0
  %2318 = vmatprep.subr.mxu0 0.0
  %2319 = vmatpush1.xpose.msra.mxu0 0.0
  %2320 = vmatprep.subr.mxu0 0.0
  %2321 = vmatpush1.xpose.msra.mxu0 0.0
  %2322 = vmatprep.subr.mxu0 0.0
  %2323 = vmatpush1.xpose.msra.mxu0 0.0
  %2324 = vmatprep.subr.mxu0 0.0
  %2325 = vmatpush1.xpose.msra.mxu0 0.0
  %2326 = vmatprep.subr.mxu0 0.0
  %2327 = vmatpush1.xpose.msra.mxu0 %v2294
  %2328 = vmatprep.subr.mxu0 0.0
  %2329 = vmatpush2.xpose.msra.mxu0 0.0
  %2330 = vmatprep.subr.mxu0 0.0
  %2331 = vmatpush2.xpose.msra.mxu0 0.0
  %2332 = vmatprep.subr.mxu0 0.0
  %2333 = vmatpush2.xpose.msra.mxu0 0.0
  %2334 = vmatprep.subr.mxu0 0.0
  %2335 = vmatpush2.xpose.msra.mxu0 0.0
  %2336 = vmatprep.subr.mxu0 0.0
  %2337 = vmatpush2.xpose.msra.mxu0 0.0
  %2338 = vmatprep.subr.mxu0 0.0
  %2339 = vmatpush2.xpose.msra.mxu0 0.0
  %2340 = vmatprep.subr.mxu0 0.0
  %2341 = vmatpush2.xpose.msra.mxu0 0.0
  %2342 = vmatprep.subr.mxu0 0.0
  %2343 = vmatpush2.xpose.msra.mxu0 0.0
  %2344 = vmatprep.subr.mxu0 0.0
  %2345 = vmatpush2.xpose.msra.mxu0 0.0
  %2346 = vmatprep.subr.mxu0 0.0
  %2347 = vmatpush2.xpose.msra.mxu0 0.0
  %2348 = vmatprep.subr.mxu0 0.0
  %2349 = vmatpush2.xpose.msra.mxu0 0.0
  %2350 = vmatprep.subr.mxu0 0.0
  %2351 = vmatpush2.xpose.msra.mxu0 0.0
  %2352 = vmatprep.subr.mxu0 0.0
  %2353 = vmatpush2.xpose.msra.mxu0 0.0
  %2354 = vmatprep.subr.mxu0 0.0
  %2355 = vmatpush2.xpose.msra.mxu0 0.0
  %2356 = vmatprep.subr.mxu0 0.0
  %2357 = vmatpush2.xpose.msra.mxu0 0.0
  %2358 = vmatprep.subr.mxu0 0.0
  %2359 = vmatpush2.xpose.msra.mxu0 0.0
  %2360 = vmatprep.mubr.f32.mxu0 0.0
  %2361 = vmatmul.mubr.f32.gmra.mxu0 %v2292
  %v2362 = vpop.f32.mrf.mxu0
  %v2363 = vadd.f32 0.0, %v2362
  %v2364 = vpop.f32.mrf.mxu0
  %2365 = vdwg.mxu0
  %2366 = vrot.lane.b32.xlu0 %v1981, 96
  %v2367 = vpop.permute.xlu0 %2366
  %v2368 = vsel %vm157, %v1981, 0
  %v2370 = vsel %vm157, %v2367, 0
  %2372 = vmatprep.subr.mxu0 0.0
  %2373 = vmatpush1.xpose.msra.mxu0 0.0
  %2374 = vmatprep.subr.mxu0 0.0
  %2375 = vmatpush1.xpose.msra.mxu0 0.0
  %2376 = vmatprep.subr.mxu0 0.0
  %2377 = vmatpush1.xpose.msra.mxu0 0.0
  %2378 = vmatprep.subr.mxu0 0.0
  %2379 = vmatpush1.xpose.msra.mxu0 0.0
  %2380 = vmatprep.subr.mxu0 0.0
  %2381 = vmatpush1.xpose.msra.mxu0 0.0
  %2382 = vmatprep.subr.mxu0 0.0
  %2383 = vmatpush1.xpose.msra.mxu0 0.0
  %2384 = vmatprep.subr.mxu0 0.0
  %2385 = vmatpush1.xpose.msra.mxu0 0.0
  %2386 = vmatprep.subr.mxu0 0.0
  %2387 = vmatpush1.xpose.msra.mxu0 0.0
  %2388 = vmatprep.subr.mxu0 0.0
  %2389 = vmatpush1.xpose.msra.mxu0 0.0
  %2390 = vmatprep.subr.mxu0 0.0
  %2391 = vmatpush1.xpose.msra.mxu0 0.0
  %2392 = vmatprep.subr.mxu0 0.0
  %2393 = vmatpush1.xpose.msra.mxu0 0.0
  %2394 = vmatprep.subr.mxu0 0.0
  %2395 = vmatpush1.xpose.msra.mxu0 0.0
  %2396 = vmatprep.subr.mxu0 0.0
  %2397 = vmatpush1.xpose.msra.mxu0 0.0
  %2398 = vmatprep.subr.mxu0 0.0
  %2399 = vmatpush1.xpose.msra.mxu0 0.0
  %2400 = vmatprep.subr.mxu0 0.0
  %2401 = vmatpush1.xpose.msra.mxu0 0.0
  %2402 = vmatprep.subr.mxu0 0.0
  %2403 = vmatpush1.xpose.msra.mxu0 %v2370
  %2404 = vmatprep.subr.mxu0 0.0
  %2405 = vmatpush2.xpose.msra.mxu0 0.0
  %2406 = vmatprep.subr.mxu0 0.0
  %2407 = vmatpush2.xpose.msra.mxu0 0.0
  %2408 = vmatprep.subr.mxu0 0.0
  %2409 = vmatpush2.xpose.msra.mxu0 0.0
  %2410 = vmatprep.subr.mxu0 0.0
  %2411 = vmatpush2.xpose.msra.mxu0 0.0
  %2412 = vmatprep.subr.mxu0 0.0
  %2413 = vmatpush2.xpose.msra.mxu0 0.0
  %2414 = vmatprep.subr.mxu0 0.0
  %2415 = vmatpush2.xpose.msra.mxu0 0.0
  %2416 = vmatprep.subr.mxu0 0.0
  %2417 = vmatpush2.xpose.msra.mxu0 0.0
  %2418 = vmatprep.subr.mxu0 0.0
  %2419 = vmatpush2.xpose.msra.mxu0 0.0
  %2420 = vmatprep.subr.mxu0 0.0
  %2421 = vmatpush2.xpose.msra.mxu0 0.0
  %2422 = vmatprep.subr.mxu0 0.0
  %2423 = vmatpush2.xpose.msra.mxu0 0.0
  %2424 = vmatprep.subr.mxu0 0.0
  %2425 = vmatpush2.xpose.msra.mxu0 0.0
  %2426 = vmatprep.subr.mxu0 0.0
  %2427 = vmatpush2.xpose.msra.mxu0 0.0
  %2428 = vmatprep.subr.mxu0 0.0
  %2429 = vmatpush2.xpose.msra.mxu0 0.0
  %2430 = vmatprep.subr.mxu0 0.0
  %2431 = vmatpush2.xpose.msra.mxu0 0.0
  %2432 = vmatprep.subr.mxu0 0.0
  %2433 = vmatpush2.xpose.msra.mxu0 0.0
  %2434 = vmatprep.subr.mxu0 0.0
  %2435 = vmatpush2.xpose.msra.mxu0 0.0
  %2436 = vmatprep.mubr.f32.mxu0 0.0
  %2437 = vmatmul.mubr.f32.gmra.mxu0 %v2368
  %v2438 = vpop.f32.mrf.mxu0
  %v2439 = vadd.f32 0.0, %v2438
  %v2440 = vpop.f32.mrf.mxu0
  %2441 = vdwg.mxu0
  %2442 = vrot.lane.b32.xlu0 %v1983, 96
  %v2443 = vpop.permute.xlu0 %2442
  %v2444 = vsel %vm157, %v1983, 0
  %v2446 = vsel %vm157, %v2443, 0
  %2448 = vmatprep.subr.mxu0 0.0
  %2449 = vmatpush1.xpose.msra.mxu0 0.0
  %2450 = vmatprep.subr.mxu0 0.0
  %2451 = vmatpush1.xpose.msra.mxu0 0.0
  %2452 = vmatprep.subr.mxu0 0.0
  %2453 = vmatpush1.xpose.msra.mxu0 0.0
  %2454 = vmatprep.subr.mxu0 0.0
  %2455 = vmatpush1.xpose.msra.mxu0 0.0
  %2456 = vmatprep.subr.mxu0 0.0
  %2457 = vmatpush1.xpose.msra.mxu0 0.0
  %2458 = vmatprep.subr.mxu0 0.0
  %2459 = vmatpush1.xpose.msra.mxu0 0.0
  %2460 = vmatprep.subr.mxu0 0.0
  %2461 = vmatpush1.xpose.msra.mxu0 0.0
  %2462 = vmatprep.subr.mxu0 0.0
  %2463 = vmatpush1.xpose.msra.mxu0 0.0
  %2464 = vmatprep.subr.mxu0 0.0
  %2465 = vmatpush1.xpose.msra.mxu0 0.0
  %2466 = vmatprep.subr.mxu0 0.0
  %2467 = vmatpush1.xpose.msra.mxu0 0.0
  %2468 = vmatprep.subr.mxu0 0.0
  %2469 = vmatpush1.xpose.msra.mxu0 0.0
  %2470 = vmatprep.subr.mxu0 0.0
  %2471 = vmatpush1.xpose.msra.mxu0 0.0
  %2472 = vmatprep.subr.mxu0 0.0
  %2473 = vmatpush1.xpose.msra.mxu0 0.0
  %2474 = vmatprep.subr.mxu0 0.0
  %2475 = vmatpush1.xpose.msra.mxu0 0.0
  %2476 = vmatprep.subr.mxu0 0.0
  %2477 = vmatpush1.xpose.msra.mxu0 0.0
  %2478 = vmatprep.subr.mxu0 0.0
  %2479 = vmatpush1.xpose.msra.mxu0 %v2446
  %2480 = vmatprep.subr.mxu0 0.0
  %2481 = vmatpush2.xpose.msra.mxu0 0.0
  %2482 = vmatprep.subr.mxu0 0.0
  %2483 = vmatpush2.xpose.msra.mxu0 0.0
  %2484 = vmatprep.subr.mxu0 0.0
  %2485 = vmatpush2.xpose.msra.mxu0 0.0
  %2486 = vmatprep.subr.mxu0 0.0
  %2487 = vmatpush2.xpose.msra.mxu0 0.0
  %2488 = vmatprep.subr.mxu0 0.0
  %2489 = vmatpush2.xpose.msra.mxu0 0.0
  %2490 = vmatprep.subr.mxu0 0.0
  %2491 = vmatpush2.xpose.msra.mxu0 0.0
  %2492 = vmatprep.subr.mxu0 0.0
  %2493 = vmatpush2.xpose.msra.mxu0 0.0
  %2494 = vmatprep.subr.mxu0 0.0
  %2495 = vmatpush2.xpose.msra.mxu0 0.0
  %2496 = vmatprep.subr.mxu0 0.0
  %2497 = vmatpush2.xpose.msra.mxu0 0.0
  %2498 = vmatprep.subr.mxu0 0.0
  %2499 = vmatpush2.xpose.msra.mxu0 0.0
  %2500 = vmatprep.subr.mxu0 0.0
  %2501 = vmatpush2.xpose.msra.mxu0 0.0
  %2502 = vmatprep.subr.mxu0 0.0
  %2503 = vmatpush2.xpose.msra.mxu0 0.0
  %2504 = vmatprep.subr.mxu0 0.0
  %2505 = vmatpush2.xpose.msra.mxu0 0.0
  %2506 = vmatprep.subr.mxu0 0.0
  %2507 = vmatpush2.xpose.msra.mxu0 0.0
  %2508 = vmatprep.subr.mxu0 0.0
  %2509 = vmatpush2.xpose.msra.mxu0 0.0
  %2510 = vmatprep.subr.mxu0 0.0
  %2511 = vmatpush2.xpose.msra.mxu0 0.0
  %2512 = vmatprep.mubr.f32.mxu0 0.0
  %2513 = vmatmul.mubr.f32.gmra.mxu0 %v2444
  %v2514 = vpop.f32.mrf.mxu0
  %v2515 = vadd.f32 0.0, %v2514
  %v2516 = vpop.f32.mrf.mxu0
  %2517 = vdwg.mxu0
  %2518 = vrot.lane.b32.xlu0 %v1985, 96
  %v2519 = vpop.permute.xlu0 %2518
  %v2520 = vsel %vm157, %v1985, 0
  %v2522 = vsel %vm157, %v2519, 0
  %2524 = vmatprep.subr.mxu0 0.0
  %2525 = vmatpush1.xpose.msra.mxu0 0.0
  %2526 = vmatprep.subr.mxu0 0.0
  %2527 = vmatpush1.xpose.msra.mxu0 0.0
  %2528 = vmatprep.subr.mxu0 0.0
  %2529 = vmatpush1.xpose.msra.mxu0 0.0
  %2530 = vmatprep.subr.mxu0 0.0
  %2531 = vmatpush1.xpose.msra.mxu0 0.0
  %2532 = vmatprep.subr.mxu0 0.0
  %2533 = vmatpush1.xpose.msra.mxu0 0.0
  %2534 = vmatprep.subr.mxu0 0.0
  %2535 = vmatpush1.xpose.msra.mxu0 0.0
  %2536 = vmatprep.subr.mxu0 0.0
  %2537 = vmatpush1.xpose.msra.mxu0 0.0
  %2538 = vmatprep.subr.mxu0 0.0
  %2539 = vmatpush1.xpose.msra.mxu0 0.0
  %2540 = vmatprep.subr.mxu0 0.0
  %2541 = vmatpush1.xpose.msra.mxu0 0.0
  %2542 = vmatprep.subr.mxu0 0.0
  %2543 = vmatpush1.xpose.msra.mxu0 0.0
  %2544 = vmatprep.subr.mxu0 0.0
  %2545 = vmatpush1.xpose.msra.mxu0 0.0
  %2546 = vmatprep.subr.mxu0 0.0
  %2547 = vmatpush1.xpose.msra.mxu0 0.0
  %2548 = vmatprep.subr.mxu0 0.0
  %2549 = vmatpush1.xpose.msra.mxu0 0.0
  %2550 = vmatprep.subr.mxu0 0.0
  %2551 = vmatpush1.xpose.msra.mxu0 0.0
  %2552 = vmatprep.subr.mxu0 0.0
  %2553 = vmatpush1.xpose.msra.mxu0 0.0
  %2554 = vmatprep.subr.mxu0 0.0
  %2555 = vmatpush1.xpose.msra.mxu0 %v2522
  %2556 = vmatprep.subr.mxu0 0.0
  %2557 = vmatpush2.xpose.msra.mxu0 0.0
  %2558 = vmatprep.subr.mxu0 0.0
  %2559 = vmatpush2.xpose.msra.mxu0 0.0
  %2560 = vmatprep.subr.mxu0 0.0
  %2561 = vmatpush2.xpose.msra.mxu0 0.0
  %2562 = vmatprep.subr.mxu0 0.0
  %2563 = vmatpush2.xpose.msra.mxu0 0.0
  %2564 = vmatprep.subr.mxu0 0.0
  %2565 = vmatpush2.xpose.msra.mxu0 0.0
  %2566 = vmatprep.subr.mxu0 0.0
  %2567 = vmatpush2.xpose.msra.mxu0 0.0
  %2568 = vmatprep.subr.mxu0 0.0
  %2569 = vmatpush2.xpose.msra.mxu0 0.0
  %2570 = vmatprep.subr.mxu0 0.0
  %2571 = vmatpush2.xpose.msra.mxu0 0.0
  %2572 = vmatprep.subr.mxu0 0.0
  %2573 = vmatpush2.xpose.msra.mxu0 0.0
  %2574 = vmatprep.subr.mxu0 0.0
  %2575 = vmatpush2.xpose.msra.mxu0 0.0
  %2576 = vmatprep.subr.mxu0 0.0
  %2577 = vmatpush2.xpose.msra.mxu0 0.0
  %2578 = vmatprep.subr.mxu0 0.0
  %2579 = vmatpush2.xpose.msra.mxu0 0.0
  %2580 = vmatprep.subr.mxu0 0.0
  %2581 = vmatpush2.xpose.msra.mxu0 0.0
  %2582 = vmatprep.subr.mxu0 0.0
  %2583 = vmatpush2.xpose.msra.mxu0 0.0
  %2584 = vmatprep.subr.mxu0 0.0
  %2585 = vmatpush2.xpose.msra.mxu0 0.0
  %2586 = vmatprep.subr.mxu0 0.0
  %2587 = vmatpush2.xpose.msra.mxu0 0.0
  %2588 = vmatprep.mubr.f32.mxu0 0.0
  %2589 = vmatmul.mubr.f32.gmra.mxu0 %v2520
  %v2590 = vpop.f32.mrf.mxu0
  %v2591 = vadd.f32 0.0, %v2590
  %v2592 = vpop.f32.mrf.mxu0
  %2593 = vdwg.mxu0
  %v2594 = vsel %vm157, %v2059, -inf
  %2595 = vmax.xlane.f32.xlu0 %v2594
  %v2596 = vpop.xlane.xlu0 %2595
  %v2597 = vsel %vm157, %v2135, -inf
  %2598 = vmax.xlane.f32.xlu0 %v2597
  %v2599 = vpop.xlane.xlu0 %2598
  %v2600 = vsel %vm157, %v2211, -inf
  %2601 = vmax.xlane.f32.xlu0 %v2600
  %v2602 = vpop.xlane.xlu0 %2601
  %v2603 = vsel %vm157, %v2287, -inf
  %2604 = vmax.xlane.f32.xlu0 %v2603
  %v2605 = vpop.xlane.xlu0 %2604
  %v2606 = vsel %vm157, %v2363, -inf
  %2607 = vmax.xlane.f32.xlu0 %v2606
  %v2608 = vpop.xlane.xlu0 %2607
  %v2609 = vsel %vm157, %v2439, -inf
  %2610 = vmax.xlane.f32.xlu0 %v2609
  %v2611 = vpop.xlane.xlu0 %2610
  %v2612 = vsel %vm157, %v2515, -inf
  %2613 = vmax.xlane.f32.xlu0 %v2612
  %v2614 = vpop.xlane.xlu0 %2613
  %v2615 = vsel %vm157, %v2591, -inf
  %2616 = vmax.xlane.f32.xlu0 %v2615
  %v2617 = vpop.xlane.xlu0 %2616
  %v2618 = vsub.f32 %v2059, %v2596
  %v2619 = vsub.f32 %v2135, %v2599
  %v2620 = vsub.f32 %v2211, %v2602
  %v2621 = vsub.f32 %v2287, %v2605
  %v2622 = vsub.f32 %v2363, %v2608
  %v2623 = vsub.f32 %v2439, %v2611
  %v2624 = vsub.f32 %v2515, %v2614
  %v2625 = vsub.f32 %v2591, %v2617
  %v2626 = vmul.f32 %v2618, 1.442695
  %v2627 = vpow.pop %v2626
  %v2628 = vmul.f32 %v2619, 1.442695
  %v2629 = vpow.pop %v2628
  %v2630 = vmul.f32 %v2620, 1.442695
  %v2631 = vpow.pop %v2630
  %v2632 = vmul.f32 %v2621, 1.442695
  %v2633 = vpow.pop %v2632
  %v2634 = vmul.f32 %v2622, 1.442695
  %v2635 = vpow.pop %v2634
  %v2636 = vmul.f32 %v2623, 1.442695
  %v2637 = vpow.pop %v2636
  %v2638 = vmul.f32 %v2624, 1.442695
  %v2639 = vpow.pop %v2638
  %v2640 = vmul.f32 %v2625, 1.442695
  %v2641 = vpow.pop %v2640
  %v2642 = vsel %vm157, %v2627, 0.0
  %2643 = vadd.xlane.f32.xlu0 %v2642
  %v2644 = vpop.xlane.xlu0 %2643
  %v2645 = vsel %vm157, %v2629, 0.0
  %2646 = vadd.xlane.f32.xlu0 %v2645
  %v2647 = vpop.xlane.xlu0 %2646
  %v2648 = vsel %vm157, %v2631, 0.0
  %2649 = vadd.xlane.f32.xlu0 %v2648
  %v2650 = vpop.xlane.xlu0 %2649
  %v2651 = vsel %vm157, %v2633, 0.0
  %2652 = vadd.xlane.f32.xlu0 %v2651
  %v2653 = vpop.xlane.xlu0 %2652
  %v2654 = vsel %vm157, %v2635, 0.0
  %2655 = vadd.xlane.f32.xlu0 %v2654
  %v2656 = vpop.xlane.xlu0 %2655
  %v2657 = vsel %vm157, %v2637, 0.0
  %2658 = vadd.xlane.f32.xlu0 %v2657
  %v2659 = vpop.xlane.xlu0 %2658
  %v2660 = vsel %vm157, %v2639, 0.0
  %2661 = vadd.xlane.f32.xlu0 %v2660
  %v2662 = vpop.xlane.xlu0 %2661
  %v2663 = vsel %vm157, %v2641, 0.0
  %2664 = vadd.xlane.f32.xlu0 %v2663
  %v2665 = vpop.xlane.xlu0 %2664
  %v2666 = vrcp.pop %v2644
  %v2667 = vrcp.pop %v2647
  %v2668 = vrcp.pop %v2650
  %v2669 = vrcp.pop %v2653
  %v2670 = vrcp.pop %v2656
  %v2671 = vrcp.pop %v2659
  %v2672 = vrcp.pop %v2662
  %v2673 = vrcp.pop %v2665
  %v2674 = vmul.f32 %v2627, %v2666
  %v2675 = vmul.f32 %v2629, %v2667
  %v2676 = vmul.f32 %v2631, %v2668
  %v2677 = vmul.f32 %v2633, %v2669
  %v2678 = vmul.f32 %v2635, %v2670
  %v2679 = vmul.f32 %v2637, %v2671
  %v2680 = vmul.f32 %v2639, %v2672
  %v2681 = vmul.f32 %v2641, %v2673
  %v2682 = vadd.f32 %v2674, %v2676
  %v2683 = vadd.f32 %v2675, %v2677
  %v2684 = vadd.f32 %v2682, %v2678
  %v2685 = vadd.f32 %v2683, %v2679
  %v2686 = vadd.f32 %v2684, %v2680
  %v2687 = vadd.f32 %v2685, %v2681
  %v2688 = vmul.f32 %v2686, 0.25
  %v2689 = vmul.f32 %v2687, 0.25
  %v2690 = vadd.f32 %v860, %v2688
  %v2691 = vadd.f32 %v861, %v2689
  %2692 = vrot.lane.b32.xlu0 %v1964, 64
  %v2693 = vpop.permute.xlu0 %2692
  %v2696 = vsel %vm157, %v2674, 0
  %2698 = vmatprep.subr.mxu0 0.0
  %2699 = vmatpush1.msra.mxu0 0.0
  %2700 = vmatprep.subr.mxu0 0.0
  %2701 = vmatpush1.msra.mxu0 0.0
  %2702 = vmatprep.subr.mxu0 0.0
  %2703 = vmatpush1.msra.mxu0 0.0
  %2704 = vmatprep.subr.mxu0 0.0
  %2705 = vmatpush1.msra.mxu0 0.0
  %2706 = vmatprep.subr.mxu0 0.0
  %2707 = vmatpush1.msra.mxu0 0.0
  %2708 = vmatprep.subr.mxu0 0.0
  %2709 = vmatpush1.msra.mxu0 0.0
  %2710 = vmatprep.subr.mxu0 0.0
  %2711 = vmatpush1.msra.mxu0 0.0
  %2712 = vmatprep.subr.mxu0 0.0
  %2713 = vmatpush1.msra.mxu0 0.0
  %2714 = vmatprep.subr.mxu0 0.0
  %2715 = vmatpush1.msra.mxu0 0.0
  %2716 = vmatprep.subr.mxu0 0.0
  %2717 = vmatpush1.msra.mxu0 0.0
  %2718 = vmatprep.subr.mxu0 0.0
  %2719 = vmatpush1.msra.mxu0 0.0
  %2720 = vmatprep.subr.mxu0 0.0
  %2721 = vmatpush1.msra.mxu0 0.0
  %2722 = vmatprep.subr.mxu0 0.0
  %2723 = vmatpush1.msra.mxu0 0.0
  %2724 = vmatprep.subr.mxu0 0.0
  %2725 = vmatpush1.msra.mxu0 0.0
  %2726 = vmatprep.subr.mxu0 0.0
  %2727 = vmatpush1.msra.mxu0 0.0
  %2728 = vmatprep.subr.mxu0 0.0
  %2729 = vmatpush1.msra.mxu0 %v2693
  %2730 = vmatprep.subr.mxu0 0.0
  %2731 = vmatpush2.msra.mxu0 0.0
  %2732 = vmatprep.subr.mxu0 0.0
  %2733 = vmatpush2.msra.mxu0 0.0
  %2734 = vmatprep.subr.mxu0 0.0
  %2735 = vmatpush2.msra.mxu0 0.0
  %2736 = vmatprep.subr.mxu0 0.0
  %2737 = vmatpush2.msra.mxu0 0.0
  %2738 = vmatprep.subr.mxu0 0.0
  %2739 = vmatpush2.msra.mxu0 0.0
  %2740 = vmatprep.subr.mxu0 0.0
  %2741 = vmatpush2.msra.mxu0 0.0
  %2742 = vmatprep.subr.mxu0 0.0
  %2743 = vmatpush2.msra.mxu0 0.0
  %2744 = vmatprep.subr.mxu0 0.0
  %2745 = vmatpush2.msra.mxu0 0.0
  %2746 = vmatprep.subr.mxu0 0.0
  %2747 = vmatpush2.msra.mxu0 0.0
  %2748 = vmatprep.subr.mxu0 0.0
  %2749 = vmatpush2.msra.mxu0 0.0
  %2750 = vmatprep.subr.mxu0 0.0
  %2751 = vmatpush2.msra.mxu0 0.0
  %2752 = vmatprep.subr.mxu0 0.0
  %2753 = vmatpush2.msra.mxu0 0.0
  %2754 = vmatprep.subr.mxu0 0.0
  %2755 = vmatpush2.msra.mxu0 0.0
  %2756 = vmatprep.subr.mxu0 0.0
  %2757 = vmatpush2.msra.mxu0 0.0
  %2758 = vmatprep.subr.mxu0 0.0
  %2759 = vmatpush2.msra.mxu0 0.0
  %2760 = vmatprep.subr.mxu0 0.0
  %2761 = vmatpush2.msra.mxu0 0.0
  %2762 = vmatprep.mubr.f32.mxu0 0.0
  %2763 = vmatmul.mubr.f32.gmra.mxu0 %v2696
  %v2764 = vpop.f32.mrf.mxu0
  %v2765 = vadd.f32 0.0, %v2764
  %v2766 = vpop.f32.mrf.mxu0
  %2767 = vdwg.mxu0
  %2768 = vrot.lane.b32.xlu0 %v1969, 64
  %v2769 = vpop.permute.xlu0 %2768
  %v2772 = vsel %vm157, %v2675, 0
  %2774 = vmatprep.subr.mxu0 0.0
  %2775 = vmatpush1.msra.mxu0 0.0
  %2776 = vmatprep.subr.mxu0 0.0
  %2777 = vmatpush1.msra.mxu0 0.0
  %2778 = vmatprep.subr.mxu0 0.0
  %2779 = vmatpush1.msra.mxu0 0.0
  %2780 = vmatprep.subr.mxu0 0.0
  %2781 = vmatpush1.msra.mxu0 0.0
  %2782 = vmatprep.subr.mxu0 0.0
  %2783 = vmatpush1.msra.mxu0 0.0
  %2784 = vmatprep.subr.mxu0 0.0
  %2785 = vmatpush1.msra.mxu0 0.0
  %2786 = vmatprep.subr.mxu0 0.0
  %2787 = vmatpush1.msra.mxu0 0.0
  %2788 = vmatprep.subr.mxu0 0.0
  %2789 = vmatpush1.msra.mxu0 0.0
  %2790 = vmatprep.subr.mxu0 0.0
  %2791 = vmatpush1.msra.mxu0 0.0
  %2792 = vmatprep.subr.mxu0 0.0
  %2793 = vmatpush1.msra.mxu0 0.0
  %2794 = vmatprep.subr.mxu0 0.0
  %2795 = vmatpush1.msra.mxu0 0.0
  %2796 = vmatprep.subr.mxu0 0.0
  %2797 = vmatpush1.msra.mxu0 0.0
  %2798 = vmatprep.subr.mxu0 0.0
  %2799 = vmatpush1.msra.mxu0 0.0
  %2800 = vmatprep.subr.mxu0 0.0
  %2801 = vmatpush1.msra.mxu0 0.0
  %2802 = vmatprep.subr.mxu0 0.0
  %2803 = vmatpush1.msra.mxu0 0.0
  %2804 = vmatprep.subr.mxu0 0.0
  %2805 = vmatpush1.msra.mxu0 %v2769
  %2806 = vmatprep.subr.mxu0 0.0
  %2807 = vmatpush2.msra.mxu0 0.0
  %2808 = vmatprep.subr.mxu0 0.0
  %2809 = vmatpush2.msra.mxu0 0.0
  %2810 = vmatprep.subr.mxu0 0.0
  %2811 = vmatpush2.msra.mxu0 0.0
  %2812 = vmatprep.subr.mxu0 0.0
  %2813 = vmatpush2.msra.mxu0 0.0
  %2814 = vmatprep.subr.mxu0 0.0
  %2815 = vmatpush2.msra.mxu0 0.0
  %2816 = vmatprep.subr.mxu0 0.0
  %2817 = vmatpush2.msra.mxu0 0.0
  %2818 = vmatprep.subr.mxu0 0.0
  %2819 = vmatpush2.msra.mxu0 0.0
  %2820 = vmatprep.subr.mxu0 0.0
  %2821 = vmatpush2.msra.mxu0 0.0
  %2822 = vmatprep.subr.mxu0 0.0
  %2823 = vmatpush2.msra.mxu0 0.0
  %2824 = vmatprep.subr.mxu0 0.0
  %2825 = vmatpush2.msra.mxu0 0.0
  %2826 = vmatprep.subr.mxu0 0.0
  %2827 = vmatpush2.msra.mxu0 0.0
  %2828 = vmatprep.subr.mxu0 0.0
  %2829 = vmatpush2.msra.mxu0 0.0
  %2830 = vmatprep.subr.mxu0 0.0
  %2831 = vmatpush2.msra.mxu0 0.0
  %2832 = vmatprep.subr.mxu0 0.0
  %2833 = vmatpush2.msra.mxu0 0.0
  %2834 = vmatprep.subr.mxu0 0.0
  %2835 = vmatpush2.msra.mxu0 0.0
  %2836 = vmatprep.subr.mxu0 0.0
  %2837 = vmatpush2.msra.mxu0 0.0
  %2838 = vmatprep.mubr.f32.mxu0 0.0
  %2839 = vmatmul.mubr.f32.gmra.mxu0 %v2772
  %v2840 = vpop.f32.mrf.mxu0
  %v2841 = vadd.f32 0.0, %v2840
  %v2842 = vpop.f32.mrf.mxu0
  %2843 = vdwg.mxu0
  %2844 = vrot.lane.b32.xlu0 %v1975, 64
  %v2845 = vpop.permute.xlu0 %2844
  %v2848 = vsel %vm157, %v2676, 0
  %2850 = vmatprep.subr.mxu0 0.0
  %2851 = vmatpush1.msra.mxu0 0.0
  %2852 = vmatprep.subr.mxu0 0.0
  %2853 = vmatpush1.msra.mxu0 0.0
  %2854 = vmatprep.subr.mxu0 0.0
  %2855 = vmatpush1.msra.mxu0 0.0
  %2856 = vmatprep.subr.mxu0 0.0
  %2857 = vmatpush1.msra.mxu0 0.0
  %2858 = vmatprep.subr.mxu0 0.0
  %2859 = vmatpush1.msra.mxu0 0.0
  %2860 = vmatprep.subr.mxu0 0.0
  %2861 = vmatpush1.msra.mxu0 0.0
  %2862 = vmatprep.subr.mxu0 0.0
  %2863 = vmatpush1.msra.mxu0 0.0
  %2864 = vmatprep.subr.mxu0 0.0
  %2865 = vmatpush1.msra.mxu0 0.0
  %2866 = vmatprep.subr.mxu0 0.0
  %2867 = vmatpush1.msra.mxu0 0.0
  %2868 = vmatprep.subr.mxu0 0.0
  %2869 = vmatpush1.msra.mxu0 0.0
  %2870 = vmatprep.subr.mxu0 0.0
  %2871 = vmatpush1.msra.mxu0 0.0
  %2872 = vmatprep.subr.mxu0 0.0
  %2873 = vmatpush1.msra.mxu0 0.0
  %2874 = vmatprep.subr.mxu0 0.0
  %2875 = vmatpush1.msra.mxu0 0.0
  %2876 = vmatprep.subr.mxu0 0.0
  %2877 = vmatpush1.msra.mxu0 0.0
  %2878 = vmatprep.subr.mxu0 0.0
  %2879 = vmatpush1.msra.mxu0 0.0
  %2880 = vmatprep.subr.mxu0 0.0
  %2881 = vmatpush1.msra.mxu0 %v2845
  %2882 = vmatprep.subr.mxu0 0.0
  %2883 = vmatpush2.msra.mxu0 0.0
  %2884 = vmatprep.subr.mxu0 0.0
  %2885 = vmatpush2.msra.mxu0 0.0
  %2886 = vmatprep.subr.mxu0 0.0
  %2887 = vmatpush2.msra.mxu0 0.0
  %2888 = vmatprep.subr.mxu0 0.0
  %2889 = vmatpush2.msra.mxu0 0.0
  %2890 = vmatprep.subr.mxu0 0.0
  %2891 = vmatpush2.msra.mxu0 0.0
  %2892 = vmatprep.subr.mxu0 0.0
  %2893 = vmatpush2.msra.mxu0 0.0
  %2894 = vmatprep.subr.mxu0 0.0
  %2895 = vmatpush2.msra.mxu0 0.0
  %2896 = vmatprep.subr.mxu0 0.0
  %2897 = vmatpush2.msra.mxu0 0.0
  %2898 = vmatprep.subr.mxu0 0.0
  %2899 = vmatpush2.msra.mxu0 0.0
  %2900 = vmatprep.subr.mxu0 0.0
  %2901 = vmatpush2.msra.mxu0 0.0
  %2902 = vmatprep.subr.mxu0 0.0
  %2903 = vmatpush2.msra.mxu0 0.0
  %2904 = vmatprep.subr.mxu0 0.0
  %2905 = vmatpush2.msra.mxu0 0.0
  %2906 = vmatprep.subr.mxu0 0.0
  %2907 = vmatpush2.msra.mxu0 0.0
  %2908 = vmatprep.subr.mxu0 0.0
  %2909 = vmatpush2.msra.mxu0 0.0
  %2910 = vmatprep.subr.mxu0 0.0
  %2911 = vmatpush2.msra.mxu0 0.0
  %2912 = vmatprep.subr.mxu0 0.0
  %2913 = vmatpush2.msra.mxu0 0.0
  %2914 = vmatprep.mubr.f32.mxu0 0.0
  %2915 = vmatmul.mubr.f32.gmra.mxu0 %v2848
  %v2916 = vpop.f32.mrf.mxu0
  %v2917 = vadd.f32 0.0, %v2916
  %v2918 = vpop.f32.mrf.mxu0
  %2919 = vdwg.mxu0
  %2920 = vrot.lane.b32.xlu0 %v1977, 64
  %v2921 = vpop.permute.xlu0 %2920
  %v2924 = vsel %vm157, %v2677, 0
  %2926 = vmatprep.subr.mxu0 0.0
  %2927 = vmatpush1.msra.mxu0 0.0
  %2928 = vmatprep.subr.mxu0 0.0
  %2929 = vmatpush1.msra.mxu0 0.0
  %2930 = vmatprep.subr.mxu0 0.0
  %2931 = vmatpush1.msra.mxu0 0.0
  %2932 = vmatprep.subr.mxu0 0.0
  %2933 = vmatpush1.msra.mxu0 0.0
  %2934 = vmatprep.subr.mxu0 0.0
  %2935 = vmatpush1.msra.mxu0 0.0
  %2936 = vmatprep.subr.mxu0 0.0
  %2937 = vmatpush1.msra.mxu0 0.0
  %2938 = vmatprep.subr.mxu0 0.0
  %2939 = vmatpush1.msra.mxu0 0.0
  %2940 = vmatprep.subr.mxu0 0.0
  %2941 = vmatpush1.msra.mxu0 0.0
  %2942 = vmatprep.subr.mxu0 0.0
  %2943 = vmatpush1.msra.mxu0 0.0
  %2944 = vmatprep.subr.mxu0 0.0
  %2945 = vmatpush1.msra.mxu0 0.0
  %2946 = vmatprep.subr.mxu0 0.0
  %2947 = vmatpush1.msra.mxu0 0.0
  %2948 = vmatprep.subr.mxu0 0.0
  %2949 = vmatpush1.msra.mxu0 0.0
  %2950 = vmatprep.subr.mxu0 0.0
  %2951 = vmatpush1.msra.mxu0 0.0
  %2952 = vmatprep.subr.mxu0 0.0
  %2953 = vmatpush1.msra.mxu0 0.0
  %2954 = vmatprep.subr.mxu0 0.0
  %2955 = vmatpush1.msra.mxu0 0.0
  %2956 = vmatprep.subr.mxu0 0.0
  %2957 = vmatpush1.msra.mxu0 %v2921
  %2958 = vmatprep.subr.mxu0 0.0
  %2959 = vmatpush2.msra.mxu0 0.0
  %2960 = vmatprep.subr.mxu0 0.0
  %2961 = vmatpush2.msra.mxu0 0.0
  %2962 = vmatprep.subr.mxu0 0.0
  %2963 = vmatpush2.msra.mxu0 0.0
  %2964 = vmatprep.subr.mxu0 0.0
  %2965 = vmatpush2.msra.mxu0 0.0
  %2966 = vmatprep.subr.mxu0 0.0
  %2967 = vmatpush2.msra.mxu0 0.0
  %2968 = vmatprep.subr.mxu0 0.0
  %2969 = vmatpush2.msra.mxu0 0.0
  %2970 = vmatprep.subr.mxu0 0.0
  %2971 = vmatpush2.msra.mxu0 0.0
  %2972 = vmatprep.subr.mxu0 0.0
  %2973 = vmatpush2.msra.mxu0 0.0
  %2974 = vmatprep.subr.mxu0 0.0
  %2975 = vmatpush2.msra.mxu0 0.0
  %2976 = vmatprep.subr.mxu0 0.0
  %2977 = vmatpush2.msra.mxu0 0.0
  %2978 = vmatprep.subr.mxu0 0.0
  %2979 = vmatpush2.msra.mxu0 0.0
  %2980 = vmatprep.subr.mxu0 0.0
  %2981 = vmatpush2.msra.mxu0 0.0
  %2982 = vmatprep.subr.mxu0 0.0
  %2983 = vmatpush2.msra.mxu0 0.0
  %2984 = vmatprep.subr.mxu0 0.0
  %2985 = vmatpush2.msra.mxu0 0.0
  %2986 = vmatprep.subr.mxu0 0.0
  %2987 = vmatpush2.msra.mxu0 0.0
  %2988 = vmatprep.subr.mxu0 0.0
  %2989 = vmatpush2.msra.mxu0 0.0
  %2990 = vmatprep.mubr.f32.mxu0 0.0
  %2991 = vmatmul.mubr.f32.gmra.mxu0 %v2924
  %v2992 = vpop.f32.mrf.mxu0
  %v2993 = vadd.f32 0.0, %v2992
  %v2994 = vpop.f32.mrf.mxu0
  %2995 = vdwg.mxu0
  %2996 = vrot.lane.b32.xlu0 %v1979, 64
  %v2997 = vpop.permute.xlu0 %2996
  %v3000 = vsel %vm157, %v2678, 0
  %3002 = vmatprep.subr.mxu0 0.0
  %3003 = vmatpush1.msra.mxu0 0.0
  %3004 = vmatprep.subr.mxu0 0.0
  %3005 = vmatpush1.msra.mxu0 0.0
  %3006 = vmatprep.subr.mxu0 0.0
  %3007 = vmatpush1.msra.mxu0 0.0
  %3008 = vmatprep.subr.mxu0 0.0
  %3009 = vmatpush1.msra.mxu0 0.0
  %3010 = vmatprep.subr.mxu0 0.0
  %3011 = vmatpush1.msra.mxu0 0.0
  %3012 = vmatprep.subr.mxu0 0.0
  %3013 = vmatpush1.msra.mxu0 0.0
  %3014 = vmatprep.subr.mxu0 0.0
  %3015 = vmatpush1.msra.mxu0 0.0
  %3016 = vmatprep.subr.mxu0 0.0
  %3017 = vmatpush1.msra.mxu0 0.0
  %3018 = vmatprep.subr.mxu0 0.0
  %3019 = vmatpush1.msra.mxu0 0.0
  %3020 = vmatprep.subr.mxu0 0.0
  %3021 = vmatpush1.msra.mxu0 0.0
  %3022 = vmatprep.subr.mxu0 0.0
  %3023 = vmatpush1.msra.mxu0 0.0
  %3024 = vmatprep.subr.mxu0 0.0
  %3025 = vmatpush1.msra.mxu0 0.0
  %3026 = vmatprep.subr.mxu0 0.0
  %3027 = vmatpush1.msra.mxu0 0.0
  %3028 = vmatprep.subr.mxu0 0.0
  %3029 = vmatpush1.msra.mxu0 0.0
  %3030 = vmatprep.subr.mxu0 0.0
  %3031 = vmatpush1.msra.mxu0 0.0
  %3032 = vmatprep.subr.mxu0 0.0
  %3033 = vmatpush1.msra.mxu0 %v2997
  %3034 = vmatprep.subr.mxu0 0.0
  %3035 = vmatpush2.msra.mxu0 0.0
  %3036 = vmatprep.subr.mxu0 0.0
  %3037 = vmatpush2.msra.mxu0 0.0
  %3038 = vmatprep.subr.mxu0 0.0
  %3039 = vmatpush2.msra.mxu0 0.0
  %3040 = vmatprep.subr.mxu0 0.0
  %3041 = vmatpush2.msra.mxu0 0.0
  %3042 = vmatprep.subr.mxu0 0.0
  %3043 = vmatpush2.msra.mxu0 0.0
  %3044 = vmatprep.subr.mxu0 0.0
  %3045 = vmatpush2.msra.mxu0 0.0
  %3046 = vmatprep.subr.mxu0 0.0
  %3047 = vmatpush2.msra.mxu0 0.0
  %3048 = vmatprep.subr.mxu0 0.0
  %3049 = vmatpush2.msra.mxu0 0.0
  %3050 = vmatprep.subr.mxu0 0.0
  %3051 = vmatpush2.msra.mxu0 0.0
  %3052 = vmatprep.subr.mxu0 0.0
  %3053 = vmatpush2.msra.mxu0 0.0
  %3054 = vmatprep.subr.mxu0 0.0
  %3055 = vmatpush2.msra.mxu0 0.0
  %3056 = vmatprep.subr.mxu0 0.0
  %3057 = vmatpush2.msra.mxu0 0.0
  %3058 = vmatprep.subr.mxu0 0.0
  %3059 = vmatpush2.msra.mxu0 0.0
  %3060 = vmatprep.subr.mxu0 0.0
  %3061 = vmatpush2.msra.mxu0 0.0
  %3062 = vmatprep.subr.mxu0 0.0
  %3063 = vmatpush2.msra.mxu0 0.0
  %3064 = vmatprep.subr.mxu0 0.0
  %3065 = vmatpush2.msra.mxu0 0.0
  %3066 = vmatprep.mubr.f32.mxu0 0.0
  %3067 = vmatmul.mubr.f32.gmra.mxu0 %v3000
  %v3068 = vpop.f32.mrf.mxu0
  %v3069 = vadd.f32 0.0, %v3068
  %v3070 = vpop.f32.mrf.mxu0
  %3071 = vdwg.mxu0
  %3072 = vrot.lane.b32.xlu0 %v1981, 64
  %v3073 = vpop.permute.xlu0 %3072
  %v3076 = vsel %vm157, %v2679, 0
  %3078 = vmatprep.subr.mxu0 0.0
  %3079 = vmatpush1.msra.mxu0 0.0
  %3080 = vmatprep.subr.mxu0 0.0
  %3081 = vmatpush1.msra.mxu0 0.0
  %3082 = vmatprep.subr.mxu0 0.0
  %3083 = vmatpush1.msra.mxu0 0.0
  %3084 = vmatprep.subr.mxu0 0.0
  %3085 = vmatpush1.msra.mxu0 0.0
  %3086 = vmatprep.subr.mxu0 0.0
  %3087 = vmatpush1.msra.mxu0 0.0
  %3088 = vmatprep.subr.mxu0 0.0
  %3089 = vmatpush1.msra.mxu0 0.0
  %3090 = vmatprep.subr.mxu0 0.0
  %3091 = vmatpush1.msra.mxu0 0.0
  %3092 = vmatprep.subr.mxu0 0.0
  %3093 = vmatpush1.msra.mxu0 0.0
  %3094 = vmatprep.subr.mxu0 0.0
  %3095 = vmatpush1.msra.mxu0 0.0
  %3096 = vmatprep.subr.mxu0 0.0
  %3097 = vmatpush1.msra.mxu0 0.0
  %3098 = vmatprep.subr.mxu0 0.0
  %3099 = vmatpush1.msra.mxu0 0.0
  %3100 = vmatprep.subr.mxu0 0.0
  %3101 = vmatpush1.msra.mxu0 0.0
  %3102 = vmatprep.subr.mxu0 0.0
  %3103 = vmatpush1.msra.mxu0 0.0
  %3104 = vmatprep.subr.mxu0 0.0
  %3105 = vmatpush1.msra.mxu0 0.0
  %3106 = vmatprep.subr.mxu0 0.0
  %3107 = vmatpush1.msra.mxu0 0.0
  %3108 = vmatprep.subr.mxu0 0.0
  %3109 = vmatpush1.msra.mxu0 %v3073
  %3110 = vmatprep.subr.mxu0 0.0
  %3111 = vmatpush2.msra.mxu0 0.0
  %3112 = vmatprep.subr.mxu0 0.0
  %3113 = vmatpush2.msra.mxu0 0.0
  %3114 = vmatprep.subr.mxu0 0.0
  %3115 = vmatpush2.msra.mxu0 0.0
  %3116 = vmatprep.subr.mxu0 0.0
  %3117 = vmatpush2.msra.mxu0 0.0
  %3118 = vmatprep.subr.mxu0 0.0
  %3119 = vmatpush2.msra.mxu0 0.0
  %3120 = vmatprep.subr.mxu0 0.0
  %3121 = vmatpush2.msra.mxu0 0.0
  %3122 = vmatprep.subr.mxu0 0.0
  %3123 = vmatpush2.msra.mxu0 0.0
  %3124 = vmatprep.subr.mxu0 0.0
  %3125 = vmatpush2.msra.mxu0 0.0
  %3126 = vmatprep.subr.mxu0 0.0
  %3127 = vmatpush2.msra.mxu0 0.0
  %3128 = vmatprep.subr.mxu0 0.0
  %3129 = vmatpush2.msra.mxu0 0.0
  %3130 = vmatprep.subr.mxu0 0.0
  %3131 = vmatpush2.msra.mxu0 0.0
  %3132 = vmatprep.subr.mxu0 0.0
  %3133 = vmatpush2.msra.mxu0 0.0
  %3134 = vmatprep.subr.mxu0 0.0
  %3135 = vmatpush2.msra.mxu0 0.0
  %3136 = vmatprep.subr.mxu0 0.0
  %3137 = vmatpush2.msra.mxu0 0.0
  %3138 = vmatprep.subr.mxu0 0.0
  %3139 = vmatpush2.msra.mxu0 0.0
  %3140 = vmatprep.subr.mxu0 0.0
  %3141 = vmatpush2.msra.mxu0 0.0
  %3142 = vmatprep.mubr.f32.mxu0 0.0
  %3143 = vmatmul.mubr.f32.gmra.mxu0 %v3076
  %v3144 = vpop.f32.mrf.mxu0
  %v3145 = vadd.f32 0.0, %v3144
  %v3146 = vpop.f32.mrf.mxu0
  %3147 = vdwg.mxu0
  %3148 = vrot.lane.b32.xlu0 %v1983, 64
  %v3149 = vpop.permute.xlu0 %3148
  %v3152 = vsel %vm157, %v2680, 0
  %3154 = vmatprep.subr.mxu0 0.0
  %3155 = vmatpush1.msra.mxu0 0.0
  %3156 = vmatprep.subr.mxu0 0.0
  %3157 = vmatpush1.msra.mxu0 0.0
  %3158 = vmatprep.subr.mxu0 0.0
  %3159 = vmatpush1.msra.mxu0 0.0
  %3160 = vmatprep.subr.mxu0 0.0
  %3161 = vmatpush1.msra.mxu0 0.0
  %3162 = vmatprep.subr.mxu0 0.0
  %3163 = vmatpush1.msra.mxu0 0.0
  %3164 = vmatprep.subr.mxu0 0.0
  %3165 = vmatpush1.msra.mxu0 0.0
  %3166 = vmatprep.subr.mxu0 0.0
  %3167 = vmatpush1.msra.mxu0 0.0
  %3168 = vmatprep.subr.mxu0 0.0
  %3169 = vmatpush1.msra.mxu0 0.0
  %3170 = vmatprep.subr.mxu0 0.0
  %3171 = vmatpush1.msra.mxu0 0.0
  %3172 = vmatprep.subr.mxu0 0.0
  %3173 = vmatpush1.msra.mxu0 0.0
  %3174 = vmatprep.subr.mxu0 0.0
  %3175 = vmatpush1.msra.mxu0 0.0
  %3176 = vmatprep.subr.mxu0 0.0
  %3177 = vmatpush1.msra.mxu0 0.0
  %3178 = vmatprep.subr.mxu0 0.0
  %3179 = vmatpush1.msra.mxu0 0.0
  %3180 = vmatprep.subr.mxu0 0.0
  %3181 = vmatpush1.msra.mxu0 0.0
  %3182 = vmatprep.subr.mxu0 0.0
  %3183 = vmatpush1.msra.mxu0 0.0
  %3184 = vmatprep.subr.mxu0 0.0
  %3185 = vmatpush1.msra.mxu0 %v3149
  %3186 = vmatprep.subr.mxu0 0.0
  %3187 = vmatpush2.msra.mxu0 0.0
  %3188 = vmatprep.subr.mxu0 0.0
  %3189 = vmatpush2.msra.mxu0 0.0
  %3190 = vmatprep.subr.mxu0 0.0
  %3191 = vmatpush2.msra.mxu0 0.0
  %3192 = vmatprep.subr.mxu0 0.0
  %3193 = vmatpush2.msra.mxu0 0.0
  %3194 = vmatprep.subr.mxu0 0.0
  %3195 = vmatpush2.msra.mxu0 0.0
  %3196 = vmatprep.subr.mxu0 0.0
  %3197 = vmatpush2.msra.mxu0 0.0
  %3198 = vmatprep.subr.mxu0 0.0
  %3199 = vmatpush2.msra.mxu0 0.0
  %3200 = vmatprep.subr.mxu0 0.0
  %3201 = vmatpush2.msra.mxu0 0.0
  %3202 = vmatprep.subr.mxu0 0.0
  %3203 = vmatpush2.msra.mxu0 0.0
  %3204 = vmatprep.subr.mxu0 0.0
  %3205 = vmatpush2.msra.mxu0 0.0
  %3206 = vmatprep.subr.mxu0 0.0
  %3207 = vmatpush2.msra.mxu0 0.0
  %3208 = vmatprep.subr.mxu0 0.0
  %3209 = vmatpush2.msra.mxu0 0.0
  %3210 = vmatprep.subr.mxu0 0.0
  %3211 = vmatpush2.msra.mxu0 0.0
  %3212 = vmatprep.subr.mxu0 0.0
  %3213 = vmatpush2.msra.mxu0 0.0
  %3214 = vmatprep.subr.mxu0 0.0
  %3215 = vmatpush2.msra.mxu0 0.0
  %3216 = vmatprep.subr.mxu0 0.0
  %3217 = vmatpush2.msra.mxu0 0.0
  %3218 = vmatprep.mubr.f32.mxu0 0.0
  %3219 = vmatmul.mubr.f32.gmra.mxu0 %v3152
  %v3220 = vpop.f32.mrf.mxu0
  %v3221 = vadd.f32 0.0, %v3220
  %v3222 = vpop.f32.mrf.mxu0
  %3223 = vdwg.mxu0
  %3224 = vrot.lane.b32.xlu0 %v1985, 64
  %v3225 = vpop.permute.xlu0 %3224
  %v3228 = vsel %vm157, %v2681, 0
  %3230 = vmatprep.subr.mxu0 0.0
  %3231 = vmatpush1.msra.mxu0 0.0
  %3232 = vmatprep.subr.mxu0 0.0
  %3233 = vmatpush1.msra.mxu0 0.0
  %3234 = vmatprep.subr.mxu0 0.0
  %3235 = vmatpush1.msra.mxu0 0.0
  %3236 = vmatprep.subr.mxu0 0.0
  %3237 = vmatpush1.msra.mxu0 0.0
  %3238 = vmatprep.subr.mxu0 0.0
  %3239 = vmatpush1.msra.mxu0 0.0
  %3240 = vmatprep.subr.mxu0 0.0
  %3241 = vmatpush1.msra.mxu0 0.0
  %3242 = vmatprep.subr.mxu0 0.0
  %3243 = vmatpush1.msra.mxu0 0.0
  %3244 = vmatprep.subr.mxu0 0.0
  %3245 = vmatpush1.msra.mxu0 0.0
  %3246 = vmatprep.subr.mxu0 0.0
  %3247 = vmatpush1.msra.mxu0 0.0
  %3248 = vmatprep.subr.mxu0 0.0
  %3249 = vmatpush1.msra.mxu0 0.0
  %3250 = vmatprep.subr.mxu0 0.0
  %3251 = vmatpush1.msra.mxu0 0.0
  %3252 = vmatprep.subr.mxu0 0.0
  %3253 = vmatpush1.msra.mxu0 0.0
  %3254 = vmatprep.subr.mxu0 0.0
  %3255 = vmatpush1.msra.mxu0 0.0
  %3256 = vmatprep.subr.mxu0 0.0
  %3257 = vmatpush1.msra.mxu0 0.0
  %3258 = vmatprep.subr.mxu0 0.0
  %3259 = vmatpush1.msra.mxu0 0.0
  %3260 = vmatprep.subr.mxu0 0.0
  %3261 = vmatpush1.msra.mxu0 %v3225
  %3262 = vmatprep.subr.mxu0 0.0
  %3263 = vmatpush2.msra.mxu0 0.0
  %3264 = vmatprep.subr.mxu0 0.0
  %3265 = vmatpush2.msra.mxu0 0.0
  %3266 = vmatprep.subr.mxu0 0.0
  %3267 = vmatpush2.msra.mxu0 0.0
  %3268 = vmatprep.subr.mxu0 0.0
  %3269 = vmatpush2.msra.mxu0 0.0
  %3270 = vmatprep.subr.mxu0 0.0
  %3271 = vmatpush2.msra.mxu0 0.0
  %3272 = vmatprep.subr.mxu0 0.0
  %3273 = vmatpush2.msra.mxu0 0.0
  %3274 = vmatprep.subr.mxu0 0.0
  %3275 = vmatpush2.msra.mxu0 0.0
  %3276 = vmatprep.subr.mxu0 0.0
  %3277 = vmatpush2.msra.mxu0 0.0
  %3278 = vmatprep.subr.mxu0 0.0
  %3279 = vmatpush2.msra.mxu0 0.0
  %3280 = vmatprep.subr.mxu0 0.0
  %3281 = vmatpush2.msra.mxu0 0.0
  %3282 = vmatprep.subr.mxu0 0.0
  %3283 = vmatpush2.msra.mxu0 0.0
  %3284 = vmatprep.subr.mxu0 0.0
  %3285 = vmatpush2.msra.mxu0 0.0
  %3286 = vmatprep.subr.mxu0 0.0
  %3287 = vmatpush2.msra.mxu0 0.0
  %3288 = vmatprep.subr.mxu0 0.0
  %3289 = vmatpush2.msra.mxu0 0.0
  %3290 = vmatprep.subr.mxu0 0.0
  %3291 = vmatpush2.msra.mxu0 0.0
  %3292 = vmatprep.subr.mxu0 0.0
  %3293 = vmatpush2.msra.mxu0 0.0
  %3294 = vmatprep.mubr.f32.mxu0 0.0
  %3295 = vmatmul.mubr.f32.gmra.mxu0 %v3228
  %v3296 = vpop.f32.mrf.mxu0
  %v3297 = vadd.f32 0.0, %v3296
  %v3298 = vpop.f32.mrf.mxu0
  %3299 = vdwg.mxu0
  %3302 = vrot.lane.b32.xlu0 %v2917, 8
  %v3303 = vpop.permute.xlu0 %3302
  %3304 = vrot.lane.b32.xlu0 %v2993, 8
  %v3305 = vpop.permute.xlu0 %3304
  %3310 = vrot.lane.b32.xlu0 %v3069, 16
  %v3311 = vpop.permute.xlu0 %3310
  %3312 = vrot.lane.b32.xlu0 %v3145, 16
  %v3313 = vpop.permute.xlu0 %3312
  %3318 = vrot.lane.b32.xlu0 %v3221, 24
  %v3319 = vpop.permute.xlu0 %3318
  %3320 = vrot.lane.b32.xlu0 %v3297, 24
  %v3321 = vpop.permute.xlu0 %3320
  %v3324 = vsel %vm157, %v2765, %v3303
  %v3325 = vsel %vm157, %v2841, %v3305
  %v3326 = vsel %vm1496, %v3324, %v3311
  %v3327 = vsel %vm1496, %v3325, %v3313
  %v3328 = vsel %vm1499, %v3326, %v3319
  %v3329 = vsel %vm1499, %v3327, %v3321
  %s3330 = scalar_lea.vmem %s3, 32
  %v3331 = vld [vmem:[%s3330] sm:$0xff]
  %v3332 = vld [vmem:[%s3330 + $0x8] sm:$0xff]
  %v3333 = vld [vmem:[%s3330 + $0x10] sm:$0xff]
  %v3334 = vld [vmem:[%s3330 + $0x18] sm:$0xff]
  %s3335 = scalar_lea.vmem %s4, 1
  %v3336 = vld [vmem:[%s3335] sm:$0x1]
  %v3338 = vlaneseq
  %v3339 = vshrl.u32 %v3338, 7
  %v3340 = vsub.s32 0, %v3339
  %v3341 = vrot.slane %v3336, %v3340
  %v3344 = vsel %vm59, %v3328, 0
  %v3347 = vsel %vm59, %v3329, 0
  %3349 = vmatprep.subr.mxu0 0.0
  %3350 = vmatpush1.msra.mxu0 0.0
  %3351 = vmatprep.subr.mxu0 0.0
  %3352 = vmatpush1.msra.mxu0 0.0
  %3353 = vmatprep.subr.mxu0 0.0
  %3354 = vmatpush1.msra.mxu0 0.0
  %3355 = vmatprep.subr.mxu0 0.0
  %3356 = vmatpush1.msra.mxu0 0.0
  %3357 = vmatprep.subr.mxu0 0.0
  %3358 = vmatpush1.msra.mxu0 0.0
  %3359 = vmatprep.subr.mxu0 0.0
  %3360 = vmatpush1.msra.mxu0 0.0
  %3361 = vmatprep.subr.mxu0 0.0
  %3362 = vmatpush1.msra.mxu0 0.0
  %3363 = vmatprep.subr.mxu0 0.0
  %3364 = vmatpush1.msra.mxu0 0.0
  %3365 = vmatprep.subr.mxu0 0.0
  %3366 = vmatpush1.msra.mxu0 0.0
  %3367 = vmatprep.subr.mxu0 0.0
  %3368 = vmatpush1.msra.mxu0 0.0
  %3369 = vmatprep.subr.mxu0 0.0
  %3370 = vmatpush1.msra.mxu0 0.0
  %3371 = vmatprep.subr.mxu0 0.0
  %3372 = vmatpush1.msra.mxu0 0.0
  %3373 = vmatprep.subr.mxu0 0.0
  %3374 = vmatpush1.msra.mxu0 %v3334
  %3375 = vmatprep.subr.mxu0 0.0
  %3376 = vmatpush1.msra.mxu0 %v3333
  %3377 = vmatprep.subr.mxu0 0.0
  %3378 = vmatpush1.msra.mxu0 %v3332
  %3379 = vmatprep.subr.mxu0 0.0
  %3380 = vmatpush1.msra.mxu0 %v3331
  %3381 = vmatprep.subr.mxu0 0.0
  %3382 = vmatpush2.msra.mxu0 0.0
  %3383 = vmatprep.subr.mxu0 0.0
  %3384 = vmatpush2.msra.mxu0 0.0
  %3385 = vmatprep.subr.mxu0 0.0
  %3386 = vmatpush2.msra.mxu0 0.0
  %3387 = vmatprep.subr.mxu0 0.0
  %3388 = vmatpush2.msra.mxu0 0.0
  %3389 = vmatprep.subr.mxu0 0.0
  %3390 = vmatpush2.msra.mxu0 0.0
  %3391 = vmatprep.subr.mxu0 0.0
  %3392 = vmatpush2.msra.mxu0 0.0
  %3393 = vmatprep.subr.mxu0 0.0
  %3394 = vmatpush2.msra.mxu0 0.0
  %3395 = vmatprep.subr.mxu0 0.0
  %3396 = vmatpush2.msra.mxu0 0.0
  %3397 = vmatprep.subr.mxu0 0.0
  %3398 = vmatpush2.msra.mxu0 0.0
  %3399 = vmatprep.subr.mxu0 0.0
  %3400 = vmatpush2.msra.mxu0 0.0
  %3401 = vmatprep.subr.mxu0 0.0
  %3402 = vmatpush2.msra.mxu0 0.0
  %3403 = vmatprep.subr.mxu0 0.0
  %3404 = vmatpush2.msra.mxu0 0.0
  %3405 = vmatprep.subr.mxu0 0.0
  %3406 = vmatpush2.msra.mxu0 0.0
  %3407 = vmatprep.subr.mxu0 0.0
  %3408 = vmatpush2.msra.mxu0 0.0
  %3409 = vmatprep.subr.mxu0 0.0
  %3410 = vmatpush2.msra.mxu0 0.0
  %3411 = vmatprep.subr.mxu0 0.0
  %3412 = vmatpush2.msra.mxu0 0.0
  %3413 = vmatprep.mubr.f32.mxu0 0.0
  %3414 = vmatmul.mubr.f32.gmra.mxu0 %v3344
  %v3415 = vpop.f32.mrf.mxu0
  %v3416 = vadd.f32 %v3341, %v3415
  %v3417 = vpop.f32.mrf.mxu0
  %3418 = vmatprep.mubr.f32.mxu0 0.0
  %3419 = vmatmul.mubr.f32.gmra.mxu0 %v3347
  %v3420 = vpop.f32.mrf.mxu0
  %v3421 = vadd.f32 %v3341, %v3420
  %v3422 = vpop.f32.mrf.mxu0
  %3423 = vdwg.mxu0
  %v3424 = vadd.f32 %v1876, %v3416
  %v3425 = vadd.f32 %v1877, %v3421
  %s3426 = scalar_lea.vmem %s9, 1
  %v3427 = vld [vmem:[%s3426] sm:$0x1]
  %s3428 = scalar_lea.vmem %s10, 1
  %v3429 = vld [vmem:[%s3428] sm:$0x1]
  %v3430 = vsel %vm59, %v3424, 0.0
  %3431 = vadd.xlane.f32.xlu0 %v3430
  %v3432 = vpop.xlane.xlu0 %3431
  %v3433 = vsel %vm59, %v3425, 0.0
  %3434 = vadd.xlane.f32.xlu0 %v3433
  %v3435 = vpop.xlane.xlu0 %3434
  %v3436 = vmul.f32 %v3432, %v1604
  %v3437 = vmul.f32 %v3435, %v1604
  %v3438 = vsub.f32 %v3424, %v3436
  %v3439 = vsub.f32 %v3425, %v3437
  %v3440 = vmul.f32 %v3438, %v3438
  %v3441 = vmul.f32 %v3439, %v3439
  %v3442 = vsel %vm59, %v3440, 0.0
  %3443 = vadd.xlane.f32.xlu0 %v3442
  %v3444 = vpop.xlane.xlu0 %3443
  %v3445 = vsel %vm59, %v3441, 0.0
  %3446 = vadd.xlane.f32.xlu0 %v3445
  %v3447 = vpop.xlane.xlu0 %3446
  %v3448 = vmul.f32 %v3444, %v1604
  %v3449 = vmul.f32 %v3447, %v1604
  %v3450 = vadd.f32 %v3448, 1e-05
  %v3451 = vadd.f32 %v3449, 1e-05
  %v3452 = vrsqrt.pop %v3450
  %v3453 = vrsqrt.pop %v3451
  %v3454 = vmul.f32 %v3438, %v3452
  %v3455 = vmul.f32 %v3439, %v3453
  %v3457 = vlaneseq
  %v3458 = vshrl.u32 %v3457, 7
  %v3459 = vsub.s32 0, %v3458
  %v3460 = vrot.slane %v3427, %v3459
  %v3462 = vmul.f32 %v3454, %v3460
  %v3463 = vmul.f32 %v3455, %v3460
  %v3465 = vlaneseq
  %v3466 = vshrl.u32 %v3465, 7
  %v3467 = vsub.s32 0, %v3466
  %v3468 = vrot.slane %v3429, %v3467
  %v3470 = vadd.f32 %v3462, %v3468
  %v3471 = vadd.f32 %v3463, %v3468
  %s3472 = scalar_lea.vmem %s5, 32
  %v3473 = vld [vmem:[%s3472] sm:$0xff]
  %v3474 = vld [vmem:[%s3472 + $0x8] sm:$0xff]
  %v3475 = vld [vmem:[%s3472 + $0x10] sm:$0xff]
  %v3476 = vld [vmem:[%s3472 + $0x18] sm:$0xff]
  %s3477 = scalar_lea.vmem %s6, 1
  %v3478 = vld [vmem:[%s3477] sm:$0x1]
  %v3480 = vlaneseq
  %v3481 = vshrl.u32 %v3480, 7
  %v3482 = vsub.s32 0, %v3481
  %v3483 = vrot.slane %v3478, %v3482
  %v3486 = vsel %vm59, %v3470, 0
  %v3489 = vsel %vm59, %v3471, 0
  %3491 = vmatprep.subr.mxu0 0.0
  %3492 = vmatpush1.msra.mxu0 0.0
  %3493 = vmatprep.subr.mxu0 0.0
  %3494 = vmatpush1.msra.mxu0 0.0
  %3495 = vmatprep.subr.mxu0 0.0
  %3496 = vmatpush1.msra.mxu0 0.0
  %3497 = vmatprep.subr.mxu0 0.0
  %3498 = vmatpush1.msra.mxu0 0.0
  %3499 = vmatprep.subr.mxu0 0.0
  %3500 = vmatpush1.msra.mxu0 0.0
  %3501 = vmatprep.subr.mxu0 0.0
  %3502 = vmatpush1.msra.mxu0 0.0
  %3503 = vmatprep.subr.mxu0 0.0
  %3504 = vmatpush1.msra.mxu0 0.0
  %3505 = vmatprep.subr.mxu0 0.0
  %3506 = vmatpush1.msra.mxu0 0.0
  %3507 = vmatprep.subr.mxu0 0.0
  %3508 = vmatpush1.msra.mxu0 0.0
  %3509 = vmatprep.subr.mxu0 0.0
  %3510 = vmatpush1.msra.mxu0 0.0
  %3511 = vmatprep.subr.mxu0 0.0
  %3512 = vmatpush1.msra.mxu0 0.0
  %3513 = vmatprep.subr.mxu0 0.0
  %3514 = vmatpush1.msra.mxu0 0.0
  %3515 = vmatprep.subr.mxu0 0.0
  %3516 = vmatpush1.msra.mxu0 %v3476
  %3517 = vmatprep.subr.mxu0 0.0
  %3518 = vmatpush1.msra.mxu0 %v3475
  %3519 = vmatprep.subr.mxu0 0.0
  %3520 = vmatpush1.msra.mxu0 %v3474
  %3521 = vmatprep.subr.mxu0 0.0
  %3522 = vmatpush1.msra.mxu0 %v3473
  %3523 = vmatprep.subr.mxu0 0.0
  %3524 = vmatpush2.msra.mxu0 0.0
  %3525 = vmatprep.subr.mxu0 0.0
  %3526 = vmatpush2.msra.mxu0 0.0
  %3527 = vmatprep.subr.mxu0 0.0
  %3528 = vmatpush2.msra.mxu0 0.0
  %3529 = vmatprep.subr.mxu0 0.0
  %3530 = vmatpush2.msra.mxu0 0.0
  %3531 = vmatprep.subr.mxu0 0.0
  %3532 = vmatpush2.msra.mxu0 0.0
  %3533 = vmatprep.subr.mxu0 0.0
  %3534 = vmatpush2.msra.mxu0 0.0
  %3535 = vmatprep.subr.mxu0 0.0
  %3536 = vmatpush2.msra.mxu0 0.0
  %3537 = vmatprep.subr.mxu0 0.0
  %3538 = vmatpush2.msra.mxu0 0.0
  %3539 = vmatprep.subr.mxu0 0.0
  %3540 = vmatpush2.msra.mxu0 0.0
  %3541 = vmatprep.subr.mxu0 0.0
  %3542 = vmatpush2.msra.mxu0 0.0
  %3543 = vmatprep.subr.mxu0 0.0
  %3544 = vmatpush2.msra.mxu0 0.0
  %3545 = vmatprep.subr.mxu0 0.0
  %3546 = vmatpush2.msra.mxu0 0.0
  %3547 = vmatprep.subr.mxu0 0.0
  %3548 = vmatpush2.msra.mxu0 0.0
  %3549 = vmatprep.subr.mxu0 0.0
  %3550 = vmatpush2.msra.mxu0 0.0
  %3551 = vmatprep.subr.mxu0 0.0
  %3552 = vmatpush2.msra.mxu0 0.0
  %3553 = vmatprep.subr.mxu0 0.0
  %3554 = vmatpush2.msra.mxu0 0.0
  %3555 = vmatprep.mubr.f32.mxu0 0.0
  %3556 = vmatmul.mubr.f32.gmra.mxu0 %v3486
  %v3557 = vpop.f32.mrf.mxu0
  %v3558 = vadd.f32 %v3483, %v3557
  %v3559 = vpop.f32.mrf.mxu0
  %3560 = vmatprep.mubr.f32.mxu0 0.0
  %3561 = vmatmul.mubr.f32.gmra.mxu0 %v3489
  %v3562 = vpop.f32.mrf.mxu0
  %v3563 = vadd.f32 %v3483, %v3562
  %v3564 = vpop.f32.mrf.mxu0
  %3565 = vdwg.mxu0
  %v3566 = vmax.f32 %v3558, 0.0
  %v3567 = vmax.f32 %v3563, 0.0
  %s3568 = scalar_lea.vmem %s7, 64
  %v3569 = vld [vmem:[%s3568] sm:$0xff]
  %v3570 = vld [vmem:[%s3568 + $0x8] sm:$0xff]
  %v3571 = vld [vmem:[%s3568 + $0x10] sm:$0xff]
  %v3572 = vld [vmem:[%s3568 + $0x18] sm:$0xff]
  %v3573 = vld [vmem:[%s3568 + $0x20] sm:$0xff]
  %v3574 = vld [vmem:[%s3568 + $0x28] sm:$0xff]
  %v3575 = vld [vmem:[%s3568 + $0x30] sm:$0xff]
  %v3576 = vld [vmem:[%s3568 + $0x38] sm:$0xff]
  %s3577 = scalar_lea.vmem %s8, 1
  %v3578 = vld [vmem:[%s3577] sm:$0x1]
  %v3580 = vlaneseq
  %v3581 = vshrl.u32 %v3580, 7
  %v3582 = vsub.s32 0, %v3581
  %v3583 = vrot.slane %v3578, %v3582
  %v3586 = vsel %vm1750, %v3566, 0
  %v3589 = vsel %vm1750, %v3567, 0
  %3591 = vmatprep.subr.mxu0 0.0
  %3592 = vmatpush1.msra.mxu0 0.0
  %3593 = vmatprep.subr.mxu0 0.0
  %3594 = vmatpush1.msra.mxu0 0.0
  %3595 = vmatprep.subr.mxu0 0.0
  %3596 = vmatpush1.msra.mxu0 0.0
  %3597 = vmatprep.subr.mxu0 0.0
  %3598 = vmatpush1.msra.mxu0 0.0
  %3599 = vmatprep.subr.mxu0 0.0
  %3600 = vmatpush1.msra.mxu0 0.0
  %3601 = vmatprep.subr.mxu0 0.0
  %3602 = vmatpush1.msra.mxu0 0.0
  %3603 = vmatprep.subr.mxu0 0.0
  %3604 = vmatpush1.msra.mxu0 0.0
  %3605 = vmatprep.subr.mxu0 0.0
  %3606 = vmatpush1.msra.mxu0 0.0
  %3607 = vmatprep.subr.mxu0 0.0
  %3608 = vmatpush1.msra.mxu0 %v3576
  %3609 = vmatprep.subr.mxu0 0.0
  %3610 = vmatpush1.msra.mxu0 %v3575
  %3611 = vmatprep.subr.mxu0 0.0
  %3612 = vmatpush1.msra.mxu0 %v3574
  %3613 = vmatprep.subr.mxu0 0.0
  %3614 = vmatpush1.msra.mxu0 %v3573
  %3615 = vmatprep.subr.mxu0 0.0
  %3616 = vmatpush1.msra.mxu0 %v3572
  %3617 = vmatprep.subr.mxu0 0.0
  %3618 = vmatpush1.msra.mxu0 %v3571
  %3619 = vmatprep.subr.mxu0 0.0
  %3620 = vmatpush1.msra.mxu0 %v3570
  %3621 = vmatprep.subr.mxu0 0.0
  %3622 = vmatpush1.msra.mxu0 %v3569
  %3623 = vmatprep.subr.mxu0 0.0
  %3624 = vmatpush2.msra.mxu0 0.0
  %3625 = vmatprep.subr.mxu0 0.0
  %3626 = vmatpush2.msra.mxu0 0.0
  %3627 = vmatprep.subr.mxu0 0.0
  %3628 = vmatpush2.msra.mxu0 0.0
  %3629 = vmatprep.subr.mxu0 0.0
  %3630 = vmatpush2.msra.mxu0 0.0
  %3631 = vmatprep.subr.mxu0 0.0
  %3632 = vmatpush2.msra.mxu0 0.0
  %3633 = vmatprep.subr.mxu0 0.0
  %3634 = vmatpush2.msra.mxu0 0.0
  %3635 = vmatprep.subr.mxu0 0.0
  %3636 = vmatpush2.msra.mxu0 0.0
  %3637 = vmatprep.subr.mxu0 0.0
  %3638 = vmatpush2.msra.mxu0 0.0
  %3639 = vmatprep.subr.mxu0 0.0
  %3640 = vmatpush2.msra.mxu0 0.0
  %3641 = vmatprep.subr.mxu0 0.0
  %3642 = vmatpush2.msra.mxu0 0.0
  %3643 = vmatprep.subr.mxu0 0.0
  %3644 = vmatpush2.msra.mxu0 0.0
  %3645 = vmatprep.subr.mxu0 0.0
  %3646 = vmatpush2.msra.mxu0 0.0
  %3647 = vmatprep.subr.mxu0 0.0
  %3648 = vmatpush2.msra.mxu0 0.0
  %3649 = vmatprep.subr.mxu0 0.0
  %3650 = vmatpush2.msra.mxu0 0.0
  %3651 = vmatprep.subr.mxu0 0.0
  %3652 = vmatpush2.msra.mxu0 0.0
  %3653 = vmatprep.subr.mxu0 0.0
  %3654 = vmatpush2.msra.mxu0 0.0
  %3655 = vmatprep.mubr.f32.mxu0 0.0
  %3656 = vmatmul.mubr.f32.gmra.mxu0 %v3586
  %v3657 = vpop.f32.mrf.mxu0
  %v3658 = vadd.f32 %v3583, %v3657
  %v3659 = vpop.f32.mrf.mxu0
  %3660 = vmatprep.mubr.f32.mxu0 0.0
  %3661 = vmatmul.mubr.f32.gmra.mxu0 %v3589
  %v3662 = vpop.f32.mrf.mxu0
  %v3663 = vadd.f32 %v3583, %v3662
  %v3664 = vpop.f32.mrf.mxu0
  %3665 = vdwg.mxu0
  %v3666 = vadd.f32 %v3470, %v3658
  %v3667 = vadd.f32 %v3471, %v3663
  %s3668 = scalar_lea.vmem %s11, 1
  %v3669 = vld [vmem:[%s3668] sm:$0x1]
  %s3670 = scalar_lea.vmem %s12, 1
  %v3671 = vld [vmem:[%s3670] sm:$0x1]
  %v3672 = vsel %vm59, %v3666, 0.0
  %3673 = vadd.xlane.f32.xlu0 %v3672
  %v3674 = vpop.xlane.xlu0 %3673
  %v3675 = vsel %vm59, %v3667, 0.0
  %3676 = vadd.xlane.f32.xlu0 %v3675
  %v3677 = vpop.xlane.xlu0 %3676
  %v3678 = vmul.f32 %v3674, %v1604
  %v3679 = vmul.f32 %v3677, %v1604
  %v3680 = vsub.f32 %v3666, %v3678
  %v3681 = vsub.f32 %v3667, %v3679
  %v3682 = vmul.f32 %v3680, %v3680
  %v3683 = vmul.f32 %v3681, %v3681
  %v3684 = vsel %vm59, %v3682, 0.0
  %3685 = vadd.xlane.f32.xlu0 %v3684
  %v3686 = vpop.xlane.xlu0 %3685
  %v3687 = vsel %vm59, %v3683, 0.0
  %3688 = vadd.xlane.f32.xlu0 %v3687
  %v3689 = vpop.xlane.xlu0 %3688
  %v3690 = vmul.f32 %v3686, %v1604
  %v3691 = vmul.f32 %v3689, %v1604
  %v3692 = vadd.f32 %v3690, 1e-05
  %v3693 = vadd.f32 %v3691, 1e-05
  %v3694 = vrsqrt.pop %v3692
  %v3695 = vrsqrt.pop %v3693
  %v3696 = vmul.f32 %v3680, %v3694
  %v3697 = vmul.f32 %v3681, %v3695
  %v3699 = vlaneseq
  %v3700 = vshrl.u32 %v3699, 7
  %v3701 = vsub.s32 0, %v3700
  %v3702 = vrot.slane %v3669, %v3701
  %v3704 = vmul.f32 %v3696, %v3702
  %v3705 = vmul.f32 %v3697, %v3702
  %v3707 = vlaneseq
  %v3708 = vshrl.u32 %v3707, 7
  %v3709 = vsub.s32 0, %v3708
  %v3710 = vrot.slane %v3671, %v3709
  %v3712 = vadd.f32 %v3704, %v3710
  %v3713 = vadd.f32 %v3705, %v3710
  %3714 = vst.msk [vmem:[%s13] sm:$0xff] %vm59, %v3712
  %3715 = vst.msk [vmem:[%s13 + $0x8] sm:$0xff] %vm59, %v3713
  %v3718 = vrot.slane %v2691, 7
  %vm3719 = vcmask 1041409
  %v3720 = vsel %vm3719, %v3718, %v2690
  %v3722 = vrot.slane %v2690, 1
  %v3723 = vsel %vm3719, %v2691, %v3722
  %3724 = vrot.lane.b32.xlu0 %v3723, 8
  %v3725 = vpop.permute.xlu0 %3724
  %v3727 = vrot.slane %v2690, 2
  %v3728 = vrot.slane %v2691, 1
  %v3729 = vsel %vm3719, %v3728, %v3727
  %3730 = vrot.lane.b32.xlu0 %v3729, 16
  %v3731 = vpop.permute.xlu0 %3730
  %v3733 = vrot.slane %v2690, 3
  %v3734 = vrot.slane %v2691, 2
  %v3735 = vsel %vm3719, %v3734, %v3733
  %3736 = vrot.lane.b32.xlu0 %v3735, 24
  %v3737 = vpop.permute.xlu0 %3736
  %v3739 = vrot.slane %v2690, 4
  %v3740 = vrot.slane %v2691, 3
  %v3741 = vsel %vm3719, %v3740, %v3739
  %3742 = vrot.lane.b32.xlu0 %v3741, 32
  %v3743 = vpop.permute.xlu0 %3742
  %v3745 = vrot.slane %v2690, 5
  %v3746 = vrot.slane %v2691, 4
  %v3747 = vsel %vm3719, %v3746, %v3745
  %3748 = vrot.lane.b32.xlu0 %v3747, 40
  %v3749 = vpop.permute.xlu0 %3748
  %v3751 = vrot.slane %v2690, 6
  %v3752 = vrot.slane %v2691, 5
  %v3753 = vsel %vm3719, %v3752, %v3751
  %3754 = vrot.lane.b32.xlu0 %v3753, 48
  %v3755 = vpop.permute.xlu0 %3754
  %v3757 = vrot.slane %v2690, 7
  %v3758 = vrot.slane %v2691, 6
  %v3759 = vsel %vm3719, %v3758, %v3757
  %3760 = vrot.lane.b32.xlu0 %v3759, 56
  %v3761 = vpop.permute.xlu0 %3760
  %v3763 = vsel %vm157, %v3720, %v3725
  %v3764 = vsel %vm1496, %v3763, %v3731
  %v3765 = vsel %vm1499, %v3764, %v3737
  %v3766 = vsel %vm59, %v3765, %v3743
  %vm3767 = vcmask 326656
  %v3768 = vsel %vm3767, %v3766, %v3749
  %vm3769 = vcmask 392192
  %v3770 = vsel %vm3769, %v3768, %v3755
  %vm3771 = vcmask 457728
  %v3772 = vsel %vm3771, %v3770, %v3761
  %vm3773 = vcmask 517120
  %3774 = vst.msk [vmem:[%s14] sm:$0x3] %vm3773, %v3772
  // Predicated region
  $region54: #{transformer_encoder.1} parent=0 // pred_check
    _
  $region55: #{transformer_encoder.1} parent=0 // pred_check_branch
    %3776 = sbr.rel (0) target = $region57
  $region56: #{transformer_encoder.1} parent=0 // pred_region
    _
  $region57: #{transformer_encoder.1} parent=0 // pred_fallthru
    _
  // Predicated region
  $region58: #{transformer_encoder.1} parent=0 // pred_check
    _
  $region59: #{transformer_encoder.1} parent=0 // pred_check_branch
    %3778 = sbr.rel (0) target = $region61
  $region60: #{transformer_encoder.1} parent=0 // pred_region
    _
  $region61: #{transformer_encoder.1} parent=0 // pred_fallthru
    _
  // Predicated region
  $region62: #{transformer_encoder.1} parent=0 // pred_check
    _
  $region63: #{transformer_encoder.1} parent=0 // pred_check_branch
    %3780 = sbr.rel (0) target = $region65
  $region64: #{transformer_encoder.1} parent=0 // pred_region
    _
  $region65: #{transformer_encoder.1} parent=0 // pred_fallthru
    _
  // Predicated region
  $region66: #{transformer_encoder.1} parent=0 // pred_check
    _
  $region67: #{transformer_encoder.1} parent=0 // pred_check_branch
    %3782 = sbr.rel (0) target = $region69
  $region68: #{transformer_encoder.1} parent=0 // pred_region
    _
  $region69: #{transformer_encoder.1} parent=0 // pred_fallthru
    _

</llo_original>
